<compile_context>
chip_gen: v7x
topology: tpu7x:2x2x1
jax: 0.10.0
libtpu: 0.0.40
codegen_flags: <defaults>
</compile_context>

<pallas_src>
import functools
import math

import jax
import jax.numpy as jnp
from jax.experimental import pallas as pl
from jax.experimental.pallas import tpu as pltpu


# ----------------------------------------------------------------------------
# chip-generation aware budgets
# ----------------------------------------------------------------------------
@functools.lru_cache(maxsize=None)
def _tpu_generation():
    try:
        kind = jax.devices()[0].device_kind.lower()
    except Exception:
        return 0
    for g in (7, 6, 5, 4):
        if "v%d" % g in kind:
            return g
    return 0


def _vmem_limit():
    gen = _tpu_generation()
    if gen in (5, 6):
        return 96 * 1024 * 1024       # 128 MiB physical VMEM
    return 48 * 1024 * 1024           # v7x: 64 MiB physical; unknown: safe


def _pick_tile(dim, unit, cap, prefer_multi=False):
    """Largest multiple-of-`unit` divisor of `dim` <= cap.

    prefer_multi=True (v7x parallel axes only) prefers >=2 blocks so megacore
    can shard the axis; on single-TC chips the grid is a serial loop so the
    largest tile always wins.
    """
    best = None
    t = unit
    while t <= min(dim, cap):
        if dim % t == 0:
            best = t
        t += unit
    if best is None:
        return dim
    if prefer_multi and best == dim:
        t = best - unit
        while t >= unit:
            if dim % t == 0:
                return t
            t -= unit
    return best


def _layernorm(x, g, b):
    mean = jnp.mean(x, axis=-1, keepdims=True)
    var = jnp.mean(jnp.square(x - mean), axis=-1, keepdims=True)
    return (x - mean) * jax.lax.rsqrt(var + 1e-5) * g + b    # torch eps = 1e-5


def _bf16(x):
    return x.astype(jnp.bfloat16)


# ----------------------------------------------------------------------------
# Pallas kernels
# ----------------------------------------------------------------------------
def _matmul_kernel(x_ref, w_ref, b_ref, o_ref, *, activation):
    acc = jnp.dot(_bf16(x_ref[...]), _bf16(w_ref[...]),
                  preferred_element_type=jnp.float32) + b_ref[...]
    if activation == "relu":
        acc = jnp.maximum(acc, 0.0)
    o_ref[...] = acc.astype(o_ref.dtype)


def _ln_matmul_kernel(x_ref, g_ref, bln_ref, w_ref, b_ref, o_ref, xn_ref,
                      *, activation):
    # LayerNorm of the row tile is computed once per row tile (j == 0) and
    # cached in VMEM scratch; remaining output-column tiles only run the matmul.
    @pl.when(pl.program_id(1) == 0)
    def _():
        xn_ref[...] = _layernorm(x_ref[...].astype(jnp.float32),
                                 g_ref[...], bln_ref[...])
    acc = jnp.dot(_bf16(xn_ref[...]), _bf16(w_ref[...]),
                  preferred_element_type=jnp.float32) + b_ref[...]
    if activation == "relu":
        acc = jnp.maximum(acc, 0.0)
    o_ref[...] = acc.astype(o_ref.dtype)


def _ln_ffn_kernel(x_ref, g_ref, b_ref, w1_ref, b1_ref, w2_ref, b2_ref, o_ref):
    # y = x + relu(LN(x) @ W1 + b1) @ W2 + b2, all intermediates stay in VMEM.
    x = x_ref[...].astype(jnp.float32)
    h = _layernorm(x, g_ref[...], b_ref[...])
    h = jnp.dot(_bf16(h), _bf16(w1_ref[...]),
                preferred_element_type=jnp.float32) + b1_ref[...]
    h = jnp.maximum(h, 0.0)
    y = jnp.dot(_bf16(h), _bf16(w2_ref[...]),
                preferred_element_type=jnp.float32) + b2_ref[...]
    o_ref[...] = (x + y).astype(o_ref.dtype)


def _mha_core(q, k, v, key_keep, wo, bo, resid, o_ref,
              *, num_heads, causal, scale, q_offset):
    # q: (tq, D), k/v: (Sk, D), key_keep: (1, Sk) (>0 = keep). Each head is
    # accumulated straight into the output-projection accumulator -> no concat
    # of dh-wide slabs, single (tq, D) f32 accumulator live.
    tq, d = q.shape
    sk = k.shape[0]
    dh = d // num_heads

    keep = key_keep > 0.0                                     # (1, Sk)
    if causal:
        row = jax.lax.broadcasted_iota(jnp.int32, (tq, sk), 0) + q_offset
        col = jax.lax.broadcasted_iota(jnp.int32, (tq, sk), 1)
        keep = jnp.logical_and(keep, col <= row)              # (tq, Sk)

    q16, k16, v16, wo16 = _bf16(q), _bf16(k), _bf16(v), _bf16(wo)
    out = resid.astype(jnp.float32) + bo                      # (tq, D) f32
    for h in range(num_heads):                                # static unroll
        qh = q16[:, h * dh:(h + 1) * dh]
        kh = k16[:, h * dh:(h + 1) * dh]
        vh = v16[:, h * dh:(h + 1) * dh]
        # contract on last dim of both operands -> no in-kernel k.T relayout
        s = jax.lax.dot_general(qh, kh, (((1,), (1,)), ((), ())),
                                preferred_element_type=jnp.float32) * scale
        s = jnp.where(keep, s, -1e9)                          # masked_fill(==0, -1e9)
        s = s - jnp.max(s, axis=-1, keepdims=True)
        p = jnp.exp(s)
        p = p * pl.reciprocal(jnp.sum(p, axis=-1, keepdims=True), approx=True)
        ph = jax.lax.dot_general(_bf16(p), vh, (((1,), (0,)), ((), ())),
                                 preferred_element_type=jnp.float32)
        out = out + jax.lax.dot_general(
            _bf16(ph), wo16[h * dh:(h + 1) * dh, :], (((1,), (0,)), ((), ())),
            preferred_element_type=jnp.float32)
    o_ref[...] = out.astype(o_ref.dtype)


def _self_attn_kernel_fused(qkv_ref, keep_ref, wo_ref, bo_ref, res_ref, o_ref,
                            *, num_heads, causal, scale, d_model):
    qkv = qkv_ref[...]
    _mha_core(qkv[:, :d_model], qkv[:, d_model:2 * d_model], qkv[:, 2 * d_model:],
              keep_ref[...], wo_ref[...], bo_ref[...], res_ref[...], o_ref,
              num_heads=num_heads, causal=causal, scale=scale, q_offset=0)


def _self_attn_kernel_tiled(qrow_ref, qkv_ref, keep_ref, wo_ref, bo_ref,
                            res_ref, o_ref,
                            *, num_heads, causal, scale, d_model, tq):
    q = qrow_ref[...][:, :d_model]
    kv = qkv_ref[...]
    _mha_core(q, kv[:, d_model:2 * d_model], kv[:, 2 * d_model:],
              keep_ref[...], wo_ref[...], bo_ref[...], res_ref[...], o_ref,
              num_heads=num_heads, causal=causal, scale=scale,
              q_offset=pl.program_id(1) * tq)


def _cross_attn_kernel(q_ref, kv_ref, keep_ref, wo_ref, bo_ref, res_ref, o_ref,
                       *, num_heads, scale, d_model):
    kv = kv_ref[...]
    _mha_core(q_ref[...], kv[:, :d_model], kv[:, d_model:],
              keep_ref[...], wo_ref[...], bo_ref[...], res_ref[...], o_ref,
              num_heads=num_heads, causal=False, scale=scale, q_offset=0)


# ----------------------------------------------------------------------------
# pallas_call wrappers
# ----------------------------------------------------------------------------
def fused_linear(x, w, b, ln=None, activation=None, out_dtype=jnp.bfloat16):
    """y = [LN(x)] @ W + b (+relu), tiled over rows (M) and output cols (N).

    K (model/ffn dim) is one block.  # TODO(synk): K-axis tiling + f32 VMEM
    accumulator for very large K.
    """
    lead = x.shape[:-1]
    K = x.shape[-1]
    N = w.shape[-1]
    x2 = x.reshape(-1, K)
    M = x2.shape[0]

    gen = _tpu_generation()
    multi = gen >= 7                                 # only megacore benefits
    tm = _pick_tile(M, 8, 256 if multi else 512, prefer_multi=multi)
    tn_unit = 256 if (gen >= 6 and N % 256 == 0) else 128
    tn = _pick_tile(N, tn_unit, 512 if multi else 1024, prefer_multi=multi)
    grid = (M // tm, N // tn)
    b2 = b.reshape(1, N)
    cost = pl.CostEstimate(
        flops=2 * M * K * N, transcendentals=0,
        bytes_accessed=2 * M * K + 2 * K * N + 4 * N + 2 * M * N)
    cparams = pltpu.CompilerParams(
        dimension_semantics=("parallel", "arbitrary"),
        vmem_limit_bytes=_vmem_limit())

    if ln is not None:
        kernel = functools.partial(_ln_matmul_kernel, activation=activation)
        in_specs = [
            pl.BlockSpec((tm, K), lambda i, j: (i, 0)),
            pl.BlockSpec((1, K), lambda i, j: (0, 0)),
            pl.BlockSpec((1, K), lambda i, j: (0, 0)),
            pl.BlockSpec((K, tn), lambda i, j: (0, j)),
            pl.BlockSpec((1, tn), lambda i, j: (0, j)),
        ]
        args = (x2, ln["g"].reshape(1, K), ln["b"].reshape(1, K), w, b2)
        scratch = [pltpu.VMEM((tm, K), jnp.float32)]   # cached LN(x) row tile
    else:
        kernel = functools.partial(_matmul_kernel, activation=activation)
        in_specs = [
            pl.BlockSpec((tm, K), lambda i, j: (i, 0)),
            pl.BlockSpec((K, tn), lambda i, j: (0, j)),
            pl.BlockSpec((1, tn), lambda i, j: (0, j)),
        ]
        args = (x2, w, b2)
        scratch = []

    out = pl.pallas_call(
        kernel,
        out_shape=jax.ShapeDtypeStruct((M, N), out_dtype),
        grid=grid,
        in_specs=in_specs,
        out_specs=pl.BlockSpec((tm, tn), lambda i, j: (i, j)),
        scratch_shapes=scratch,
        compiler_params=cparams,
        cost_estimate=cost,
    )(*args)
    return out.reshape(*lead, N)


def fused_ln_ffn(x, ln, ffn):
    """x + FFN(LN(x)) fully fused, tiled over token rows."""
    B, S, D = x.shape
    F = ffn["w1"].shape[1]
    x2 = x.reshape(-1, D)
    M = x2.shape[0]
    gen = _tpu_generation()
    tm = _pick_tile(M, 8, 256 if gen >= 7 else 512, prefer_multi=gen >= 7)
    # TODO(synk): on v7x mark the grid-invariant w1/b1/w2/b2/g/b specs with
    # pipeline_mode=pl.Buffered(1) (or tile F) once top-level pallas_call
    # supports it, to avoid double-buffering the full FFN weights.
    out = pl.pallas_call(
        _ln_ffn_kernel,
        out_shape=jax.ShapeDtypeStruct((M, D), jnp.bfloat16),
        grid=(M // tm,),
        in_specs=[
            pl.BlockSpec((tm, D), lambda i: (i, 0)),
            pl.BlockSpec((1, D), lambda i: (0, 0)),
            pl.BlockSpec((1, D), lambda i: (0, 0)),
            pl.BlockSpec((D, F), lambda i: (0, 0)),
            pl.BlockSpec((1, F), lambda i: (0, 0)),
            pl.BlockSpec((F, D), lambda i: (0, 0)),
            pl.BlockSpec((1, D), lambda i: (0, 0)),
        ],
        out_specs=pl.BlockSpec((tm, D), lambda i: (i, 0)),
        compiler_params=pltpu.CompilerParams(
            dimension_semantics=("parallel",), vmem_limit_bytes=_vmem_limit()),
        cost_estimate=pl.CostEstimate(
            flops=4 * M * D * F, transcendentals=0,
            bytes_accessed=4 * M * D + 4 * D * F + 4 * (D + F)),
    )(x2, ln["g"].reshape(1, D), ln["b"].reshape(1, D),
      ffn["w1"], ffn["b1"].reshape(1, F), ffn["w2"], ffn["b2"].reshape(1, D))
    return out.reshape(B, S, D)


def _attn_cost(B, Sq, Sk, D, H):
    return pl.CostEstimate(
        flops=4 * B * Sq * Sk * D + 2 * B * Sq * D * D,
        transcendentals=B * H * Sq * Sk,
        bytes_accessed=2 * B * Sq * 3 * D + 2 * B * Sk * 2 * D
        + 4 * B * Sq * D + 2 * D * D)


def fused_self_attention(qkv, key_keep, wo, bo, residual, *, num_heads, causal):
    """All-heads attention + output projection + residual.

    Short sequences: one grid step per batch (single qkv read).  Long
    sequences: grid=(B, Sq//tq) so score matrices stay (tq, Sk) in VMEM.
    """
    B, Sq, threeD = qkv.shape
    D = threeD // 3
    scale = 1.0 / math.sqrt(D // num_heads)
    tq = _pick_tile(Sq, 8, 256)
    nq = Sq // tq
    cost = _attn_cost(B, Sq, Sq, D, num_heads)

    if nq == 1:
        kernel = functools.partial(_self_attn_kernel_fused, num_heads=num_heads,
                                   causal=causal, scale=scale, d_model=D)
        return pl.pallas_call(
            kernel,
            out_shape=jax.ShapeDtypeStruct((B, Sq, D), jnp.bfloat16),
            grid=(B,),
            in_specs=[
                pl.BlockSpec((None, Sq, threeD), lambda b: (b, 0, 0)),
                pl.BlockSpec((None, 1, Sq), lambda b: (b, 0, 0)),
                pl.BlockSpec((D, D), lambda b: (0, 0)),
                pl.BlockSpec((1, D), lambda b: (0, 0)),
                pl.BlockSpec((None, Sq, D), lambda b: (b, 0, 0)),
            ],
            out_specs=pl.BlockSpec((None, Sq, D), lambda b: (b, 0, 0)),
            compiler_params=pltpu.CompilerParams(
                dimension_semantics=("parallel",), vmem_limit_bytes=_vmem_limit()),
            cost_estimate=cost,
        )(qkv, key_keep, wo, bo.reshape(1, D), residual)

    kernel = functools.partial(_self_attn_kernel_tiled, num_heads=num_heads,
                               causal=causal, scale=scale, d_model=D, tq=tq)
    return pl.pallas_call(
        kernel,
        out_shape=jax.ShapeDtypeStruct((B, Sq, D), jnp.bfloat16),
        grid=(B, nq),
        in_specs=[
            pl.BlockSpec((None, tq, threeD), lambda b, i: (b, i, 0)),  # q rows
            pl.BlockSpec((None, Sq, threeD), lambda b, i: (b, 0, 0)),  # full K/V
            pl.BlockSpec((None, 1, Sq), lambda b, i: (b, 0, 0)),
            pl.BlockSpec((D, D), lambda b, i: (0, 0)),
            pl.BlockSpec((1, D), lambda b, i: (0, 0)),
            pl.BlockSpec((None, tq, D), lambda b, i: (b, i, 0)),
        ],
        out_specs=pl.BlockSpec((None, tq, D), lambda b, i: (b, i, 0)),
        compiler_params=pltpu.CompilerParams(
            dimension_semantics=("parallel", "parallel"),
            vmem_limit_bytes=_vmem_limit()),
        cost_estimate=cost,
    )(qkv, qkv, key_keep, wo, bo.reshape(1, D), residual)


def fused_cross_attention(q, kv, key_keep, wo, bo, residual, *, num_heads):
    B, Sq, D = q.shape
    Sk = kv.shape[1]
    scale = 1.0 / math.sqrt(D // num_heads)
    tq = _pick_tile(Sq, 8, 256)
    kernel = functools.partial(_cross_attn_kernel, num_heads=num_heads,
                               scale=scale, d_model=D)
    return pl.pallas_call(
        kernel,
        out_shape=jax.ShapeDtypeStruct((B, Sq, D), jnp.bfloat16),
        grid=(B, Sq // tq),
        in_specs=[
            pl.BlockSpec((None, tq, D), lambda b, i: (b, i, 0)),
            pl.BlockSpec((None, Sk, 2 * D), lambda b, i: (b, 0, 0)),
            pl.BlockSpec((None, 1, Sk), lambda b, i: (b, 0, 0)),
            pl.BlockSpec((D, D), lambda b, i: (0, 0)),
            pl.BlockSpec((1, D), lambda b, i: (0, 0)),
            pl.BlockSpec((None, tq, D), lambda b, i: (b, i, 0)),
        ],
        out_specs=pl.BlockSpec((None, tq, D), lambda b, i: (b, i, 0)),
        compiler_params=pltpu.CompilerParams(
            dimension_semantics=("parallel", "parallel"),
            vmem_limit_bytes=_vmem_limit()),
        cost_estimate=_attn_cost(B, Sq, Sk, D, num_heads),
    )(q, kv, key_keep, wo, bo.reshape(1, D), residual)


# ----------------------------------------------------------------------------
# Model glue (plain JAX: embedding gather, PE, key-validity vectors)
# ----------------------------------------------------------------------------
def sinusoidal_pe(max_len, d_model):
    pos = jnp.arange(max_len, dtype=jnp.float32)[:, None]
    i = jnp.arange(0, d_model, 2, dtype=jnp.float32)
    div = jnp.exp(-math.log(10000.0) * i / d_model)
    pe = jnp.zeros((max_len, d_model), jnp.float32)
    pe = pe.at[:, 0::2].set(jnp.sin(pos * div))
    pe = pe.at[:, 1::2].set(jnp.cos(pos * div))
    return pe


def embed(tokens, table, pe, d_model):
    # TODO(synk): embedding gather stays in JAX glue (data-dependent row gather).
    x = table[tokens] * math.sqrt(d_model)
    x = x + pe[: tokens.shape[1]][None, :, :]
    return x.astype(jnp.bfloat16)            # bf16 residual stream between kernels


def encoder_layer(p, x, key_keep, num_heads):
    a = p["self_attn"]
    qkv = fused_linear(x, a["wqkv"], a["bqkv"], ln=p["ln1"])        # LN1 + QKV
    x = fused_self_attention(qkv, key_keep, a["wo"], a["bo"], x,
                             num_heads=num_heads, causal=False)     # attn+proj+res
    return fused_ln_ffn(x, p["ln2"], p["ffn"])                      # LN2+FFN+res


def decoder_layer(p, x, memory, src_keep, tgt_keep, num_heads):
    sa, ca = p["self_attn"], p["cross_attn"]
    qkv = fused_linear(x, sa["wqkv"], sa["bqkv"], ln=p["ln1"])
    x = fused_self_attention(qkv, tgt_keep, sa["wo"], sa["bo"], x,
                             num_heads=num_heads, causal=True)
    q = fused_linear(x, ca["wq"], ca["bq"], ln=p["ln2"])            # LN2 + Q
    kv = fused_linear(memory, ca["wkv"], ca["bkv"])                  # fused K/V of memory
    x = fused_cross_attention(q, kv, src_keep, ca["wo"], ca["bo"], x,
                              num_heads=num_heads)
    return fused_ln_ffn(x, p["ln3"], p["ffn"])


def encode_src(params, x, cfg):
    src_keep = (x != cfg["pad_index"]).astype(jnp.float32)[:, None, :]   # (B,1,Ss)
    h = embed(x, params["src_emb"], params["pe"], cfg["d_model"])
    for lp in params["enc_layers"]:
        h = encoder_layer(lp, h, src_keep, cfg["num_heads"])
    return h, src_keep


def decode_tgt(params, y, memory, src_keep, cfg):
    tgt_keep = (y != cfg["pad_index"]).astype(jnp.float32)[:, None, :]   # (B,1,St)
    h = embed(y, params["tgt_emb"], params["pe"], cfg["d_model"])
    for lp in params["dec_layers"]:
        h = decoder_layer(lp, h, memory, src_keep, tgt_keep, cfg["num_heads"])
    # final LayerNorm fused with the vocab projection (LN cached across N tiles)
    return fused_linear(h, params["vocab_w"], params["vocab_b"],
                        ln=params["final_ln"], out_dtype=jnp.float32)


def transformer_forward(params, x, y, cfg):
    memory, src_keep = encode_src(params, x, cfg)
    return decode_tgt(params, y, memory, src_keep, cfg)


# ----------------------------------------------------------------------------
# Deterministic parameter initialization (matmul weights stored in bf16)
# ----------------------------------------------------------------------------
def _dense(key, shape, scale=0.02):
    return (scale * jax.random.normal(key, shape, dtype=jnp.float32)).astype(jnp.bfloat16)


def init_self_attn(key, d):
    k1, k2 = jax.random.split(key)
    return {"wqkv": _dense(k1, (d, 3 * d)), "bqkv": jnp.zeros((3 * d,), jnp.float32),
            "wo": _dense(k2, (d, d)), "bo": jnp.zeros((d,), jnp.float32)}


def init_cross_attn(key, d):
    k1, k2, k3 = jax.random.split(key, 3)
    return {"wq": _dense(k1, (d, d)), "bq": jnp.zeros((d,), jnp.float32),
            "wkv": _dense(k2, (d, 2 * d)), "bkv": jnp.zeros((2 * d,), jnp.float32),
            "wo": _dense(k3, (d, d)), "bo": jnp.zeros((d,), jnp.float32)}


def init_ffn(key, d, d_ff):
    k1, k2 = jax.random.split(key)
    return {"w1": _dense(k1, (d, d_ff)), "b1": jnp.zeros((d_ff,), jnp.float32),
            "w2": _dense(k2, (d_ff, d)), "b2": jnp.zeros((d,), jnp.float32)}


def init_ln(d):
    return {"g": jnp.ones((d,), jnp.float32), "b": jnp.zeros((d,), jnp.float32)}


def init_transformer(key, cfg):
    d, d_ff, V, L = cfg["d_model"], cfg["d_ff"], cfg["vocab_size"], cfg["num_layers"]
    keys = jax.random.split(key, 2 * L + 3)
    emb_scale = 0.02
    src_emb = (emb_scale * jax.random.normal(keys[0], (V, d), jnp.float32)
               ).at[cfg["pad_index"]].set(0.0)
    tgt_emb = (emb_scale * jax.random.normal(keys[1], (V, d), jnp.float32)
               ).at[cfg["pad_index"]].set(0.0)
    enc_layers = []
    for l in range(L):
        k1, k2 = jax.random.split(keys[2 + l], 2)
        enc_layers.append({"self_attn": init_self_attn(k1, d), "ffn": init_ffn(k2, d, d_ff),
                           "ln1": init_ln(d), "ln2": init_ln(d)})
    dec_layers = []
    for l in range(L):
        k1, k2, k3 = jax.random.split(keys[2 + L + l], 3)
        dec_layers.append({"self_attn": init_self_attn(k1, d),
                           "cross_attn": init_cross_attn(k2, d),
                           "ffn": init_ffn(k3, d, d_ff),
                           "ln1": init_ln(d), "ln2": init_ln(d), "ln3": init_ln(d)})
    return {
        "src_emb": src_emb, "tgt_emb": tgt_emb,
        "pe": sinusoidal_pe(cfg["max_len"], d),
        "enc_layers": enc_layers, "dec_layers": dec_layers,
        "final_ln": init_ln(d),
        "vocab_w": _dense(keys[2 + 2 * L], (d, V)),
        "vocab_b": jnp.zeros((V,), jnp.float32),
    }


# ----------------------------------------------------------------------------
if __name__ == "__main__":
    cfg = dict(d_model=32, num_heads=4, d_ff=64, num_layers=2,
               vocab_size=128, pad_index=1, max_len=16)
    key = jax.random.PRNGKey(0)
    pkey, xkey, ykey = jax.random.split(key, 3)

    params = init_transformer(pkey, cfg)

    B, Ss, St = 2, 8, 8
    x = jax.random.randint(xkey, (B, Ss), 2, cfg["vocab_size"], dtype=jnp.int32)
    y = jax.random.randint(ykey, (B, St), 2, cfg["vocab_size"], dtype=jnp.int32)
    # add some padding tokens so both pad masks are exercised
    x = x.at[:, -2:].set(cfg["pad_index"])
    y = y.at[:, -1:].set(cfg["pad_index"])

    fwd = jax.jit(functools.partial(transformer_forward, cfg=cfg))
    logits = fwd(params, x, y)                     # (B, St, vocab_size)
    logits = jax.block_until_ready(logits)

    assert logits.shape == (B, St, cfg["vocab_size"])
    assert bool(jnp.all(jnp.isfinite(logits)))
    print("KERNEL_OK")
</pallas_src>

<mosaic_0001>
module attributes {stable_mosaic.version = 11 : i64} {
  func.func @_ln_matmul_kernel(%arg0: i32, %arg1: i32, %arg2: memref<16x32xbf16, #tpu.memory_space<vmem>>, %arg3: memref<1x32xf32, #tpu.memory_space<vmem>>, %arg4: memref<1x32xf32, #tpu.memory_space<vmem>>, %arg5: memref<32x96xbf16, #tpu.memory_space<vmem>>, %arg6: memref<1x96xf32, #tpu.memory_space<vmem>>, %arg7: memref<16x96xbf16, #tpu.memory_space<vmem>>, %arg8: memref<16x32xf32, #tpu.memory_space<vmem>>) attributes {dimension_semantics = [#tpu.dimension_semantics<parallel>, #tpu.dimension_semantics<arbitrary>], iteration_bounds = array<i64: 1, 1>, scalar_prefetch = 0 : i64, scratch_operands = 1 : i64, tpu.core_type = #tpu.core_type<tc>, window_params = [{transform_indices = @transform_0, window_bounds = array<i64: 16, 32>}, {pipeline_mode = #tpu.pipeline_mode<synchronous>, transform_indices = @transform_1, window_bounds = array<i64: 1, 32>}, {pipeline_mode = #tpu.pipeline_mode<synchronous>, transform_indices = @transform_2, window_bounds = array<i64: 1, 32>}, {transform_indices = @transform_3, window_bounds = array<i64: 32, 96>}, {transform_indices = @transform_4, window_bounds = array<i64: 1, 96>}, {transform_indices = @transform_5, window_bounds = array<i64: 16, 96>}]} {
    %c0_i32 = arith.constant 0 : i32
    %0 = arith.cmpi eq, %arg1, %c0_i32 : i32
    %1 = arith.extui %0 : i1 to i32
    %c0_i32_0 = arith.constant 0 : i32
    %2 = arith.cmpi ne, %1, %c0_i32_0 : i32
    scf.if %2 {
      %c0_8 = arith.constant 0 : index
      %c0_9 = arith.constant 0 : index
      %12 = vector.load %arg2[%c0_8, %c0_9] : memref<16x32xbf16, #tpu.memory_space<vmem>>, vector<16x32xbf16>
      %13 = arith.extf %12 : vector<16x32xbf16> to vector<16x32xf32>
      %c0_10 = arith.constant 0 : index
      %c0_11 = arith.constant 0 : index
      %14 = vector.load %arg3[%c0_10, %c0_11] : memref<1x32xf32, #tpu.memory_space<vmem>>, vector<1x32xf32>
      %c0_12 = arith.constant 0 : index
      %c0_13 = arith.constant 0 : index
      %15 = vector.load %arg4[%c0_12, %c0_13] : memref<1x32xf32, #tpu.memory_space<vmem>>, vector<1x32xf32>
      %cst_14 = arith.constant dense<0.000000e+00> : vector<16xf32>
      %16 = vector.multi_reduction <add>, %13, %cst_14 [1] : vector<16x32xf32> to vector<16xf32>
      %17 = vector.shape_cast %16 : vector<16xf32> to vector<16x1xf32>
      %cst_15 = arith.constant 3.200000e+01 : f32
      %18 = vector.broadcast %cst_15 : f32 to vector<16x1xf32>
      %19 = arith.divf %17, %18 : vector<16x1xf32>
      %20 = vector.broadcast %19 : vector<16x1xf32> to vector<16x32xf32>
      %21 = arith.subf %13, %20 : vector<16x32xf32>
      %22 = arith.mulf %21, %21 : vector<16x32xf32>
      %cst_16 = arith.constant dense<0.000000e+00> : vector<16xf32>
      %23 = vector.multi_reduction <add>, %22, %cst_16 [1] : vector<16x32xf32> to vector<16xf32>
      %24 = vector.shape_cast %23 : vector<16xf32> to vector<16x1xf32>
      %cst_17 = arith.constant 3.200000e+01 : f32
      %25 = vector.broadcast %cst_17 : f32 to vector<16x1xf32>
      %26 = arith.divf %24, %25 : vector<16x1xf32>
      %27 = vector.broadcast %19 : vector<16x1xf32> to vector<16x32xf32>
      %28 = arith.subf %13, %27 : vector<16x32xf32>
      %cst_18 = arith.constant 9.99999974E-6 : f32
      %29 = vector.broadcast %cst_18 : f32 to vector<16x1xf32>
      %30 = arith.addf %26, %29 : vector<16x1xf32>
      %31 = math.rsqrt %30 : vector<16x1xf32>
      %32 = vector.broadcast %31 : vector<16x1xf32> to vector<16x32xf32>
      %33 = arith.mulf %28, %32 : vector<16x32xf32>
      %34 = vector.broadcast %14 : vector<1x32xf32> to vector<16x32xf32>
      %35 = arith.mulf %33, %34 : vector<16x32xf32>
      %36 = vector.broadcast %15 : vector<1x32xf32> to vector<16x32xf32>
      %37 = arith.addf %35, %36 : vector<16x32xf32>
      %c0_19 = arith.constant 0 : index
      %c0_20 = arith.constant 0 : index
      %38 = vector.load %arg8[%c0_19, %c0_20] : memref<16x32xf32, #tpu.memory_space<vmem>>, vector<16x32xf32>
      tpu.vector_store %arg8[%c0_19, %c0_20], %37 {strides = array<i32>} : memref<16x32xf32, #tpu.memory_space<vmem>>, vector<16x32xf32>,
    } else {
    }
    %c0 = arith.constant 0 : index
    %c0_1 = arith.constant 0 : index
    %3 = vector.load %arg8[%c0, %c0_1] : memref<16x32xf32, #tpu.memory_space<vmem>>, vector<16x32xf32>
    %4 = arith.truncf %3 : vector<16x32xf32> to vector<16x32xbf16>
    %c0_2 = arith.constant 0 : index
    %c0_3 = arith.constant 0 : index
    %5 = vector.load %arg5[%c0_2, %c0_3] : memref<32x96xbf16, #tpu.memory_space<vmem>>, vector<32x96xbf16>
    %cst = arith.constant dense<0.000000e+00> : vector<16x96xf32>
    %6 = tpu.matmul %4, %5, %cst {dimension_numbers = #tpu.dot_dimension_numbers<[1], [0], [0], [1], [0, 0, 1, 1], [], []>} : vector<16x32xbf16>, vector<32x96xbf16>, vector<16x96xf32> -> vector<16x96xf32>
    %c0_4 = arith.constant 0 : index
    %c0_5 = arith.constant 0 : index
    %7 = vector.load %arg6[%c0_4, %c0_5] : memref<1x96xf32, #tpu.memory_space<vmem>>, vector<1x96xf32>
    %8 = vector.broadcast %7 : vector<1x96xf32> to vector<16x96xf32>
    %9 = arith.addf %6, %8 : vector<16x96xf32>
    %10 = arith.truncf %9 : vector<16x96xf32> to vector<16x96xbf16>
    %c0_6 = arith.constant 0 : index
    %c0_7 = arith.constant 0 : index
    %11 = vector.load %arg7[%c0_6, %c0_7] : memref<16x96xbf16, #tpu.memory_space<vmem>>, vector<16x96xbf16>
    tpu.vector_store %arg7[%c0_6, %c0_7], %10 {strides = array<i32>} : memref<16x96xbf16, #tpu.memory_space<vmem>>, vector<16x96xbf16>,
    return
  }
  func.func @transform_0(%arg0: i32, %arg1: i32) -> (i32, i32) {
    %c0_i32 = arith.constant 0 : i32
    %c0_i32_0 = arith.constant 0 : i32
    return %arg0, %c0_i32 : i32, i32
  }
  func.func @transform_1(%arg0: i32, %arg1: i32) -> (i32, i32) {
    %c0_i32 = arith.constant 0 : i32
    %c0_i32_0 = arith.constant 0 : i32
    %c0_i32_1 = arith.constant 0 : i32
    return %c0_i32, %c0_i32_0 : i32, i32
  }
  func.func @transform_2(%arg0: i32, %arg1: i32) -> (i32, i32) {
    %c0_i32 = arith.constant 0 : i32
    %c0_i32_0 = arith.constant 0 : i32
    %c0_i32_1 = arith.constant 0 : i32
    return %c0_i32, %c0_i32_0 : i32, i32
  }
  func.func @transform_3(%arg0: i32, %arg1: i32) -> (i32, i32) {
    %c0_i32 = arith.constant 0 : i32
    %c0_i32_0 = arith.constant 0 : i32
    return %c0_i32, %arg1 : i32, i32
  }
  func.func @transform_4(%arg0: i32, %arg1: i32) -> (i32, i32) {
    %c0_i32 = arith.constant 0 : i32
    %c0_i32_0 = arith.constant 0 : i32
    return %c0_i32, %arg1 : i32, i32
  }
  func.func @transform_5(%arg0: i32, %arg1: i32) -> (i32, i32) {
    %c0_i32 = arith.constant 0 : i32
    return %arg0, %arg1 : i32, i32
  }
}

module attributes {stable_mosaic.version = 11 : i64} {
  func.func @_self_attn_kernel_fused(%arg0: i32, %arg1: memref<1x8x96xbf16, #tpu.memory_space<vmem>>, %arg2: memref<1x1x8xf32, #tpu.memory_space<vmem>>, %arg3: memref<32x32xbf16, #tpu.memory_space<vmem>>, %arg4: memref<1x32xf32, #tpu.memory_space<vmem>>, %arg5: memref<1x8x32xbf16, #tpu.memory_space<vmem>>, %arg6: memref<1x8x32xbf16, #tpu.memory_space<vmem>>) attributes {dimension_semantics = [#tpu.dimension_semantics<parallel>], iteration_bounds = array<i64: 2>, scalar_prefetch = 0 : i64, scratch_operands = 0 : i64, tpu.core_type = #tpu.core_type<tc>, window_params = [{transform_indices = @transform_0, window_bounds = array<i64: 1, 8, 96>}, {transform_indices = @transform_1, window_bounds = array<i64: 1, 1, 8>}, {pipeline_mode = #tpu.pipeline_mode<synchronous>, transform_indices = @transform_2, window_bounds = array<i64: 32, 32>}, {pipeline_mode = #tpu.pipeline_mode<synchronous>, transform_indices = @transform_3, window_bounds = array<i64: 1, 32>}, {transform_indices = @transform_4, window_bounds = array<i64: 1, 8, 32>}, {transform_indices = @transform_5, window_bounds = array<i64: 1, 8, 32>}]} {
    %c0 = arith.constant 0 : index
    %c0_0 = arith.constant 0 : index
    %c0_1 = arith.constant 0 : index
    %0 = vector.load %arg1[%c0, %c0_0, %c0_1] : memref<1x8x96xbf16, #tpu.memory_space<vmem>>, vector<1x8x96xbf16>
    %1 = vector.shape_cast %0 : vector<1x8x96xbf16> to vector<8x96xbf16>
    %2 = vector.extract_strided_slice %1 {offsets = [0, 0], sizes = [8, 32], strides = [1, 1]} : vector<8x96xbf16> to vector<8x32xbf16>
    %3 = vector.extract_strided_slice %1 {offsets = [0, 32], sizes = [8, 32], strides = [1, 1]} : vector<8x96xbf16> to vector<8x32xbf16>
    %4 = vector.extract_strided_slice %1 {offsets = [0, 64], sizes = [8, 32], strides = [1, 1]} : vector<8x96xbf16> to vector<8x32xbf16>
    %c0_2 = arith.constant 0 : index
    %c0_3 = arith.constant 0 : index
    %c0_4 = arith.constant 0 : index
    %5 = vector.load %arg2[%c0_2, %c0_3, %c0_4] : memref<1x1x8xf32, #tpu.memory_space<vmem>>, vector<1x1x8xf32>
    %6 = vector.shape_cast %5 : vector<1x1x8xf32> to vector<1x8xf32>
    %c0_5 = arith.constant 0 : index
    %c0_6 = arith.constant 0 : index
    %7 = vector.load %arg3[%c0_5, %c0_6] : memref<32x32xbf16, #tpu.memory_space<vmem>>, vector<32x32xbf16>
    %c0_7 = arith.constant 0 : index
    %c0_8 = arith.constant 0 : index
    %8 = vector.load %arg4[%c0_7, %c0_8] : memref<1x32xf32, #tpu.memory_space<vmem>>, vector<1x32xf32>
    %c0_9 = arith.constant 0 : index
    %c0_10 = arith.constant 0 : index
    %c0_11 = arith.constant 0 : index
    %9 = vector.load %arg5[%c0_9, %c0_10, %c0_11] : memref<1x8x32xbf16, #tpu.memory_space<vmem>>, vector<1x8x32xbf16>
    %10 = vector.shape_cast %9 : vector<1x8x32xbf16> to vector<8x32xbf16>
    %cst = arith.constant 0.000000e+00 : f32
    %11 = vector.broadcast %cst : f32 to vector<1x8xf32>
    %12 = arith.cmpf ogt, %6, %11 : vector<1x8xf32>
    %13 = arith.extf %10 : vector<8x32xbf16> to vector<8x32xf32>
    %14 = vector.broadcast %8 : vector<1x32xf32> to vector<8x32xf32>
    %15 = arith.addf %13, %14 : vector<8x32xf32>
    %16 = vector.extract_strided_slice %2 {offsets = [0, 0], sizes = [8, 8], strides = [1, 1]} : vector<8x32xbf16> to vector<8x8xbf16>
    %17 = vector.extract_strided_slice %3 {offsets = [0, 0], sizes = [8, 8], strides = [1, 1]} : vector<8x32xbf16> to vector<8x8xbf16>
    %18 = vector.extract_strided_slice %4 {offsets = [0, 0], sizes = [8, 8], strides = [1, 1]} : vector<8x32xbf16> to vector<8x8xbf16>
    %cst_12 = arith.constant dense<0.000000e+00> : vector<8x8xf32>
    %19 = tpu.matmul %16, %17, %cst_12 {dimension_numbers = #tpu.dot_dimension_numbers<[1], [1], [0], [0], [0, 0, 1, 0], [], []>} : vector<8x8xbf16>, vector<8x8xbf16>, vector<8x8xf32> -> vector<8x8xf32>
    %cst_13 = arith.constant 0.353553385 : f32
    %20 = vector.broadcast %cst_13 : f32 to vector<8x8xf32>
    %21 = arith.mulf %19, %20 : vector<8x8xf32>
    %cst_14 = arith.constant -1.000000e+09 : f32
    %22 = vector.shape_cast %12 : vector<1x8xi1> to vector<1x8xi1>
    %23 = vector.broadcast %22 : vector<1x8xi1> to vector<8x8xi1>
    %24 = vector.broadcast %cst_14 : f32 to vector<8x8xf32>
    %25 = arith.select %23, %21, %24 : vector<8x8xi1>, vector<8x8xf32>
    %cst_15 = arith.constant dense<0xFF800000> : vector<8xf32>
    %26 = vector.multi_reduction <maximumf>, %25, %cst_15 [1] : vector<8x8xf32> to vector<8xf32>
    %27 = vector.shape_cast %26 : vector<8xf32> to vector<8x1xf32>
    %28 = vector.broadcast %27 : vector<8x1xf32> to vector<8x8xf32>
    %29 = arith.subf %25, %28 : vector<8x8xf32>
    %30 = math.exp %29 : vector<8x8xf32>
    %cst_16 = arith.constant dense<0.000000e+00> : vector<8xf32>
    %31 = vector.multi_reduction <add>, %30, %cst_16 [1] : vector<8x8xf32> to vector<8xf32>
    %32 = vector.shape_cast %31 : vector<8xf32> to vector<8x1xf32>
    %33 = tpu.reciprocal %32 {approx = true} : vector<8x1xf32> -> vector<8x1xf32>
    %34 = vector.broadcast %33 : vector<8x1xf32> to vector<8x8xf32>
    %35 = arith.mulf %30, %34 : vector<8x8xf32>
    %36 = arith.truncf %35 : vector<8x8xf32> to vector<8x8xbf16>
    %cst_17 = arith.constant dense<0.000000e+00> : vector<8x8xf32>
    %37 = tpu.matmul %36, %18, %cst_17 {dimension_numbers = #tpu.dot_dimension_numbers<[1], [0], [0], [1], [0, 0, 1, 1], [], []>} : vector<8x8xbf16>, vector<8x8xbf16>, vector<8x8xf32> -> vector<8x8xf32>
    %38 = arith.truncf %37 : vector<8x8xf32> to vector<8x8xbf16>
    %39 = vector.extract_strided_slice %7 {offsets = [0, 0], sizes = [8, 32], strides = [1, 1]} : vector<32x32xbf16> to vector<8x32xbf16>
    %cst_18 = arith.constant dense<0.000000e+00> : vector<8x32xf32>
    %40 = tpu.matmul %38, %39, %cst_18 {dimension_numbers = #tpu.dot_dimension_numbers<[1], [0], [0], [1], [0, 0, 1, 1], [], []>} : vector<8x8xbf16>, vector<8x32xbf16>, vector<8x32xf32> -> vector<8x32xf32>
    %41 = arith.addf %15, %40 : vector<8x32xf32>
    %42 = vector.extract_strided_slice %2 {offsets = [0, 8], sizes = [8, 8], strides = [1, 1]} : vector<8x32xbf16> to vector<8x8xbf16>
    %43 = vector.extract_strided_slice %3 {offsets = [0, 8], sizes = [8, 8], strides = [1, 1]} : vector<8x32xbf16> to vector<8x8xbf16>
    %44 = vector.extract_strided_slice %4 {offsets = [0, 8], sizes = [8, 8], strides = [1, 1]} : vector<8x32xbf16> to vector<8x8xbf16>
    %cst_19 = arith.constant dense<0.000000e+00> : vector<8x8xf32>
    %45 = tpu.matmul %42, %43, %cst_19 {dimension_numbers = #tpu.dot_dimension_numbers<[1], [1], [0], [0], [0, 0, 1, 0], [], []>} : vector<8x8xbf16>, vector<8x8xbf16>, vector<8x8xf32> -> vector<8x8xf32>
    %cst_20 = arith.constant 0.353553385 : f32
    %46 = vector.broadcast %cst_20 : f32 to vector<8x8xf32>
    %47 = arith.mulf %45, %46 : vector<8x8xf32>
    %cst_21 = arith.constant -1.000000e+09 : f32
    %48 = vector.shape_cast %12 : vector<1x8xi1> to vector<1x8xi1>
    %49 = vector.broadcast %48 : vector<1x8xi1> to vector<8x8xi1>
    %50 = vector.broadcast %cst_21 : f32 to vector<8x8xf32>
    %51 = arith.select %49, %47, %50 : vector<8x8xi1>, vector<8x8xf32>
    %cst_22 = arith.constant dense<0xFF800000> : vector<8xf32>
    %52 = vector.multi_reduction <maximumf>, %51, %cst_22 [1] : vector<8x8xf32> to vector<8xf32>
    %53 = vector.shape_cast %52 : vector<8xf32> to vector<8x1xf32>
    %54 = vector.broadcast %53 : vector<8x1xf32> to vector<8x8xf32>
    %55 = arith.subf %51, %54 : vector<8x8xf32>
    %56 = math.exp %55 : vector<8x8xf32>
    %cst_23 = arith.constant dense<0.000000e+00> : vector<8xf32>
    %57 = vector.multi_reduction <add>, %56, %cst_23 [1] : vector<8x8xf32> to vector<8xf32>
    %58 = vector.shape_cast %57 : vector<8xf32> to vector<8x1xf32>
    %59 = tpu.reciprocal %58 {approx = true} : vector<8x1xf32> -> vector<8x1xf32>
    %60 = vector.broadcast %59 : vector<8x1xf32> to vector<8x8xf32>
    %61 = arith.mulf %56, %60 : vector<8x8xf32>
    %62 = arith.truncf %61 : vector<8x8xf32> to vector<8x8xbf16>
    %cst_24 = arith.constant dense<0.000000e+00> : vector<8x8xf32>
    %63 = tpu.matmul %62, %44, %cst_24 {dimension_numbers = #tpu.dot_dimension_numbers<[1], [0], [0], [1], [0, 0, 1, 1], [], []>} : vector<8x8xbf16>, vector<8x8xbf16>, vector<8x8xf32> -> vector<8x8xf32>
    %64 = arith.truncf %63 : vector<8x8xf32> to vector<8x8xbf16>
    %65 = vector.extract_strided_slice %7 {offsets = [8, 0], sizes = [8, 32], strides = [1, 1]} : vector<32x32xbf16> to vector<8x32xbf16>
    %cst_25 = arith.constant dense<0.000000e+00> : vector<8x32xf32>
    %66 = tpu.matmul %64, %65, %cst_25 {dimension_numbers = #tpu.dot_dimension_numbers<[1], [0], [0], [1], [0, 0, 1, 1], [], []>} : vector<8x8xbf16>, vector<8x32xbf16>, vector<8x32xf32> -> vector<8x32xf32>
    %67 = arith.addf %41, %66 : vector<8x32xf32>
    %68 = vector.extract_strided_slice %2 {offsets = [0, 16], sizes = [8, 8], strides = [1, 1]} : vector<8x32xbf16> to vector<8x8xbf16>
    %69 = vector.extract_strided_slice %3 {offsets = [0, 16], sizes = [8, 8], strides = [1, 1]} : vector<8x32xbf16> to vector<8x8xbf16>
    %70 = vector.extract_strided_slice %4 {offsets = [0, 16], sizes = [8, 8], strides = [1, 1]} : vector<8x32xbf16> to vector<8x8xbf16>
    %cst_26 = arith.constant dense<0.000000e+00> : vector<8x8xf32>
    %71 = tpu.matmul %68, %69, %cst_26 {dimension_numbers = #tpu.dot_dimension_numbers<[1], [1], [0], [0], [0, 0, 1, 0], [], []>} : vector<8x8xbf16>, vector<8x8xbf16>, vector<8x8xf32> -> vector<8x8xf32>
    %cst_27 = arith.constant 0.353553385 : f32
    %72 = vector.broadcast %cst_27 : f32 to vector<8x8xf32>
    %73 = arith.mulf %71, %72 : vector<8x8xf32>
    %cst_28 = arith.constant -1.000000e+09 : f32
    %74 = vector.shape_cast %12 : vector<1x8xi1> to vector<1x8xi1>
    %75 = vector.broadcast %74 : vector<1x8xi1> to vector<8x8xi1>
    %76 = vector.broadcast %cst_28 : f32 to vector<8x8xf32>
    %77 = arith.select %75, %73, %76 : vector<8x8xi1>, vector<8x8xf32>
    %cst_29 = arith.constant dense<0xFF800000> : vector<8xf32>
    %78 = vector.multi_reduction <maximumf>, %77, %cst_29 [1] : vector<8x8xf32> to vector<8xf32>
    %79 = vector.shape_cast %78 : vector<8xf32> to vector<8x1xf32>
    %80 = vector.broadcast %79 : vector<8x1xf32> to vector<8x8xf32>
    %81 = arith.subf %77, %80 : vector<8x8xf32>
    %82 = math.exp %81 : vector<8x8xf32>
    %cst_30 = arith.constant dense<0.000000e+00> : vector<8xf32>
    %83 = vector.multi_reduction <add>, %82, %cst_30 [1] : vector<8x8xf32> to vector<8xf32>
    %84 = vector.shape_cast %83 : vector<8xf32> to vector<8x1xf32>
    %85 = tpu.reciprocal %84 {approx = true} : vector<8x1xf32> -> vector<8x1xf32>
    %86 = vector.broadcast %85 : vector<8x1xf32> to vector<8x8xf32>
    %87 = arith.mulf %82, %86 : vector<8x8xf32>
    %88 = arith.truncf %87 : vector<8x8xf32> to vector<8x8xbf16>
    %cst_31 = arith.constant dense<0.000000e+00> : vector<8x8xf32>
    %89 = tpu.matmul %88, %70, %cst_31 {dimension_numbers = #tpu.dot_dimension_numbers<[1], [0], [0], [1], [0, 0, 1, 1], [], []>} : vector<8x8xbf16>, vector<8x8xbf16>, vector<8x8xf32> -> vector<8x8xf32>
    %90 = arith.truncf %89 : vector<8x8xf32> to vector<8x8xbf16>
    %91 = vector.extract_strided_slice %7 {offsets = [16, 0], sizes = [8, 32], strides = [1, 1]} : vector<32x32xbf16> to vector<8x32xbf16>
    %cst_32 = arith.constant dense<0.000000e+00> : vector<8x32xf32>
    %92 = tpu.matmul %90, %91, %cst_32 {dimension_numbers = #tpu.dot_dimension_numbers<[1], [0], [0], [1], [0, 0, 1, 1], [], []>} : vector<8x8xbf16>, vector<8x32xbf16>, vector<8x32xf32> -> vector<8x32xf32>
    %93 = arith.addf %67, %92 : vector<8x32xf32>
    %94 = vector.extract_strided_slice %2 {offsets = [0, 24], sizes = [8, 8], strides = [1, 1]} : vector<8x32xbf16> to vector<8x8xbf16>
    %95 = vector.extract_strided_slice %3 {offsets = [0, 24], sizes = [8, 8], strides = [1, 1]} : vector<8x32xbf16> to vector<8x8xbf16>
    %96 = vector.extract_strided_slice %4 {offsets = [0, 24], sizes = [8, 8], strides = [1, 1]} : vector<8x32xbf16> to vector<8x8xbf16>
    %cst_33 = arith.constant dense<0.000000e+00> : vector<8x8xf32>
    %97 = tpu.matmul %94, %95, %cst_33 {dimension_numbers = #tpu.dot_dimension_numbers<[1], [1], [0], [0], [0, 0, 1, 0], [], []>} : vector<8x8xbf16>, vector<8x8xbf16>, vector<8x8xf32> -> vector<8x8xf32>
    %cst_34 = arith.constant 0.353553385 : f32
    %98 = vector.broadcast %cst_34 : f32 to vector<8x8xf32>
    %99 = arith.mulf %97, %98 : vector<8x8xf32>
    %cst_35 = arith.constant -1.000000e+09 : f32
    %100 = vector.shape_cast %12 : vector<1x8xi1> to vector<1x8xi1>
    %101 = vector.broadcast %100 : vector<1x8xi1> to vector<8x8xi1>
    %102 = vector.broadcast %cst_35 : f32 to vector<8x8xf32>
    %103 = arith.select %101, %99, %102 : vector<8x8xi1>, vector<8x8xf32>
    %cst_36 = arith.constant dense<0xFF800000> : vector<8xf32>
    %104 = vector.multi_reduction <maximumf>, %103, %cst_36 [1] : vector<8x8xf32> to vector<8xf32>
    %105 = vector.shape_cast %104 : vector<8xf32> to vector<8x1xf32>
    %106 = vector.broadcast %105 : vector<8x1xf32> to vector<8x8xf32>
    %107 = arith.subf %103, %106 : vector<8x8xf32>
    %108 = math.exp %107 : vector<8x8xf32>
    %cst_37 = arith.constant dense<0.000000e+00> : vector<8xf32>
    %109 = vector.multi_reduction <add>, %108, %cst_37 [1] : vector<8x8xf32> to vector<8xf32>
    %110 = vector.shape_cast %109 : vector<8xf32> to vector<8x1xf32>
    %111 = tpu.reciprocal %110 {approx = true} : vector<8x1xf32> -> vector<8x1xf32>
    %112 = vector.broadcast %111 : vector<8x1xf32> to vector<8x8xf32>
    %113 = arith.mulf %108, %112 : vector<8x8xf32>
    %114 = arith.truncf %113 : vector<8x8xf32> to vector<8x8xbf16>
    %cst_38 = arith.constant dense<0.000000e+00> : vector<8x8xf32>
    %115 = tpu.matmul %114, %96, %cst_38 {dimension_numbers = #tpu.dot_dimension_numbers<[1], [0], [0], [1], [0, 0, 1, 1], [], []>} : vector<8x8xbf16>, vector<8x8xbf16>, vector<8x8xf32> -> vector<8x8xf32>
    %116 = arith.truncf %115 : vector<8x8xf32> to vector<8x8xbf16>
    %117 = vector.extract_strided_slice %7 {offsets = [24, 0], sizes = [8, 32], strides = [1, 1]} : vector<32x32xbf16> to vector<8x32xbf16>
    %cst_39 = arith.constant dense<0.000000e+00> : vector<8x32xf32>
    %118 = tpu.matmul %116, %117, %cst_39 {dimension_numbers = #tpu.dot_dimension_numbers<[1], [0], [0], [1], [0, 0, 1, 1], [], []>} : vector<8x8xbf16>, vector<8x32xbf16>, vector<8x32xf32> -> vector<8x32xf32>
    %119 = arith.addf %93, %118 : vector<8x32xf32>
    %120 = arith.truncf %119 : vector<8x32xf32> to vector<8x32xbf16>
    %c0_40 = arith.constant 0 : index
    %c0_41 = arith.constant 0 : index
    %c0_42 = arith.constant 0 : index
    %121 = vector.load %arg6[%c0_40, %c0_41, %c0_42] : memref<1x8x32xbf16, #tpu.memory_space<vmem>>, vector<1x8x32xbf16>
    %122 = vector.shape_cast %121 : vector<1x8x32xbf16> to vector<8x32xbf16>
    %123 = vector.shape_cast %120 : vector<8x32xbf16> to vector<1x8x32xbf16>
    tpu.vector_store %arg6[%c0_40, %c0_41, %c0_42], %123 {strides = array<i32>} : memref<1x8x32xbf16, #tpu.memory_space<vmem>>, vector<1x8x32xbf16>,
    return
  }
  func.func @transform_0(%arg0: i32) -> (i32, i32, i32) {
    %c0_i32 = arith.constant 0 : i32
    %c0_i32_0 = arith.constant 0 : i32
    %c0_i32_1 = arith.constant 0 : i32
    return %arg0, %c0_i32, %c0_i32_0 : i32, i32, i32
  }
  func.func @transform_1(%arg0: i32) -> (i32, i32, i32) {
    %c0_i32 = arith.constant 0 : i32
    %c0_i32_0 = arith.constant 0 : i32
    %c0_i32_1 = arith.constant 0 : i32
    return %arg0, %c0_i32, %c0_i32_0 : i32, i32, i32
  }
  func.func @transform_2(%arg0: i32) -> (i32, i32) {
    %c0_i32 = arith.constant 0 : i32
    %c0_i32_0 = arith.constant 0 : i32
    %c0_i32_1 = arith.constant 0 : i32
    return %c0_i32, %c0_i32_0 : i32, i32
  }
  func.func @transform_3(%arg0: i32) -> (i32, i32) {
    %c0_i32 = arith.constant 0 : i32
    %c0_i32_0 = arith.constant 0 : i32
    %c0_i32_1 = arith.constant 0 : i32
    return %c0_i32, %c0_i32_0 : i32, i32
  }
  func.func @transform_4(%arg0: i32) -> (i32, i32, i32) {
    %c0_i32 = arith.constant 0 : i32
    %c0_i32_0 = arith.constant 0 : i32
    %c0_i32_1 = arith.constant 0 : i32
    return %arg0, %c0_i32, %c0_i32_0 : i32, i32, i32
  }
  func.func @transform_5(%arg0: i32) -> (i32, i32, i32) {
    %c0_i32 = arith.constant 0 : i32
    %c0_i32_0 = arith.constant 0 : i32
    %c0_i32_1 = arith.constant 0 : i32
    return %arg0, %c0_i32, %c0_i32_0 : i32, i32, i32
  }
}

module attributes {stable_mosaic.version = 11 : i64} {
  func.func @_matmul_kernel(%arg0: i32, %arg1: i32, %arg2: memref<16x32xbf16, #tpu.memory_space<vmem>>, %arg3: memref<32x64xbf16, #tpu.memory_space<vmem>>, %arg4: memref<1x64xf32, #tpu.memory_space<vmem>>, %arg5: memref<16x64xbf16, #tpu.memory_space<vmem>>) attributes {dimension_semantics = [#tpu.dimension_semantics<parallel>, #tpu.dimension_semantics<arbitrary>], iteration_bounds = array<i64: 1, 1>, scalar_prefetch = 0 : i64, scratch_operands = 0 : i64, tpu.core_type = #tpu.core_type<tc>, window_params = [{transform_indices = @transform_0, window_bounds = array<i64: 16, 32>}, {transform_indices = @transform_1, window_bounds = array<i64: 32, 64>}, {transform_indices = @transform_2, window_bounds = array<i64: 1, 64>}, {transform_indices = @transform_3, window_bounds = array<i64: 16, 64>}]} {
    %c0 = arith.constant 0 : index
    %c0_0 = arith.constant 0 : index
    %0 = vector.load %arg2[%c0, %c0_0] : memref<16x32xbf16, #tpu.memory_space<vmem>>, vector<16x32xbf16>
    %c0_1 = arith.constant 0 : index
    %c0_2 = arith.constant 0 : index
    %1 = vector.load %arg3[%c0_1, %c0_2] : memref<32x64xbf16, #tpu.memory_space<vmem>>, vector<32x64xbf16>
    %cst = arith.constant dense<0.000000e+00> : vector<16x64xf32>
    %2 = tpu.matmul %0, %1, %cst {dimension_numbers = #tpu.dot_dimension_numbers<[1], [0], [0], [1], [0, 0, 1, 1], [], []>} : vector<16x32xbf16>, vector<32x64xbf16>, vector<16x64xf32> -> vector<16x64xf32>
    %c0_3 = arith.constant 0 : index
    %c0_4 = arith.constant 0 : index
    %3 = vector.load %arg4[%c0_3, %c0_4] : memref<1x64xf32, #tpu.memory_space<vmem>>, vector<1x64xf32>
    %4 = vector.broadcast %3 : vector<1x64xf32> to vector<16x64xf32>
    %5 = arith.addf %2, %4 : vector<16x64xf32>
    %6 = arith.truncf %5 : vector<16x64xf32> to vector<16x64xbf16>
    %c0_5 = arith.constant 0 : index
    %c0_6 = arith.constant 0 : index
    %7 = vector.load %arg5[%c0_5, %c0_6] : memref<16x64xbf16, #tpu.memory_space<vmem>>, vector<16x64xbf16>
    tpu.vector_store %arg5[%c0_5, %c0_6], %6 {strides = array<i32>} : memref<16x64xbf16, #tpu.memory_space<vmem>>, vector<16x64xbf16>,
    return
  }
  func.func @transform_0(%arg0: i32, %arg1: i32) -> (i32, i32) {
    %c0_i32 = arith.constant 0 : i32
    %c0_i32_0 = arith.constant 0 : i32
    return %arg0, %c0_i32 : i32, i32
  }
  func.func @transform_1(%arg0: i32, %arg1: i32) -> (i32, i32) {
    %c0_i32 = arith.constant 0 : i32
    %c0_i32_0 = arith.constant 0 : i32
    return %c0_i32, %arg1 : i32, i32
  }
  func.func @transform_2(%arg0: i32, %arg1: i32) -> (i32, i32) {
    %c0_i32 = arith.constant 0 : i32
    %c0_i32_0 = arith.constant 0 : i32
    return %c0_i32, %arg1 : i32, i32
  }
  func.func @transform_3(%arg0: i32, %arg1: i32) -> (i32, i32) {
    %c0_i32 = arith.constant 0 : i32
    return %arg0, %arg1 : i32, i32
  }
}

module attributes {stable_mosaic.version = 11 : i64} {
  func.func @_ln_ffn_kernel(%arg0: i32, %arg1: memref<16x32xbf16, #tpu.memory_space<vmem>>, %arg2: memref<1x32xf32, #tpu.memory_space<vmem>>, %arg3: memref<1x32xf32, #tpu.memory_space<vmem>>, %arg4: memref<32x64xbf16, #tpu.memory_space<vmem>>, %arg5: memref<1x64xf32, #tpu.memory_space<vmem>>, %arg6: memref<64x32xbf16, #tpu.memory_space<vmem>>, %arg7: memref<1x32xf32, #tpu.memory_space<vmem>>, %arg8: memref<16x32xbf16, #tpu.memory_space<vmem>>) attributes {dimension_semantics = [#tpu.dimension_semantics<parallel>], iteration_bounds = array<i64: 1>, scalar_prefetch = 0 : i64, scratch_operands = 0 : i64, tpu.core_type = #tpu.core_type<tc>, window_params = [{transform_indices = @transform_0, window_bounds = array<i64: 16, 32>}, {pipeline_mode = #tpu.pipeline_mode<synchronous>, transform_indices = @transform_1, window_bounds = array<i64: 1, 32>}, {pipeline_mode = #tpu.pipeline_mode<synchronous>, transform_indices = @transform_2, window_bounds = array<i64: 1, 32>}, {pipeline_mode = #tpu.pipeline_mode<synchronous>, transform_indices = @transform_3, window_bounds = array<i64: 32, 64>}, {pipeline_mode = #tpu.pipeline_mode<synchronous>, transform_indices = @transform_4, window_bounds = array<i64: 1, 64>}, {pipeline_mode = #tpu.pipeline_mode<synchronous>, transform_indices = @transform_5, window_bounds = array<i64: 64, 32>}, {pipeline_mode = #tpu.pipeline_mode<synchronous>, transform_indices = @transform_6, window_bounds = array<i64: 1, 32>}, {transform_indices = @transform_7, window_bounds = array<i64: 16, 32>}]} {
    %c0 = arith.constant 0 : index
    %c0_0 = arith.constant 0 : index
    %0 = vector.load %arg1[%c0, %c0_0] : memref<16x32xbf16, #tpu.memory_space<vmem>>, vector<16x32xbf16>
    %1 = arith.extf %0 : vector<16x32xbf16> to vector<16x32xf32>
    %c0_1 = arith.constant 0 : index
    %c0_2 = arith.constant 0 : index
    %2 = vector.load %arg2[%c0_1, %c0_2] : memref<1x32xf32, #tpu.memory_space<vmem>>, vector<1x32xf32>
    %c0_3 = arith.constant 0 : index
    %c0_4 = arith.constant 0 : index
    %3 = vector.load %arg3[%c0_3, %c0_4] : memref<1x32xf32, #tpu.memory_space<vmem>>, vector<1x32xf32>
    %cst = arith.constant dense<0.000000e+00> : vector<16xf32>
    %4 = vector.multi_reduction <add>, %1, %cst [1] : vector<16x32xf32> to vector<16xf32>
    %5 = vector.shape_cast %4 : vector<16xf32> to vector<16x1xf32>
    %cst_5 = arith.constant 3.200000e+01 : f32
    %6 = vector.broadcast %cst_5 : f32 to vector<16x1xf32>
    %7 = arith.divf %5, %6 : vector<16x1xf32>
    %8 = vector.broadcast %7 : vector<16x1xf32> to vector<16x32xf32>
    %9 = arith.subf %1, %8 : vector<16x32xf32>
    %10 = arith.mulf %9, %9 : vector<16x32xf32>
    %cst_6 = arith.constant dense<0.000000e+00> : vector<16xf32>
    %11 = vector.multi_reduction <add>, %10, %cst_6 [1] : vector<16x32xf32> to vector<16xf32>
    %12 = vector.shape_cast %11 : vector<16xf32> to vector<16x1xf32>
    %cst_7 = arith.constant 3.200000e+01 : f32
    %13 = vector.broadcast %cst_7 : f32 to vector<16x1xf32>
    %14 = arith.divf %12, %13 : vector<16x1xf32>
    %15 = vector.broadcast %7 : vector<16x1xf32> to vector<16x32xf32>
    %16 = arith.subf %1, %15 : vector<16x32xf32>
    %cst_8 = arith.constant 9.99999974E-6 : f32
    %17 = vector.broadcast %cst_8 : f32 to vector<16x1xf32>
    %18 = arith.addf %14, %17 : vector<16x1xf32>
    %19 = math.rsqrt %18 : vector<16x1xf32>
    %20 = vector.broadcast %19 : vector<16x1xf32> to vector<16x32xf32>
    %21 = arith.mulf %16, %20 : vector<16x32xf32>
    %22 = vector.broadcast %2 : vector<1x32xf32> to vector<16x32xf32>
    %23 = arith.mulf %21, %22 : vector<16x32xf32>
    %24 = vector.broadcast %3 : vector<1x32xf32> to vector<16x32xf32>
    %25 = arith.addf %23, %24 : vector<16x32xf32>
    %26 = arith.truncf %25 : vector<16x32xf32> to vector<16x32xbf16>
    %c0_9 = arith.constant 0 : index
    %c0_10 = arith.constant 0 : index
    %27 = vector.load %arg4[%c0_9, %c0_10] : memref<32x64xbf16, #tpu.memory_space<vmem>>, vector<32x64xbf16>
    %cst_11 = arith.constant dense<0.000000e+00> : vector<16x64xf32>
    %28 = tpu.matmul %26, %27, %cst_11 {dimension_numbers = #tpu.dot_dimension_numbers<[1], [0], [0], [1], [0, 0, 1, 1], [], []>} : vector<16x32xbf16>, vector<32x64xbf16>, vector<16x64xf32> -> vector<16x64xf32>
    %c0_12 = arith.constant 0 : index
    %c0_13 = arith.constant 0 : index
    %29 = vector.load %arg5[%c0_12, %c0_13] : memref<1x64xf32, #tpu.memory_space<vmem>>, vector<1x64xf32>
    %30 = vector.broadcast %29 : vector<1x64xf32> to vector<16x64xf32>
    %31 = arith.addf %28, %30 : vector<16x64xf32>
    %cst_14 = arith.constant 0.000000e+00 : f32
    %32 = vector.broadcast %cst_14 : f32 to vector<16x64xf32>
    %33 = arith.maximumf %31, %32 : vector<16x64xf32>
    %34 = arith.truncf %33 : vector<16x64xf32> to vector<16x64xbf16>
    %c0_15 = arith.constant 0 : index
    %c0_16 = arith.constant 0 : index
    %35 = vector.load %arg6[%c0_15, %c0_16] : memref<64x32xbf16, #tpu.memory_space<vmem>>, vector<64x32xbf16>
    %cst_17 = arith.constant dense<0.000000e+00> : vector<16x32xf32>
    %36 = tpu.matmul %34, %35, %cst_17 {dimension_numbers = #tpu.dot_dimension_numbers<[1], [0], [0], [1], [0, 0, 1, 1], [], []>} : vector<16x64xbf16>, vector<64x32xbf16>, vector<16x32xf32> -> vector<16x32xf32>
    %c0_18 = arith.constant 0 : index
    %c0_19 = arith.constant 0 : index
    %37 = vector.load %arg7[%c0_18, %c0_19] : memref<1x32xf32, #tpu.memory_space<vmem>>, vector<1x32xf32>
    %38 = vector.broadcast %37 : vector<1x32xf32> to vector<16x32xf32>
    %39 = arith.addf %36, %38 : vector<16x32xf32>
    %40 = arith.addf %1, %39 : vector<16x32xf32>
    %41 = arith.truncf %40 : vector<16x32xf32> to vector<16x32xbf16>
    %c0_20 = arith.constant 0 : index
    %c0_21 = arith.constant 0 : index
    %42 = vector.load %arg8[%c0_20, %c0_21] : memref<16x32xbf16, #tpu.memory_space<vmem>>, vector<16x32xbf16>
    tpu.vector_store %arg8[%c0_20, %c0_21], %41 {strides = array<i32>} : memref<16x32xbf16, #tpu.memory_space<vmem>>, vector<16x32xbf16>,
    return
  }
  func.func @transform_0(%arg0: i32) -> (i32, i32) {
    %c0_i32 = arith.constant 0 : i32
    %c0_i32_0 = arith.constant 0 : i32
    return %arg0, %c0_i32 : i32, i32
  }
  func.func @transform_1(%arg0: i32) -> (i32, i32) {
    %c0_i32 = arith.constant 0 : i32
    %c0_i32_0 = arith.constant 0 : i32
    %c0_i32_1 = arith.constant 0 : i32
    return %c0_i32, %c0_i32_0 : i32, i32
  }
  func.func @transform_2(%arg0: i32) -> (i32, i32) {
    %c0_i32 = arith.constant 0 : i32
    %c0_i32_0 = arith.constant 0 : i32
    %c0_i32_1 = arith.constant 0 : i32
    return %c0_i32, %c0_i32_0 : i32, i32
  }
  func.func @transform_3(%arg0: i32) -> (i32, i32) {
    %c0_i32 = arith.constant 0 : i32
    %c0_i32_0 = arith.constant 0 : i32
    %c0_i32_1 = arith.constant 0 : i32
    return %c0_i32, %c0_i32_0 : i32, i32
  }
  func.func @transform_4(%arg0: i32) -> (i32, i32) {
    %c0_i32 = arith.constant 0 : i32
    %c0_i32_0 = arith.constant 0 : i32
    %c0_i32_1 = arith.constant 0 : i32
    return %c0_i32, %c0_i32_0 : i32, i32
  }
  func.func @transform_5(%arg0: i32) -> (i32, i32) {
    %c0_i32 = arith.constant 0 : i32
    %c0_i32_0 = arith.constant 0 : i32
    %c0_i32_1 = arith.constant 0 : i32
    return %c0_i32, %c0_i32_0 : i32, i32
  }
  func.func @transform_6(%arg0: i32) -> (i32, i32) {
    %c0_i32 = arith.constant 0 : i32
    %c0_i32_0 = arith.constant 0 : i32
    %c0_i32_1 = arith.constant 0 : i32
    return %c0_i32, %c0_i32_0 : i32, i32
  }
  func.func @transform_7(%arg0: i32) -> (i32, i32) {
    %c0_i32 = arith.constant 0 : i32
    %c0_i32_0 = arith.constant 0 : i32
    return %arg0, %c0_i32 : i32, i32
  }
}

module attributes {stable_mosaic.version = 11 : i64} {
  func.func @_self_attn_kernel_fused(%arg0: i32, %arg1: memref<1x8x96xbf16, #tpu.memory_space<vmem>>, %arg2: memref<1x1x8xf32, #tpu.memory_space<vmem>>, %arg3: memref<32x32xbf16, #tpu.memory_space<vmem>>, %arg4: memref<1x32xf32, #tpu.memory_space<vmem>>, %arg5: memref<1x8x32xbf16, #tpu.memory_space<vmem>>, %arg6: memref<1x8x32xbf16, #tpu.memory_space<vmem>>) attributes {dimension_semantics = [#tpu.dimension_semantics<parallel>], iteration_bounds = array<i64: 2>, scalar_prefetch = 0 : i64, scratch_operands = 0 : i64, tpu.core_type = #tpu.core_type<tc>, window_params = [{transform_indices = @transform_0, window_bounds = array<i64: 1, 8, 96>}, {transform_indices = @transform_1, window_bounds = array<i64: 1, 1, 8>}, {pipeline_mode = #tpu.pipeline_mode<synchronous>, transform_indices = @transform_2, window_bounds = array<i64: 32, 32>}, {pipeline_mode = #tpu.pipeline_mode<synchronous>, transform_indices = @transform_3, window_bounds = array<i64: 1, 32>}, {transform_indices = @transform_4, window_bounds = array<i64: 1, 8, 32>}, {transform_indices = @transform_5, window_bounds = array<i64: 1, 8, 32>}]} {
    %c0 = arith.constant 0 : index
    %c0_0 = arith.constant 0 : index
    %c0_1 = arith.constant 0 : index
    %0 = vector.load %arg1[%c0, %c0_0, %c0_1] : memref<1x8x96xbf16, #tpu.memory_space<vmem>>, vector<1x8x96xbf16>
    %1 = vector.shape_cast %0 : vector<1x8x96xbf16> to vector<8x96xbf16>
    %2 = vector.extract_strided_slice %1 {offsets = [0, 0], sizes = [8, 32], strides = [1, 1]} : vector<8x96xbf16> to vector<8x32xbf16>
    %3 = vector.extract_strided_slice %1 {offsets = [0, 32], sizes = [8, 32], strides = [1, 1]} : vector<8x96xbf16> to vector<8x32xbf16>
    %4 = vector.extract_strided_slice %1 {offsets = [0, 64], sizes = [8, 32], strides = [1, 1]} : vector<8x96xbf16> to vector<8x32xbf16>
    %c0_2 = arith.constant 0 : index
    %c0_3 = arith.constant 0 : index
    %c0_4 = arith.constant 0 : index
    %5 = vector.load %arg2[%c0_2, %c0_3, %c0_4] : memref<1x1x8xf32, #tpu.memory_space<vmem>>, vector<1x1x8xf32>
    %6 = vector.shape_cast %5 : vector<1x1x8xf32> to vector<1x8xf32>
    %c0_5 = arith.constant 0 : index
    %c0_6 = arith.constant 0 : index
    %7 = vector.load %arg3[%c0_5, %c0_6] : memref<32x32xbf16, #tpu.memory_space<vmem>>, vector<32x32xbf16>
    %c0_7 = arith.constant 0 : index
    %c0_8 = arith.constant 0 : index
    %8 = vector.load %arg4[%c0_7, %c0_8] : memref<1x32xf32, #tpu.memory_space<vmem>>, vector<1x32xf32>
    %c0_9 = arith.constant 0 : index
    %c0_10 = arith.constant 0 : index
    %c0_11 = arith.constant 0 : index
    %9 = vector.load %arg5[%c0_9, %c0_10, %c0_11] : memref<1x8x32xbf16, #tpu.memory_space<vmem>>, vector<1x8x32xbf16>
    %10 = vector.shape_cast %9 : vector<1x8x32xbf16> to vector<8x32xbf16>
    %cst = arith.constant 0.000000e+00 : f32
    %11 = vector.broadcast %cst : f32 to vector<1x8xf32>
    %12 = arith.cmpf ogt, %6, %11 : vector<1x8xf32>
    %13 = tpu.iota {dimensions = array<i32: 0>} : vector<8x8xi32>
    %c0_i32 = arith.constant 0 : i32
    %14 = vector.broadcast %c0_i32 : i32 to vector<8x8xi32>
    %15 = arith.addi %13, %14 : vector<8x8xi32>
    %16 = tpu.iota {dimensions = array<i32: 1>} : vector<8x8xi32>
    %17 = arith.cmpi sle, %16, %15 : vector<8x8xi32>
    %18 = vector.broadcast %12 : vector<1x8xi1> to vector<8x8xi1>
    %19 = arith.andi %18, %17 : vector<8x8xi1>
    %20 = arith.extf %10 : vector<8x32xbf16> to vector<8x32xf32>
    %21 = vector.broadcast %8 : vector<1x32xf32> to vector<8x32xf32>
    %22 = arith.addf %20, %21 : vector<8x32xf32>
    %23 = vector.extract_strided_slice %2 {offsets = [0, 0], sizes = [8, 8], strides = [1, 1]} : vector<8x32xbf16> to vector<8x8xbf16>
    %24 = vector.extract_strided_slice %3 {offsets = [0, 0], sizes = [8, 8], strides = [1, 1]} : vector<8x32xbf16> to vector<8x8xbf16>
    %25 = vector.extract_strided_slice %4 {offsets = [0, 0], sizes = [8, 8], strides = [1, 1]} : vector<8x32xbf16> to vector<8x8xbf16>
    %cst_12 = arith.constant dense<0.000000e+00> : vector<8x8xf32>
    %26 = tpu.matmul %23, %24, %cst_12 {dimension_numbers = #tpu.dot_dimension_numbers<[1], [1], [0], [0], [0, 0, 1, 0], [], []>} : vector<8x8xbf16>, vector<8x8xbf16>, vector<8x8xf32> -> vector<8x8xf32>
    %cst_13 = arith.constant 0.353553385 : f32
    %27 = vector.broadcast %cst_13 : f32 to vector<8x8xf32>
    %28 = arith.mulf %26, %27 : vector<8x8xf32>
    %cst_14 = arith.constant -1.000000e+09 : f32
    %29 = vector.broadcast %cst_14 : f32 to vector<8x8xf32>
    %30 = arith.select %19, %28, %29 : vector<8x8xi1>, vector<8x8xf32>
    %cst_15 = arith.constant dense<0xFF800000> : vector<8xf32>
    %31 = vector.multi_reduction <maximumf>, %30, %cst_15 [1] : vector<8x8xf32> to vector<8xf32>
    %32 = vector.shape_cast %31 : vector<8xf32> to vector<8x1xf32>
    %33 = vector.broadcast %32 : vector<8x1xf32> to vector<8x8xf32>
    %34 = arith.subf %30, %33 : vector<8x8xf32>
    %35 = math.exp %34 : vector<8x8xf32>
    %cst_16 = arith.constant dense<0.000000e+00> : vector<8xf32>
    %36 = vector.multi_reduction <add>, %35, %cst_16 [1] : vector<8x8xf32> to vector<8xf32>
    %37 = vector.shape_cast %36 : vector<8xf32> to vector<8x1xf32>
    %38 = tpu.reciprocal %37 {approx = true} : vector<8x1xf32> -> vector<8x1xf32>
    %39 = vector.broadcast %38 : vector<8x1xf32> to vector<8x8xf32>
    %40 = arith.mulf %35, %39 : vector<8x8xf32>
    %41 = arith.truncf %40 : vector<8x8xf32> to vector<8x8xbf16>
    %cst_17 = arith.constant dense<0.000000e+00> : vector<8x8xf32>
    %42 = tpu.matmul %41, %25, %cst_17 {dimension_numbers = #tpu.dot_dimension_numbers<[1], [0], [0], [1], [0, 0, 1, 1], [], []>} : vector<8x8xbf16>, vector<8x8xbf16>, vector<8x8xf32> -> vector<8x8xf32>
    %43 = arith.truncf %42 : vector<8x8xf32> to vector<8x8xbf16>
    %44 = vector.extract_strided_slice %7 {offsets = [0, 0], sizes = [8, 32], strides = [1, 1]} : vector<32x32xbf16> to vector<8x32xbf16>
    %cst_18 = arith.constant dense<0.000000e+00> : vector<8x32xf32>
    %45 = tpu.matmul %43, %44, %cst_18 {dimension_numbers = #tpu.dot_dimension_numbers<[1], [0], [0], [1], [0, 0, 1, 1], [], []>} : vector<8x8xbf16>, vector<8x32xbf16>, vector<8x32xf32> -> vector<8x32xf32>
    %46 = arith.addf %22, %45 : vector<8x32xf32>
    %47 = vector.extract_strided_slice %2 {offsets = [0, 8], sizes = [8, 8], strides = [1, 1]} : vector<8x32xbf16> to vector<8x8xbf16>
    %48 = vector.extract_strided_slice %3 {offsets = [0, 8], sizes = [8, 8], strides = [1, 1]} : vector<8x32xbf16> to vector<8x8xbf16>
    %49 = vector.extract_strided_slice %4 {offsets = [0, 8], sizes = [8, 8], strides = [1, 1]} : vector<8x32xbf16> to vector<8x8xbf16>
    %cst_19 = arith.constant dense<0.000000e+00> : vector<8x8xf32>
    %50 = tpu.matmul %47, %48, %cst_19 {dimension_numbers = #tpu.dot_dimension_numbers<[1], [1], [0], [0], [0, 0, 1, 0], [], []>} : vector<8x8xbf16>, vector<8x8xbf16>, vector<8x8xf32> -> vector<8x8xf32>
    %cst_20 = arith.constant 0.353553385 : f32
    %51 = vector.broadcast %cst_20 : f32 to vector<8x8xf32>
    %52 = arith.mulf %50, %51 : vector<8x8xf32>
    %cst_21 = arith.constant -1.000000e+09 : f32
    %53 = vector.broadcast %cst_21 : f32 to vector<8x8xf32>
    %54 = arith.select %19, %52, %53 : vector<8x8xi1>, vector<8x8xf32>
    %cst_22 = arith.constant dense<0xFF800000> : vector<8xf32>
    %55 = vector.multi_reduction <maximumf>, %54, %cst_22 [1] : vector<8x8xf32> to vector<8xf32>
    %56 = vector.shape_cast %55 : vector<8xf32> to vector<8x1xf32>
    %57 = vector.broadcast %56 : vector<8x1xf32> to vector<8x8xf32>
    %58 = arith.subf %54, %57 : vector<8x8xf32>
    %59 = math.exp %58 : vector<8x8xf32>
    %cst_23 = arith.constant dense<0.000000e+00> : vector<8xf32>
    %60 = vector.multi_reduction <add>, %59, %cst_23 [1] : vector<8x8xf32> to vector<8xf32>
    %61 = vector.shape_cast %60 : vector<8xf32> to vector<8x1xf32>
    %62 = tpu.reciprocal %61 {approx = true} : vector<8x1xf32> -> vector<8x1xf32>
    %63 = vector.broadcast %62 : vector<8x1xf32> to vector<8x8xf32>
    %64 = arith.mulf %59, %63 : vector<8x8xf32>
    %65 = arith.truncf %64 : vector<8x8xf32> to vector<8x8xbf16>
    %cst_24 = arith.constant dense<0.000000e+00> : vector<8x8xf32>
    %66 = tpu.matmul %65, %49, %cst_24 {dimension_numbers = #tpu.dot_dimension_numbers<[1], [0], [0], [1], [0, 0, 1, 1], [], []>} : vector<8x8xbf16>, vector<8x8xbf16>, vector<8x8xf32> -> vector<8x8xf32>
    %67 = arith.truncf %66 : vector<8x8xf32> to vector<8x8xbf16>
    %68 = vector.extract_strided_slice %7 {offsets = [8, 0], sizes = [8, 32], strides = [1, 1]} : vector<32x32xbf16> to vector<8x32xbf16>
    %cst_25 = arith.constant dense<0.000000e+00> : vector<8x32xf32>
    %69 = tpu.matmul %67, %68, %cst_25 {dimension_numbers = #tpu.dot_dimension_numbers<[1], [0], [0], [1], [0, 0, 1, 1], [], []>} : vector<8x8xbf16>, vector<8x32xbf16>, vector<8x32xf32> -> vector<8x32xf32>
    %70 = arith.addf %46, %69 : vector<8x32xf32>
    %71 = vector.extract_strided_slice %2 {offsets = [0, 16], sizes = [8, 8], strides = [1, 1]} : vector<8x32xbf16> to vector<8x8xbf16>
    %72 = vector.extract_strided_slice %3 {offsets = [0, 16], sizes = [8, 8], strides = [1, 1]} : vector<8x32xbf16> to vector<8x8xbf16>
    %73 = vector.extract_strided_slice %4 {offsets = [0, 16], sizes = [8, 8], strides = [1, 1]} : vector<8x32xbf16> to vector<8x8xbf16>
    %cst_26 = arith.constant dense<0.000000e+00> : vector<8x8xf32>
    %74 = tpu.matmul %71, %72, %cst_26 {dimension_numbers = #tpu.dot_dimension_numbers<[1], [1], [0], [0], [0, 0, 1, 0], [], []>} : vector<8x8xbf16>, vector<8x8xbf16>, vector<8x8xf32> -> vector<8x8xf32>
    %cst_27 = arith.constant 0.353553385 : f32
    %75 = vector.broadcast %cst_27 : f32 to vector<8x8xf32>
    %76 = arith.mulf %74, %75 : vector<8x8xf32>
    %cst_28 = arith.constant -1.000000e+09 : f32
    %77 = vector.broadcast %cst_28 : f32 to vector<8x8xf32>
    %78 = arith.select %19, %76, %77 : vector<8x8xi1>, vector<8x8xf32>
    %cst_29 = arith.constant dense<0xFF800000> : vector<8xf32>
    %79 = vector.multi_reduction <maximumf>, %78, %cst_29 [1] : vector<8x8xf32> to vector<8xf32>
    %80 = vector.shape_cast %79 : vector<8xf32> to vector<8x1xf32>
    %81 = vector.broadcast %80 : vector<8x1xf32> to vector<8x8xf32>
    %82 = arith.subf %78, %81 : vector<8x8xf32>
    %83 = math.exp %82 : vector<8x8xf32>
    %cst_30 = arith.constant dense<0.000000e+00> : vector<8xf32>
    %84 = vector.multi_reduction <add>, %83, %cst_30 [1] : vector<8x8xf32> to vector<8xf32>
    %85 = vector.shape_cast %84 : vector<8xf32> to vector<8x1xf32>
    %86 = tpu.reciprocal %85 {approx = true} : vector<8x1xf32> -> vector<8x1xf32>
    %87 = vector.broadcast %86 : vector<8x1xf32> to vector<8x8xf32>
    %88 = arith.mulf %83, %87 : vector<8x8xf32>
    %89 = arith.truncf %88 : vector<8x8xf32> to vector<8x8xbf16>
    %cst_31 = arith.constant dense<0.000000e+00> : vector<8x8xf32>
    %90 = tpu.matmul %89, %73, %cst_31 {dimension_numbers = #tpu.dot_dimension_numbers<[1], [0], [0], [1], [0, 0, 1, 1], [], []>} : vector<8x8xbf16>, vector<8x8xbf16>, vector<8x8xf32> -> vector<8x8xf32>
    %91 = arith.truncf %90 : vector<8x8xf32> to vector<8x8xbf16>
    %92 = vector.extract_strided_slice %7 {offsets = [16, 0], sizes = [8, 32], strides = [1, 1]} : vector<32x32xbf16> to vector<8x32xbf16>
    %cst_32 = arith.constant dense<0.000000e+00> : vector<8x32xf32>
    %93 = tpu.matmul %91, %92, %cst_32 {dimension_numbers = #tpu.dot_dimension_numbers<[1], [0], [0], [1], [0, 0, 1, 1], [], []>} : vector<8x8xbf16>, vector<8x32xbf16>, vector<8x32xf32> -> vector<8x32xf32>
    %94 = arith.addf %70, %93 : vector<8x32xf32>
    %95 = vector.extract_strided_slice %2 {offsets = [0, 24], sizes = [8, 8], strides = [1, 1]} : vector<8x32xbf16> to vector<8x8xbf16>
    %96 = vector.extract_strided_slice %3 {offsets = [0, 24], sizes = [8, 8], strides = [1, 1]} : vector<8x32xbf16> to vector<8x8xbf16>
    %97 = vector.extract_strided_slice %4 {offsets = [0, 24], sizes = [8, 8], strides = [1, 1]} : vector<8x32xbf16> to vector<8x8xbf16>
    %cst_33 = arith.constant dense<0.000000e+00> : vector<8x8xf32>
    %98 = tpu.matmul %95, %96, %cst_33 {dimension_numbers = #tpu.dot_dimension_numbers<[1], [1], [0], [0], [0, 0, 1, 0], [], []>} : vector<8x8xbf16>, vector<8x8xbf16>, vector<8x8xf32> -> vector<8x8xf32>
    %cst_34 = arith.constant 0.353553385 : f32
    %99 = vector.broadcast %cst_34 : f32 to vector<8x8xf32>
    %100 = arith.mulf %98, %99 : vector<8x8xf32>
    %cst_35 = arith.constant -1.000000e+09 : f32
    %101 = vector.broadcast %cst_35 : f32 to vector<8x8xf32>
    %102 = arith.select %19, %100, %101 : vector<8x8xi1>, vector<8x8xf32>
    %cst_36 = arith.constant dense<0xFF800000> : vector<8xf32>
    %103 = vector.multi_reduction <maximumf>, %102, %cst_36 [1] : vector<8x8xf32> to vector<8xf32>
    %104 = vector.shape_cast %103 : vector<8xf32> to vector<8x1xf32>
    %105 = vector.broadcast %104 : vector<8x1xf32> to vector<8x8xf32>
    %106 = arith.subf %102, %105 : vector<8x8xf32>
    %107 = math.exp %106 : vector<8x8xf32>
    %cst_37 = arith.constant dense<0.000000e+00> : vector<8xf32>
    %108 = vector.multi_reduction <add>, %107, %cst_37 [1] : vector<8x8xf32> to vector<8xf32>
    %109 = vector.shape_cast %108 : vector<8xf32> to vector<8x1xf32>
    %110 = tpu.reciprocal %109 {approx = true} : vector<8x1xf32> -> vector<8x1xf32>
    %111 = vector.broadcast %110 : vector<8x1xf32> to vector<8x8xf32>
    %112 = arith.mulf %107, %111 : vector<8x8xf32>
    %113 = arith.truncf %112 : vector<8x8xf32> to vector<8x8xbf16>
    %cst_38 = arith.constant dense<0.000000e+00> : vector<8x8xf32>
    %114 = tpu.matmul %113, %97, %cst_38 {dimension_numbers = #tpu.dot_dimension_numbers<[1], [0], [0], [1], [0, 0, 1, 1], [], []>} : vector<8x8xbf16>, vector<8x8xbf16>, vector<8x8xf32> -> vector<8x8xf32>
    %115 = arith.truncf %114 : vector<8x8xf32> to vector<8x8xbf16>
    %116 = vector.extract_strided_slice %7 {offsets = [24, 0], sizes = [8, 32], strides = [1, 1]} : vector<32x32xbf16> to vector<8x32xbf16>
    %cst_39 = arith.constant dense<0.000000e+00> : vector<8x32xf32>
    %117 = tpu.matmul %115, %116, %cst_39 {dimension_numbers = #tpu.dot_dimension_numbers<[1], [0], [0], [1], [0, 0, 1, 1], [], []>} : vector<8x8xbf16>, vector<8x32xbf16>, vector<8x32xf32> -> vector<8x32xf32>
    %118 = arith.addf %94, %117 : vector<8x32xf32>
    %119 = arith.truncf %118 : vector<8x32xf32> to vector<8x32xbf16>
    %c0_40 = arith.constant 0 : index
    %c0_41 = arith.constant 0 : index
    %c0_42 = arith.constant 0 : index
    %120 = vector.load %arg6[%c0_40, %c0_41, %c0_42] : memref<1x8x32xbf16, #tpu.memory_space<vmem>>, vector<1x8x32xbf16>
    %121 = vector.shape_cast %120 : vector<1x8x32xbf16> to vector<8x32xbf16>
    %122 = vector.shape_cast %119 : vector<8x32xbf16> to vector<1x8x32xbf16>
    tpu.vector_store %arg6[%c0_40, %c0_41, %c0_42], %122 {strides = array<i32>} : memref<1x8x32xbf16, #tpu.memory_space<vmem>>, vector<1x8x32xbf16>,
    return
  }
  func.func @transform_0(%arg0: i32) -> (i32, i32, i32) {
    %c0_i32 = arith.constant 0 : i32
    %c0_i32_0 = arith.constant 0 : i32
    %c0_i32_1 = arith.constant 0 : i32
    return %arg0, %c0_i32, %c0_i32_0 : i32, i32, i32
  }
  func.func @transform_1(%arg0: i32) -> (i32, i32, i32) {
    %c0_i32 = arith.constant 0 : i32
    %c0_i32_0 = arith.constant 0 : i32
    %c0_i32_1 = arith.constant 0 : i32
    return %arg0, %c0_i32, %c0_i32_0 : i32, i32, i32
  }
  func.func @transform_2(%arg0: i32) -> (i32, i32) {
    %c0_i32 = arith.constant 0 : i32
    %c0_i32_0 = arith.constant 0 : i32
    %c0_i32_1 = arith.constant 0 : i32
    return %c0_i32, %c0_i32_0 : i32, i32
  }
  func.func @transform_3(%arg0: i32) -> (i32, i32) {
    %c0_i32 = arith.constant 0 : i32
    %c0_i32_0 = arith.constant 0 : i32
    %c0_i32_1 = arith.constant 0 : i32
    return %c0_i32, %c0_i32_0 : i32, i32
  }
  func.func @transform_4(%arg0: i32) -> (i32, i32, i32) {
    %c0_i32 = arith.constant 0 : i32
    %c0_i32_0 = arith.constant 0 : i32
    %c0_i32_1 = arith.constant 0 : i32
    return %arg0, %c0_i32, %c0_i32_0 : i32, i32, i32
  }
  func.func @transform_5(%arg0: i32) -> (i32, i32, i32) {
    %c0_i32 = arith.constant 0 : i32
    %c0_i32_0 = arith.constant 0 : i32
    %c0_i32_1 = arith.constant 0 : i32
    return %arg0, %c0_i32, %c0_i32_0 : i32, i32, i32
  }
}

module attributes {stable_mosaic.version = 11 : i64} {
  func.func @_ln_matmul_kernel(%arg0: i32, %arg1: i32, %arg2: memref<16x32xbf16, #tpu.memory_space<vmem>>, %arg3: memref<1x32xf32, #tpu.memory_space<vmem>>, %arg4: memref<1x32xf32, #tpu.memory_space<vmem>>, %arg5: memref<32x32xbf16, #tpu.memory_space<vmem>>, %arg6: memref<1x32xf32, #tpu.memory_space<vmem>>, %arg7: memref<16x32xbf16, #tpu.memory_space<vmem>>, %arg8: memref<16x32xf32, #tpu.memory_space<vmem>>) attributes {dimension_semantics = [#tpu.dimension_semantics<parallel>, #tpu.dimension_semantics<arbitrary>], iteration_bounds = array<i64: 1, 1>, scalar_prefetch = 0 : i64, scratch_operands = 1 : i64, tpu.core_type = #tpu.core_type<tc>, window_params = [{transform_indices = @transform_0, window_bounds = array<i64: 16, 32>}, {pipeline_mode = #tpu.pipeline_mode<synchronous>, transform_indices = @transform_1, window_bounds = array<i64: 1, 32>}, {pipeline_mode = #tpu.pipeline_mode<synchronous>, transform_indices = @transform_2, window_bounds = array<i64: 1, 32>}, {transform_indices = @transform_3, window_bounds = array<i64: 32, 32>}, {transform_indices = @transform_4, window_bounds = array<i64: 1, 32>}, {transform_indices = @transform_5, window_bounds = array<i64: 16, 32>}]} {
    %c0_i32 = arith.constant 0 : i32
    %0 = arith.cmpi eq, %arg1, %c0_i32 : i32
    %1 = arith.extui %0 : i1 to i32
    %c0_i32_0 = arith.constant 0 : i32
    %2 = arith.cmpi ne, %1, %c0_i32_0 : i32
    scf.if %2 {
      %c0_8 = arith.constant 0 : index
      %c0_9 = arith.constant 0 : index
      %12 = vector.load %arg2[%c0_8, %c0_9] : memref<16x32xbf16, #tpu.memory_space<vmem>>, vector<16x32xbf16>
      %13 = arith.extf %12 : vector<16x32xbf16> to vector<16x32xf32>
      %c0_10 = arith.constant 0 : index
      %c0_11 = arith.constant 0 : index
      %14 = vector.load %arg3[%c0_10, %c0_11] : memref<1x32xf32, #tpu.memory_space<vmem>>, vector<1x32xf32>
      %c0_12 = arith.constant 0 : index
      %c0_13 = arith.constant 0 : index
      %15 = vector.load %arg4[%c0_12, %c0_13] : memref<1x32xf32, #tpu.memory_space<vmem>>, vector<1x32xf32>
      %cst_14 = arith.constant dense<0.000000e+00> : vector<16xf32>
      %16 = vector.multi_reduction <add>, %13, %cst_14 [1] : vector<16x32xf32> to vector<16xf32>
      %17 = vector.shape_cast %16 : vector<16xf32> to vector<16x1xf32>
      %cst_15 = arith.constant 3.200000e+01 : f32
      %18 = vector.broadcast %cst_15 : f32 to vector<16x1xf32>
      %19 = arith.divf %17, %18 : vector<16x1xf32>
      %20 = vector.broadcast %19 : vector<16x1xf32> to vector<16x32xf32>
      %21 = arith.subf %13, %20 : vector<16x32xf32>
      %22 = arith.mulf %21, %21 : vector<16x32xf32>
      %cst_16 = arith.constant dense<0.000000e+00> : vector<16xf32>
      %23 = vector.multi_reduction <add>, %22, %cst_16 [1] : vector<16x32xf32> to vector<16xf32>
      %24 = vector.shape_cast %23 : vector<16xf32> to vector<16x1xf32>
      %cst_17 = arith.constant 3.200000e+01 : f32
      %25 = vector.broadcast %cst_17 : f32 to vector<16x1xf32>
      %26 = arith.divf %24, %25 : vector<16x1xf32>
      %27 = vector.broadcast %19 : vector<16x1xf32> to vector<16x32xf32>
      %28 = arith.subf %13, %27 : vector<16x32xf32>
      %cst_18 = arith.constant 9.99999974E-6 : f32
      %29 = vector.broadcast %cst_18 : f32 to vector<16x1xf32>
      %30 = arith.addf %26, %29 : vector<16x1xf32>
      %31 = math.rsqrt %30 : vector<16x1xf32>
      %32 = vector.broadcast %31 : vector<16x1xf32> to vector<16x32xf32>
      %33 = arith.mulf %28, %32 : vector<16x32xf32>
      %34 = vector.broadcast %14 : vector<1x32xf32> to vector<16x32xf32>
      %35 = arith.mulf %33, %34 : vector<16x32xf32>
      %36 = vector.broadcast %15 : vector<1x32xf32> to vector<16x32xf32>
      %37 = arith.addf %35, %36 : vector<16x32xf32>
      %c0_19 = arith.constant 0 : index
      %c0_20 = arith.constant 0 : index
      %38 = vector.load %arg8[%c0_19, %c0_20] : memref<16x32xf32, #tpu.memory_space<vmem>>, vector<16x32xf32>
      tpu.vector_store %arg8[%c0_19, %c0_20], %37 {strides = array<i32>} : memref<16x32xf32, #tpu.memory_space<vmem>>, vector<16x32xf32>,
    } else {
    }
    %c0 = arith.constant 0 : index
    %c0_1 = arith.constant 0 : index
    %3 = vector.load %arg8[%c0, %c0_1] : memref<16x32xf32, #tpu.memory_space<vmem>>, vector<16x32xf32>
    %4 = arith.truncf %3 : vector<16x32xf32> to vector<16x32xbf16>
    %c0_2 = arith.constant 0 : index
    %c0_3 = arith.constant 0 : index
    %5 = vector.load %arg5[%c0_2, %c0_3] : memref<32x32xbf16, #tpu.memory_space<vmem>>, vector<32x32xbf16>
    %cst = arith.constant dense<0.000000e+00> : vector<16x32xf32>
    %6 = tpu.matmul %4, %5, %cst {dimension_numbers = #tpu.dot_dimension_numbers<[1], [0], [0], [1], [0, 0, 1, 1], [], []>} : vector<16x32xbf16>, vector<32x32xbf16>, vector<16x32xf32> -> vector<16x32xf32>
    %c0_4 = arith.constant 0 : index
    %c0_5 = arith.constant 0 : index
    %7 = vector.load %arg6[%c0_4, %c0_5] : memref<1x32xf32, #tpu.memory_space<vmem>>, vector<1x32xf32>
    %8 = vector.broadcast %7 : vector<1x32xf32> to vector<16x32xf32>
    %9 = arith.addf %6, %8 : vector<16x32xf32>
    %10 = arith.truncf %9 : vector<16x32xf32> to vector<16x32xbf16>
    %c0_6 = arith.constant 0 : index
    %c0_7 = arith.constant 0 : index
    %11 = vector.load %arg7[%c0_6, %c0_7] : memref<16x32xbf16, #tpu.memory_space<vmem>>, vector<16x32xbf16>
    tpu.vector_store %arg7[%c0_6, %c0_7], %10 {strides = array<i32>} : memref<16x32xbf16, #tpu.memory_space<vmem>>, vector<16x32xbf16>,
    return
  }
  func.func @transform_0(%arg0: i32, %arg1: i32) -> (i32, i32) {
    %c0_i32 = arith.constant 0 : i32
    %c0_i32_0 = arith.constant 0 : i32
    return %arg0, %c0_i32 : i32, i32
  }
  func.func @transform_1(%arg0: i32, %arg1: i32) -> (i32, i32) {
    %c0_i32 = arith.constant 0 : i32
    %c0_i32_0 = arith.constant 0 : i32
    %c0_i32_1 = arith.constant 0 : i32
    return %c0_i32, %c0_i32_0 : i32, i32
  }
  func.func @transform_2(%arg0: i32, %arg1: i32) -> (i32, i32) {
    %c0_i32 = arith.constant 0 : i32
    %c0_i32_0 = arith.constant 0 : i32
    %c0_i32_1 = arith.constant 0 : i32
    return %c0_i32, %c0_i32_0 : i32, i32
  }
  func.func @transform_3(%arg0: i32, %arg1: i32) -> (i32, i32) {
    %c0_i32 = arith.constant 0 : i32
    %c0_i32_0 = arith.constant 0 : i32
    return %c0_i32, %arg1 : i32, i32
  }
  func.func @transform_4(%arg0: i32, %arg1: i32) -> (i32, i32) {
    %c0_i32 = arith.constant 0 : i32
    %c0_i32_0 = arith.constant 0 : i32
    return %c0_i32, %arg1 : i32, i32
  }
  func.func @transform_5(%arg0: i32, %arg1: i32) -> (i32, i32) {
    %c0_i32 = arith.constant 0 : i32
    return %arg0, %arg1 : i32, i32
  }
}

module attributes {stable_mosaic.version = 11 : i64} {
  func.func @_cross_attn_kernel(%arg0: i32, %arg1: i32, %arg2: memref<1x8x32xbf16, #tpu.memory_space<vmem>>, %arg3: memref<1x8x64xbf16, #tpu.memory_space<vmem>>, %arg4: memref<1x1x8xf32, #tpu.memory_space<vmem>>, %arg5: memref<32x32xbf16, #tpu.memory_space<vmem>>, %arg6: memref<1x32xf32, #tpu.memory_space<vmem>>, %arg7: memref<1x8x32xbf16, #tpu.memory_space<vmem>>, %arg8: memref<1x8x32xbf16, #tpu.memory_space<vmem>>) attributes {dimension_semantics = [#tpu.dimension_semantics<parallel>, #tpu.dimension_semantics<parallel>], iteration_bounds = array<i64: 2, 1>, scalar_prefetch = 0 : i64, scratch_operands = 0 : i64, tpu.core_type = #tpu.core_type<tc>, window_params = [{transform_indices = @transform_0, window_bounds = array<i64: 1, 8, 32>}, {transform_indices = @transform_1, window_bounds = array<i64: 1, 8, 64>}, {transform_indices = @transform_2, window_bounds = array<i64: 1, 1, 8>}, {pipeline_mode = #tpu.pipeline_mode<synchronous>, transform_indices = @transform_3, window_bounds = array<i64: 32, 32>}, {pipeline_mode = #tpu.pipeline_mode<synchronous>, transform_indices = @transform_4, window_bounds = array<i64: 1, 32>}, {transform_indices = @transform_5, window_bounds = array<i64: 1, 8, 32>}, {transform_indices = @transform_6, window_bounds = array<i64: 1, 8, 32>}]} {
    %c0 = arith.constant 0 : index
    %c0_0 = arith.constant 0 : index
    %c0_1 = arith.constant 0 : index
    %0 = vector.load %arg3[%c0, %c0_0, %c0_1] : memref<1x8x64xbf16, #tpu.memory_space<vmem>>, vector<1x8x64xbf16>
    %1 = vector.shape_cast %0 : vector<1x8x64xbf16> to vector<8x64xbf16>
    %c0_2 = arith.constant 0 : index
    %c0_3 = arith.constant 0 : index
    %c0_4 = arith.constant 0 : index
    %2 = vector.load %arg2[%c0_2, %c0_3, %c0_4] : memref<1x8x32xbf16, #tpu.memory_space<vmem>>, vector<1x8x32xbf16>
    %3 = vector.shape_cast %2 : vector<1x8x32xbf16> to vector<8x32xbf16>
    %4 = vector.extract_strided_slice %1 {offsets = [0, 0], sizes = [8, 32], strides = [1, 1]} : vector<8x64xbf16> to vector<8x32xbf16>
    %5 = vector.extract_strided_slice %1 {offsets = [0, 32], sizes = [8, 32], strides = [1, 1]} : vector<8x64xbf16> to vector<8x32xbf16>
    %c0_5 = arith.constant 0 : index
    %c0_6 = arith.constant 0 : index
    %c0_7 = arith.constant 0 : index
    %6 = vector.load %arg4[%c0_5, %c0_6, %c0_7] : memref<1x1x8xf32, #tpu.memory_space<vmem>>, vector<1x1x8xf32>
    %7 = vector.shape_cast %6 : vector<1x1x8xf32> to vector<1x8xf32>
    %c0_8 = arith.constant 0 : index
    %c0_9 = arith.constant 0 : index
    %8 = vector.load %arg5[%c0_8, %c0_9] : memref<32x32xbf16, #tpu.memory_space<vmem>>, vector<32x32xbf16>
    %c0_10 = arith.constant 0 : index
    %c0_11 = arith.constant 0 : index
    %9 = vector.load %arg6[%c0_10, %c0_11] : memref<1x32xf32, #tpu.memory_space<vmem>>, vector<1x32xf32>
    %c0_12 = arith.constant 0 : index
    %c0_13 = arith.constant 0 : index
    %c0_14 = arith.constant 0 : index
    %10 = vector.load %arg7[%c0_12, %c0_13, %c0_14] : memref<1x8x32xbf16, #tpu.memory_space<vmem>>, vector<1x8x32xbf16>
    %11 = vector.shape_cast %10 : vector<1x8x32xbf16> to vector<8x32xbf16>
    %cst = arith.constant 0.000000e+00 : f32
    %12 = vector.broadcast %cst : f32 to vector<1x8xf32>
    %13 = arith.cmpf ogt, %7, %12 : vector<1x8xf32>
    %14 = arith.extf %11 : vector<8x32xbf16> to vector<8x32xf32>
    %15 = vector.broadcast %9 : vector<1x32xf32> to vector<8x32xf32>
    %16 = arith.addf %14, %15 : vector<8x32xf32>
    %17 = vector.extract_strided_slice %3 {offsets = [0, 0], sizes = [8, 8], strides = [1, 1]} : vector<8x32xbf16> to vector<8x8xbf16>
    %18 = vector.extract_strided_slice %4 {offsets = [0, 0], sizes = [8, 8], strides = [1, 1]} : vector<8x32xbf16> to vector<8x8xbf16>
    %19 = vector.extract_strided_slice %5 {offsets = [0, 0], sizes = [8, 8], strides = [1, 1]} : vector<8x32xbf16> to vector<8x8xbf16>
    %cst_15 = arith.constant dense<0.000000e+00> : vector<8x8xf32>
    %20 = tpu.matmul %17, %18, %cst_15 {dimension_numbers = #tpu.dot_dimension_numbers<[1], [1], [0], [0], [0, 0, 1, 0], [], []>} : vector<8x8xbf16>, vector<8x8xbf16>, vector<8x8xf32> -> vector<8x8xf32>
    %cst_16 = arith.constant 0.353553385 : f32
    %21 = vector.broadcast %cst_16 : f32 to vector<8x8xf32>
    %22 = arith.mulf %20, %21 : vector<8x8xf32>
    %cst_17 = arith.constant -1.000000e+09 : f32
    %23 = vector.shape_cast %13 : vector<1x8xi1> to vector<1x8xi1>
    %24 = vector.broadcast %23 : vector<1x8xi1> to vector<8x8xi1>
    %25 = vector.broadcast %cst_17 : f32 to vector<8x8xf32>
    %26 = arith.select %24, %22, %25 : vector<8x8xi1>, vector<8x8xf32>
    %cst_18 = arith.constant dense<0xFF800000> : vector<8xf32>
    %27 = vector.multi_reduction <maximumf>, %26, %cst_18 [1] : vector<8x8xf32> to vector<8xf32>
    %28 = vector.shape_cast %27 : vector<8xf32> to vector<8x1xf32>
    %29 = vector.broadcast %28 : vector<8x1xf32> to vector<8x8xf32>
    %30 = arith.subf %26, %29 : vector<8x8xf32>
    %31 = math.exp %30 : vector<8x8xf32>
    %cst_19 = arith.constant dense<0.000000e+00> : vector<8xf32>
    %32 = vector.multi_reduction <add>, %31, %cst_19 [1] : vector<8x8xf32> to vector<8xf32>
    %33 = vector.shape_cast %32 : vector<8xf32> to vector<8x1xf32>
    %34 = tpu.reciprocal %33 {approx = true} : vector<8x1xf32> -> vector<8x1xf32>
    %35 = vector.broadcast %34 : vector<8x1xf32> to vector<8x8xf32>
    %36 = arith.mulf %31, %35 : vector<8x8xf32>
    %37 = arith.truncf %36 : vector<8x8xf32> to vector<8x8xbf16>
    %cst_20 = arith.constant dense<0.000000e+00> : vector<8x8xf32>
    %38 = tpu.matmul %37, %19, %cst_20 {dimension_numbers = #tpu.dot_dimension_numbers<[1], [0], [0], [1], [0, 0, 1, 1], [], []>} : vector<8x8xbf16>, vector<8x8xbf16>, vector<8x8xf32> -> vector<8x8xf32>
    %39 = arith.truncf %38 : vector<8x8xf32> to vector<8x8xbf16>
    %40 = vector.extract_strided_slice %8 {offsets = [0, 0], sizes = [8, 32], strides = [1, 1]} : vector<32x32xbf16> to vector<8x32xbf16>
    %cst_21 = arith.constant dense<0.000000e+00> : vector<8x32xf32>
    %41 = tpu.matmul %39, %40, %cst_21 {dimension_numbers = #tpu.dot_dimension_numbers<[1], [0], [0], [1], [0, 0, 1, 1], [], []>} : vector<8x8xbf16>, vector<8x32xbf16>, vector<8x32xf32> -> vector<8x32xf32>
    %42 = arith.addf %16, %41 : vector<8x32xf32>
    %43 = vector.extract_strided_slice %3 {offsets = [0, 8], sizes = [8, 8], strides = [1, 1]} : vector<8x32xbf16> to vector<8x8xbf16>
    %44 = vector.extract_strided_slice %4 {offsets = [0, 8], sizes = [8, 8], strides = [1, 1]} : vector<8x32xbf16> to vector<8x8xbf16>
    %45 = vector.extract_strided_slice %5 {offsets = [0, 8], sizes = [8, 8], strides = [1, 1]} : vector<8x32xbf16> to vector<8x8xbf16>
    %cst_22 = arith.constant dense<0.000000e+00> : vector<8x8xf32>
    %46 = tpu.matmul %43, %44, %cst_22 {dimension_numbers = #tpu.dot_dimension_numbers<[1], [1], [0], [0], [0, 0, 1, 0], [], []>} : vector<8x8xbf16>, vector<8x8xbf16>, vector<8x8xf32> -> vector<8x8xf32>
    %cst_23 = arith.constant 0.353553385 : f32
    %47 = vector.broadcast %cst_23 : f32 to vector<8x8xf32>
    %48 = arith.mulf %46, %47 : vector<8x8xf32>
    %cst_24 = arith.constant -1.000000e+09 : f32
    %49 = vector.shape_cast %13 : vector<1x8xi1> to vector<1x8xi1>
    %50 = vector.broadcast %49 : vector<1x8xi1> to vector<8x8xi1>
    %51 = vector.broadcast %cst_24 : f32 to vector<8x8xf32>
    %52 = arith.select %50, %48, %51 : vector<8x8xi1>, vector<8x8xf32>
    %cst_25 = arith.constant dense<0xFF800000> : vector<8xf32>
    %53 = vector.multi_reduction <maximumf>, %52, %cst_25 [1] : vector<8x8xf32> to vector<8xf32>
    %54 = vector.shape_cast %53 : vector<8xf32> to vector<8x1xf32>
    %55 = vector.broadcast %54 : vector<8x1xf32> to vector<8x8xf32>
    %56 = arith.subf %52, %55 : vector<8x8xf32>
    %57 = math.exp %56 : vector<8x8xf32>
    %cst_26 = arith.constant dense<0.000000e+00> : vector<8xf32>
    %58 = vector.multi_reduction <add>, %57, %cst_26 [1] : vector<8x8xf32> to vector<8xf32>
    %59 = vector.shape_cast %58 : vector<8xf32> to vector<8x1xf32>
    %60 = tpu.reciprocal %59 {approx = true} : vector<8x1xf32> -> vector<8x1xf32>
    %61 = vector.broadcast %60 : vector<8x1xf32> to vector<8x8xf32>
    %62 = arith.mulf %57, %61 : vector<8x8xf32>
    %63 = arith.truncf %62 : vector<8x8xf32> to vector<8x8xbf16>
    %cst_27 = arith.constant dense<0.000000e+00> : vector<8x8xf32>
    %64 = tpu.matmul %63, %45, %cst_27 {dimension_numbers = #tpu.dot_dimension_numbers<[1], [0], [0], [1], [0, 0, 1, 1], [], []>} : vector<8x8xbf16>, vector<8x8xbf16>, vector<8x8xf32> -> vector<8x8xf32>
    %65 = arith.truncf %64 : vector<8x8xf32> to vector<8x8xbf16>
    %66 = vector.extract_strided_slice %8 {offsets = [8, 0], sizes = [8, 32], strides = [1, 1]} : vector<32x32xbf16> to vector<8x32xbf16>
    %cst_28 = arith.constant dense<0.000000e+00> : vector<8x32xf32>
    %67 = tpu.matmul %65, %66, %cst_28 {dimension_numbers = #tpu.dot_dimension_numbers<[1], [0], [0], [1], [0, 0, 1, 1], [], []>} : vector<8x8xbf16>, vector<8x32xbf16>, vector<8x32xf32> -> vector<8x32xf32>
    %68 = arith.addf %42, %67 : vector<8x32xf32>
    %69 = vector.extract_strided_slice %3 {offsets = [0, 16], sizes = [8, 8], strides = [1, 1]} : vector<8x32xbf16> to vector<8x8xbf16>
    %70 = vector.extract_strided_slice %4 {offsets = [0, 16], sizes = [8, 8], strides = [1, 1]} : vector<8x32xbf16> to vector<8x8xbf16>
    %71 = vector.extract_strided_slice %5 {offsets = [0, 16], sizes = [8, 8], strides = [1, 1]} : vector<8x32xbf16> to vector<8x8xbf16>
    %cst_29 = arith.constant dense<0.000000e+00> : vector<8x8xf32>
    %72 = tpu.matmul %69, %70, %cst_29 {dimension_numbers = #tpu.dot_dimension_numbers<[1], [1], [0], [0], [0, 0, 1, 0], [], []>} : vector<8x8xbf16>, vector<8x8xbf16>, vector<8x8xf32> -> vector<8x8xf32>
    %cst_30 = arith.constant 0.353553385 : f32
    %73 = vector.broadcast %cst_30 : f32 to vector<8x8xf32>
    %74 = arith.mulf %72, %73 : vector<8x8xf32>
    %cst_31 = arith.constant -1.000000e+09 : f32
    %75 = vector.shape_cast %13 : vector<1x8xi1> to vector<1x8xi1>
    %76 = vector.broadcast %75 : vector<1x8xi1> to vector<8x8xi1>
    %77 = vector.broadcast %cst_31 : f32 to vector<8x8xf32>
    %78 = arith.select %76, %74, %77 : vector<8x8xi1>, vector<8x8xf32>
    %cst_32 = arith.constant dense<0xFF800000> : vector<8xf32>
    %79 = vector.multi_reduction <maximumf>, %78, %cst_32 [1] : vector<8x8xf32> to vector<8xf32>
    %80 = vector.shape_cast %79 : vector<8xf32> to vector<8x1xf32>
    %81 = vector.broadcast %80 : vector<8x1xf32> to vector<8x8xf32>
    %82 = arith.subf %78, %81 : vector<8x8xf32>
    %83 = math.exp %82 : vector<8x8xf32>
    %cst_33 = arith.constant dense<0.000000e+00> : vector<8xf32>
    %84 = vector.multi_reduction <add>, %83, %cst_33 [1] : vector<8x8xf32> to vector<8xf32>
    %85 = vector.shape_cast %84 : vector<8xf32> to vector<8x1xf32>
    %86 = tpu.reciprocal %85 {approx = true} : vector<8x1xf32> -> vector<8x1xf32>
    %87 = vector.broadcast %86 : vector<8x1xf32> to vector<8x8xf32>
    %88 = arith.mulf %83, %87 : vector<8x8xf32>
    %89 = arith.truncf %88 : vector<8x8xf32> to vector<8x8xbf16>
    %cst_34 = arith.constant dense<0.000000e+00> : vector<8x8xf32>
    %90 = tpu.matmul %89, %71, %cst_34 {dimension_numbers = #tpu.dot_dimension_numbers<[1], [0], [0], [1], [0, 0, 1, 1], [], []>} : vector<8x8xbf16>, vector<8x8xbf16>, vector<8x8xf32> -> vector<8x8xf32>
    %91 = arith.truncf %90 : vector<8x8xf32> to vector<8x8xbf16>
    %92 = vector.extract_strided_slice %8 {offsets = [16, 0], sizes = [8, 32], strides = [1, 1]} : vector<32x32xbf16> to vector<8x32xbf16>
    %cst_35 = arith.constant dense<0.000000e+00> : vector<8x32xf32>
    %93 = tpu.matmul %91, %92, %cst_35 {dimension_numbers = #tpu.dot_dimension_numbers<[1], [0], [0], [1], [0, 0, 1, 1], [], []>} : vector<8x8xbf16>, vector<8x32xbf16>, vector<8x32xf32> -> vector<8x32xf32>
    %94 = arith.addf %68, %93 : vector<8x32xf32>
    %95 = vector.extract_strided_slice %3 {offsets = [0, 24], sizes = [8, 8], strides = [1, 1]} : vector<8x32xbf16> to vector<8x8xbf16>
    %96 = vector.extract_strided_slice %4 {offsets = [0, 24], sizes = [8, 8], strides = [1, 1]} : vector<8x32xbf16> to vector<8x8xbf16>
    %97 = vector.extract_strided_slice %5 {offsets = [0, 24], sizes = [8, 8], strides = [1, 1]} : vector<8x32xbf16> to vector<8x8xbf16>
    %cst_36 = arith.constant dense<0.000000e+00> : vector<8x8xf32>
    %98 = tpu.matmul %95, %96, %cst_36 {dimension_numbers = #tpu.dot_dimension_numbers<[1], [1], [0], [0], [0, 0, 1, 0], [], []>} : vector<8x8xbf16>, vector<8x8xbf16>, vector<8x8xf32> -> vector<8x8xf32>
    %cst_37 = arith.constant 0.353553385 : f32
    %99 = vector.broadcast %cst_37 : f32 to vector<8x8xf32>
    %100 = arith.mulf %98, %99 : vector<8x8xf32>
    %cst_38 = arith.constant -1.000000e+09 : f32
    %101 = vector.shape_cast %13 : vector<1x8xi1> to vector<1x8xi1>
    %102 = vector.broadcast %101 : vector<1x8xi1> to vector<8x8xi1>
    %103 = vector.broadcast %cst_38 : f32 to vector<8x8xf32>
    %104 = arith.select %102, %100, %103 : vector<8x8xi1>, vector<8x8xf32>
    %cst_39 = arith.constant dense<0xFF800000> : vector<8xf32>
    %105 = vector.multi_reduction <maximumf>, %104, %cst_39 [1] : vector<8x8xf32> to vector<8xf32>
    %106 = vector.shape_cast %105 : vector<8xf32> to vector<8x1xf32>
    %107 = vector.broadcast %106 : vector<8x1xf32> to vector<8x8xf32>
    %108 = arith.subf %104, %107 : vector<8x8xf32>
    %109 = math.exp %108 : vector<8x8xf32>
    %cst_40 = arith.constant dense<0.000000e+00> : vector<8xf32>
    %110 = vector.multi_reduction <add>, %109, %cst_40 [1] : vector<8x8xf32> to vector<8xf32>
    %111 = vector.shape_cast %110 : vector<8xf32> to vector<8x1xf32>
    %112 = tpu.reciprocal %111 {approx = true} : vector<8x1xf32> -> vector<8x1xf32>
    %113 = vector.broadcast %112 : vector<8x1xf32> to vector<8x8xf32>
    %114 = arith.mulf %109, %113 : vector<8x8xf32>
    %115 = arith.truncf %114 : vector<8x8xf32> to vector<8x8xbf16>
    %cst_41 = arith.constant dense<0.000000e+00> : vector<8x8xf32>
    %116 = tpu.matmul %115, %97, %cst_41 {dimension_numbers = #tpu.dot_dimension_numbers<[1], [0], [0], [1], [0, 0, 1, 1], [], []>} : vector<8x8xbf16>, vector<8x8xbf16>, vector<8x8xf32> -> vector<8x8xf32>
    %117 = arith.truncf %116 : vector<8x8xf32> to vector<8x8xbf16>
    %118 = vector.extract_strided_slice %8 {offsets = [24, 0], sizes = [8, 32], strides = [1, 1]} : vector<32x32xbf16> to vector<8x32xbf16>
    %cst_42 = arith.constant dense<0.000000e+00> : vector<8x32xf32>
    %119 = tpu.matmul %117, %118, %cst_42 {dimension_numbers = #tpu.dot_dimension_numbers<[1], [0], [0], [1], [0, 0, 1, 1], [], []>} : vector<8x8xbf16>, vector<8x32xbf16>, vector<8x32xf32> -> vector<8x32xf32>
    %120 = arith.addf %94, %119 : vector<8x32xf32>
    %121 = arith.truncf %120 : vector<8x32xf32> to vector<8x32xbf16>
    %c0_43 = arith.constant 0 : index
    %c0_44 = arith.constant 0 : index
    %c0_45 = arith.constant 0 : index
    %122 = vector.load %arg8[%c0_43, %c0_44, %c0_45] : memref<1x8x32xbf16, #tpu.memory_space<vmem>>, vector<1x8x32xbf16>
    %123 = vector.shape_cast %122 : vector<1x8x32xbf16> to vector<8x32xbf16>
    %124 = vector.shape_cast %121 : vector<8x32xbf16> to vector<1x8x32xbf16>
    tpu.vector_store %arg8[%c0_43, %c0_44, %c0_45], %124 {strides = array<i32>} : memref<1x8x32xbf16, #tpu.memory_space<vmem>>, vector<1x8x32xbf16>,
    return
  }
  func.func @transform_0(%arg0: i32, %arg1: i32) -> (i32, i32, i32) {
    %c0_i32 = arith.constant 0 : i32
    %c0_i32_0 = arith.constant 0 : i32
    return %arg0, %arg1, %c0_i32 : i32, i32, i32
  }
  func.func @transform_1(%arg0: i32, %arg1: i32) -> (i32, i32, i32) {
    %c0_i32 = arith.constant 0 : i32
    %c0_i32_0 = arith.constant 0 : i32
    %c0_i32_1 = arith.constant 0 : i32
    return %arg0, %c0_i32, %c0_i32_0 : i32, i32, i32
  }
  func.func @transform_2(%arg0: i32, %arg1: i32) -> (i32, i32, i32) {
    %c0_i32 = arith.constant 0 : i32
    %c0_i32_0 = arith.constant 0 : i32
    %c0_i32_1 = arith.constant 0 : i32
    return %arg0, %c0_i32, %c0_i32_0 : i32, i32, i32
  }
  func.func @transform_3(%arg0: i32, %arg1: i32) -> (i32, i32) {
    %c0_i32 = arith.constant 0 : i32
    %c0_i32_0 = arith.constant 0 : i32
    %c0_i32_1 = arith.constant 0 : i32
    return %c0_i32, %c0_i32_0 : i32, i32
  }
  func.func @transform_4(%arg0: i32, %arg1: i32) -> (i32, i32) {
    %c0_i32 = arith.constant 0 : i32
    %c0_i32_0 = arith.constant 0 : i32
    %c0_i32_1 = arith.constant 0 : i32
    return %c0_i32, %c0_i32_0 : i32, i32
  }
  func.func @transform_5(%arg0: i32, %arg1: i32) -> (i32, i32, i32) {
    %c0_i32 = arith.constant 0 : i32
    %c0_i32_0 = arith.constant 0 : i32
    return %arg0, %arg1, %c0_i32 : i32, i32, i32
  }
  func.func @transform_6(%arg0: i32, %arg1: i32) -> (i32, i32, i32) {
    %c0_i32 = arith.constant 0 : i32
    %c0_i32_0 = arith.constant 0 : i32
    return %arg0, %arg1, %c0_i32 : i32, i32, i32
  }
}

module attributes {stable_mosaic.version = 11 : i64} {
  func.func @_ln_matmul_kernel(%arg0: i32, %arg1: i32, %arg2: memref<16x32xbf16, #tpu.memory_space<vmem>>, %arg3: memref<1x32xf32, #tpu.memory_space<vmem>>, %arg4: memref<1x32xf32, #tpu.memory_space<vmem>>, %arg5: memref<32x128xbf16, #tpu.memory_space<vmem>>, %arg6: memref<1x128xf32, #tpu.memory_space<vmem>>, %arg7: memref<16x128xf32, #tpu.memory_space<vmem>>, %arg8: memref<16x32xf32, #tpu.memory_space<vmem>>) attributes {dimension_semantics = [#tpu.dimension_semantics<parallel>, #tpu.dimension_semantics<arbitrary>], iteration_bounds = array<i64: 1, 1>, scalar_prefetch = 0 : i64, scratch_operands = 1 : i64, tpu.core_type = #tpu.core_type<tc>, window_params = [{transform_indices = @transform_0, window_bounds = array<i64: 16, 32>}, {pipeline_mode = #tpu.pipeline_mode<synchronous>, transform_indices = @transform_1, window_bounds = array<i64: 1, 32>}, {pipeline_mode = #tpu.pipeline_mode<synchronous>, transform_indices = @transform_2, window_bounds = array<i64: 1, 32>}, {transform_indices = @transform_3, window_bounds = array<i64: 32, 128>}, {transform_indices = @transform_4, window_bounds = array<i64: 1, 128>}, {transform_indices = @transform_5, window_bounds = array<i64: 16, 128>}]} {
    %c0_i32 = arith.constant 0 : i32
    %0 = arith.cmpi eq, %arg1, %c0_i32 : i32
    %1 = arith.extui %0 : i1 to i32
    %c0_i32_0 = arith.constant 0 : i32
    %2 = arith.cmpi ne, %1, %c0_i32_0 : i32
    scf.if %2 {
      %c0_8 = arith.constant 0 : index
      %c0_9 = arith.constant 0 : index
      %11 = vector.load %arg2[%c0_8, %c0_9] : memref<16x32xbf16, #tpu.memory_space<vmem>>, vector<16x32xbf16>
      %12 = arith.extf %11 : vector<16x32xbf16> to vector<16x32xf32>
      %c0_10 = arith.constant 0 : index
      %c0_11 = arith.constant 0 : index
      %13 = vector.load %arg3[%c0_10, %c0_11] : memref<1x32xf32, #tpu.memory_space<vmem>>, vector<1x32xf32>
      %c0_12 = arith.constant 0 : index
      %c0_13 = arith.constant 0 : index
      %14 = vector.load %arg4[%c0_12, %c0_13] : memref<1x32xf32, #tpu.memory_space<vmem>>, vector<1x32xf32>
      %cst_14 = arith.constant dense<0.000000e+00> : vector<16xf32>
      %15 = vector.multi_reduction <add>, %12, %cst_14 [1] : vector<16x32xf32> to vector<16xf32>
      %16 = vector.shape_cast %15 : vector<16xf32> to vector<16x1xf32>
      %cst_15 = arith.constant 3.200000e+01 : f32
      %17 = vector.broadcast %cst_15 : f32 to vector<16x1xf32>
      %18 = arith.divf %16, %17 : vector<16x1xf32>
      %19 = vector.broadcast %18 : vector<16x1xf32> to vector<16x32xf32>
      %20 = arith.subf %12, %19 : vector<16x32xf32>
      %21 = arith.mulf %20, %20 : vector<16x32xf32>
      %cst_16 = arith.constant dense<0.000000e+00> : vector<16xf32>
      %22 = vector.multi_reduction <add>, %21, %cst_16 [1] : vector<16x32xf32> to vector<16xf32>
      %23 = vector.shape_cast %22 : vector<16xf32> to vector<16x1xf32>
      %cst_17 = arith.constant 3.200000e+01 : f32
      %24 = vector.broadcast %cst_17 : f32 to vector<16x1xf32>
      %25 = arith.divf %23, %24 : vector<16x1xf32>
      %26 = vector.broadcast %18 : vector<16x1xf32> to vector<16x32xf32>
      %27 = arith.subf %12, %26 : vector<16x32xf32>
      %cst_18 = arith.constant 9.99999974E-6 : f32
      %28 = vector.broadcast %cst_18 : f32 to vector<16x1xf32>
      %29 = arith.addf %25, %28 : vector<16x1xf32>
      %30 = math.rsqrt %29 : vector<16x1xf32>
      %31 = vector.broadcast %30 : vector<16x1xf32> to vector<16x32xf32>
      %32 = arith.mulf %27, %31 : vector<16x32xf32>
      %33 = vector.broadcast %13 : vector<1x32xf32> to vector<16x32xf32>
      %34 = arith.mulf %32, %33 : vector<16x32xf32>
      %35 = vector.broadcast %14 : vector<1x32xf32> to vector<16x32xf32>
      %36 = arith.addf %34, %35 : vector<16x32xf32>
      %c0_19 = arith.constant 0 : index
      %c0_20 = arith.constant 0 : index
      %37 = vector.load %arg8[%c0_19, %c0_20] : memref<16x32xf32, #tpu.memory_space<vmem>>, vector<16x32xf32>
      tpu.vector_store %arg8[%c0_19, %c0_20], %36 {strides = array<i32>} : memref<16x32xf32, #tpu.memory_space<vmem>>, vector<16x32xf32>,
    } else {
    }
    %c0 = arith.constant 0 : index
    %c0_1 = arith.constant 0 : index
    %3 = vector.load %arg8[%c0, %c0_1] : memref<16x32xf32, #tpu.memory_space<vmem>>, vector<16x32xf32>
    %4 = arith.truncf %3 : vector<16x32xf32> to vector<16x32xbf16>
    %c0_2 = arith.constant 0 : index
    %c0_3 = arith.constant 0 : index
    %5 = vector.load %arg5[%c0_2, %c0_3] : memref<32x128xbf16, #tpu.memory_space<vmem>>, vector<32x128xbf16>
    %cst = arith.constant dense<0.000000e+00> : vector<16x128xf32>
    %6 = tpu.matmul %4, %5, %cst {dimension_numbers = #tpu.dot_dimension_numbers<[1], [0], [0], [1], [0, 0, 1, 1], [], []>} : vector<16x32xbf16>, vector<32x128xbf16>, vector<16x128xf32> -> vector<16x128xf32>
    %c0_4 = arith.constant 0 : index
    %c0_5 = arith.constant 0 : index
    %7 = vector.load %arg6[%c0_4, %c0_5] : memref<1x128xf32, #tpu.memory_space<vmem>>, vector<1x128xf32>
    %8 = vector.broadcast %7 : vector<1x128xf32> to vector<16x128xf32>
    %9 = arith.addf %6, %8 : vector<16x128xf32>
    %c0_6 = arith.constant 0 : index
    %c0_7 = arith.constant 0 : index
    %10 = vector.load %arg7[%c0_6, %c0_7] : memref<16x128xf32, #tpu.memory_space<vmem>>, vector<16x128xf32>
    tpu.vector_store %arg7[%c0_6, %c0_7], %9 {strides = array<i32>} : memref<16x128xf32, #tpu.memory_space<vmem>>, vector<16x128xf32>,
    return
  }
  func.func @transform_0(%arg0: i32, %arg1: i32) -> (i32, i32) {
    %c0_i32 = arith.constant 0 : i32
    %c0_i32_0 = arith.constant 0 : i32
    return %arg0, %c0_i32 : i32, i32
  }
  func.func @transform_1(%arg0: i32, %arg1: i32) -> (i32, i32) {
    %c0_i32 = arith.constant 0 : i32
    %c0_i32_0 = arith.constant 0 : i32
    %c0_i32_1 = arith.constant 0 : i32
    return %c0_i32, %c0_i32_0 : i32, i32
  }
  func.func @transform_2(%arg0: i32, %arg1: i32) -> (i32, i32) {
    %c0_i32 = arith.constant 0 : i32
    %c0_i32_0 = arith.constant 0 : i32
    %c0_i32_1 = arith.constant 0 : i32
    return %c0_i32, %c0_i32_0 : i32, i32
  }
  func.func @transform_3(%arg0: i32, %arg1: i32) -> (i32, i32) {
    %c0_i32 = arith.constant 0 : i32
    %c0_i32_0 = arith.constant 0 : i32
    return %c0_i32, %arg1 : i32, i32
  }
  func.func @transform_4(%arg0: i32, %arg1: i32) -> (i32, i32) {
    %c0_i32 = arith.constant 0 : i32
    %c0_i32_0 = arith.constant 0 : i32
    return %c0_i32, %arg1 : i32, i32
  }
  func.func @transform_5(%arg0: i32, %arg1: i32) -> (i32, i32) {
    %c0_i32 = arith.constant 0 : i32
    return %arg0, %arg1 : i32, i32
  }
}

</mosaic_0001>

<llo_original>
// kernel: transformer_forward.28
$region0: #{transformer_forward.28}
  #allocation0 [shape = 'u32[]', space=smem, size = 0x4, offset = 0x4, fixed_abs, tag = 'smem constant byte address 0x4 - core index']
  #allocation1 [shape = 'u32[144,128]{1,0:T(1,128)}', space=vmem, size = 0x12000, scoped, tag = 'internal scratch']
  %s0 = inlined_call_operand.vmem [shape: bf16[16,32], index: 0, kind: input, shape index: {}]
  %s1 = inlined_call_operand.vmem [shape: bf16[32,64], index: 1, kind: input, shape index: {}]
  %s2 = inlined_call_operand.vmem [shape: f32[1,64], index: 2, kind: input, shape index: {}]
  %s3 = inlined_call_operand.vmem [shape: bf16[16,64], index: 3, kind: output, shape index: {}]
  %s4 = sld [smem:[#allocation0]]
  $region22: #{transformer_forward.28} parent=0
    _
  %s6 = ssub.s32 1, %s4
  %s7 = scalar_select 0, %s6, %s4
  // Predicated region
  $region2: #{transformer_forward.28} parent=0 // pred_check
    _
  $region3: #{transformer_forward.28} parent=0 // pred_check_branch
    %9 = sbr.rel (0) target = $region5
  $region4: #{transformer_forward.28} parent=0 // pred_region
    _
  $region5: #{transformer_forward.28} parent=0 // pred_fallthru
    _
  // Predicated region
  $region6: #{transformer_forward.28} parent=0 // pred_check
    _
  $region7: #{transformer_forward.28} parent=0 // pred_check_branch
    %11 = sbr.rel (0) target = $region9
  $region8: #{transformer_forward.28} parent=0 // pred_region
    _
  $region9: #{transformer_forward.28} parent=0 // pred_fallthru
    _
  // Predicated region
  $region10: #{transformer_forward.28} parent=0 // pred_check
    _
  $region11: #{transformer_forward.28} parent=0 // pred_check_branch
    %13 = sbr.rel (0) target = $region13
  $region12: #{transformer_forward.28} parent=0 // pred_region
    _
  $region13: #{transformer_forward.28} parent=0 // pred_fallthru
    _
  %v15 = vld [vmem:[%s0] sm:$0xf]
  %v16 = vld [vmem:[%s0 + $0x4] sm:$0xf]
  %v17 = vld [vmem:[%s1] sm:$0xf]
  %v18 = vld [vmem:[%s1 + $0x4] sm:$0xf]
  %v19 = vld [vmem:[%s1 + $0x8] sm:$0xf]
  %v20 = vld [vmem:[%s1 + $0xc] sm:$0xf]
  %v21 = vld [vmem:[%s2] sm:$0x1]
  %v23 = vlaneseq
  %v24 = vshrl.u32 %v23, 7
  %v25 = vsub.s32 0, %v24
  %v26 = vrot.slane %v21, %v25
  %v30 = vunpack.c.l.b16 %v15
  %v31 = vunpack.c.l.b16 %v16
  %v32 = vpack.c.b16 %v31, %v30
  %v37 = vunpack.c.l.b16 %v17
  %v38 = vunpack.c.l.b16 %v18
  %v39 = vunpack.c.l.b16 %v19
  %v40 = vunpack.c.l.b16 %v20
  %v41 = vpack.c.b16 %v38, %v37
  %v42 = vpack.c.b16 %v40, %v39
  %vm45 = vcmask 261120
  %v47 = vsel %vm45, %v32, 0
  %49 = vmatprep.subr.bf16.mxu0 0
  %50 = vmatpush1.bf16.msra.mxu0 %v41
  %51 = vmatprep.subr.bf16.mxu0 0
  %52 = vmatpush1.bf16.msra.mxu0 %v42
  %53 = vmatprep.subr.bf16.mxu0 0
  %54 = vmatpush1.bf16.msra.mxu0 0
  %55 = vmatprep.subr.bf16.mxu0 0
  %56 = vmatpush1.bf16.msra.mxu0 0
  %57 = vmatprep.subr.bf16.mxu0 0
  %58 = vmatpush1.bf16.msra.mxu0 0
  %59 = vmatprep.subr.bf16.mxu0 0
  %60 = vmatpush1.bf16.msra.mxu0 0
  %61 = vmatprep.subr.bf16.mxu0 0
  %62 = vmatpush1.bf16.msra.mxu0 0
  %63 = vmatprep.subr.bf16.mxu0 0
  %64 = vmatpush1.bf16.msra.mxu0 0
  %65 = vmatprep.subr.bf16.mxu0 0
  %66 = vmatpush1.bf16.msra.mxu0 0
  %67 = vmatprep.subr.bf16.mxu0 0
  %68 = vmatpush1.bf16.msra.mxu0 0
  %69 = vmatprep.subr.bf16.mxu0 0
  %70 = vmatpush1.bf16.msra.mxu0 0
  %71 = vmatprep.subr.bf16.mxu0 0
  %72 = vmatpush1.bf16.msra.mxu0 0
  %73 = vmatprep.subr.bf16.mxu0 0
  %74 = vmatpush1.bf16.msra.mxu0 0
  %75 = vmatprep.subr.bf16.mxu0 0
  %76 = vmatpush1.bf16.msra.mxu0 0
  %77 = vmatprep.subr.bf16.mxu0 0
  %78 = vmatpush1.bf16.msra.mxu0 0
  %79 = vmatprep.subr.bf16.mxu0 0
  %80 = vmatpush1.bf16.msra.mxu0 0
  %81 = vmatprep.mubr.bf16.mxu0 0
  %82 = vmatmul.mubr.bf16.gmra.mrb[0].mxu0 %v47
  %v83 = vpop.f32.mrb[0].mxu0
  %v84 = vadd.f32 %v26, %v83
  %v85 = vpop.f32.mrb[0].mxu0
  %v86 = vpop.f32.mrb[0].mxu0
  %v87 = vadd.f32 %v26, %v86
  %v88 = vpop.f32.mrb[0].mxu0
  %89 = vdwg.mxu0
  %v90 = vpack.c.bf16 %v87, %v84
  %v92 = vunpack.c.l.b16 %v90
  %v93 = vunpack.c.h.b16 %v90
  %v94 = vpack.c.b16 %v92, %v92
  %v95 = vpack.c.b16 %v93, %v93
  %vm98 = vcmask 519168
  %99 = vst.msk [vmem:[%s3] sm:$0xf] %vm98, %v94
  %100 = vst.msk [vmem:[%s3 + $0x4] sm:$0xf] %vm98, %v95
  // Predicated region
  $region14: #{transformer_forward.28} parent=0 // pred_check
    _
  $region15: #{transformer_forward.28} parent=0 // pred_check_branch
    %102 = sbr.rel (0) target = $region17
  $region16: #{transformer_forward.28} parent=0 // pred_region
    _
  $region17: #{transformer_forward.28} parent=0 // pred_fallthru
    _
  // Predicated region
  $region18: #{transformer_forward.28} parent=0 // pred_check
    _
  $region19: #{transformer_forward.28} parent=0 // pred_check_branch
    %104 = sbr.rel (0) target = $region21
  $region20: #{transformer_forward.28} parent=0 // pred_region
    _
  $region21: #{transformer_forward.28} parent=0 // pred_fallthru
    _

// kernel: transformer_forward.19
$region0: #{transformer_forward.19}
  #allocation0 [shape = 'u32[]', space=smem, size = 0x4, offset = 0x4, fixed_abs, tag = 'smem constant byte address 0x4 - core index']
  #allocation1 [shape = 'u32[144,128]{1,0:T(1,128)}', space=vmem, size = 0x12000, scoped, tag = 'internal scratch']
  #allocation2 [shape = 'f32[16,32]{1,0:T(8,128)}', space=vmem, size = 0x2000, scoped, tag = 'scratch operand']
  %s0 = inlined_call_operand.vmem [shape: bf16[16,32], index: 0, kind: input, shape index: {}]
  %s1 = inlined_call_operand.vmem [shape: f32[1,32], index: 1, kind: input, shape index: {}]
  %s2 = inlined_call_operand.vmem [shape: f32[1,32], index: 2, kind: input, shape index: {}]
  %s3 = inlined_call_operand.vmem [shape: bf16[32,96], index: 3, kind: input, shape index: {}]
  %s4 = inlined_call_operand.vmem [shape: f32[1,96], index: 4, kind: input, shape index: {}]
  %s5 = inlined_call_operand.vmem [shape: bf16[16,96], index: 5, kind: output, shape index: {}]
  %s6 = sld [smem:[#allocation0]]
  $region34: #{transformer_forward.19} parent=0
    _
  %s8 = ssub.s32 1, %s6
  %s9 = scalar_select 0, %s8, %s6
  // Predicated region
  $region2: #{transformer_forward.19} parent=0 // pred_check
    _
  $region3: #{transformer_forward.19} parent=0 // pred_check_branch
    %11 = sbr.rel (0) target = $region5
  $region4: #{transformer_forward.19} parent=0 // pred_region
    _
  $region5: #{transformer_forward.19} parent=0 // pred_fallthru
    _
  // Predicated region
  $region6: #{transformer_forward.19} parent=0 // pred_check
    _
  $region7: #{transformer_forward.19} parent=0 // pred_check_branch
    %13 = sbr.rel (0) target = $region9
  $region8: #{transformer_forward.19} parent=0 // pred_region
    _
  $region9: #{transformer_forward.19} parent=0 // pred_fallthru
    _
  // Predicated region
  $region10: #{transformer_forward.19} parent=0 // pred_check
    _
  $region11: #{transformer_forward.19} parent=0 // pred_check_branch
    %15 = sbr.rel (0) target = $region13
  $region12: #{transformer_forward.19} parent=0 // pred_region
    _
  $region13: #{transformer_forward.19} parent=0 // pred_fallthru
    _
  // Predicated region
  $region14: #{transformer_forward.19} parent=0 // pred_check
    _
  $region15: #{transformer_forward.19} parent=0 // pred_check_branch
    %17 = sbr.rel (0) target = $region17
  $region16: #{transformer_forward.19} parent=0 // pred_region
    _
  $region17: #{transformer_forward.19} parent=0 // pred_fallthru
    _
  // Predicated region
  $region18: #{transformer_forward.19} parent=0 // pred_check
    _
  $region19: #{transformer_forward.19} parent=0 // pred_check_branch
    %19 = sbr.rel (0) target = $region21
  $region20: #{transformer_forward.19} parent=0 // pred_region
    _
  $region21: #{transformer_forward.19} parent=0 // pred_fallthru
    _
  %p21 = scmp.eq.s32.totalorder 0, 0
  // Predicated region
  $region22: #{transformer_forward.19} parent=0 // pred_check
    %p22 = pneg %p21
  $region23: #{transformer_forward.19} parent=0 // pred_check_branch
    %24 = sbr.rel (%p22) target = $region25
  $region24: #{transformer_forward.19} parent=0 // pred_region
    %v25 = vld [vmem:[%s0] sm:$0xf]
    %v26 = vld [vmem:[%s0 + $0x4] sm:$0xf]
    %v27 = vunpack.c.l.bf16 %v25
    %v28 = vunpack.c.l.bf16 %v26
    %v29 = vld [vmem:[%s1] sm:$0x1]
    %v30 = vld [vmem:[%s2] sm:$0x1]
    %vm31 = vcmask 261120
    %v32 = vsel %vm31, %v27, 0.0
    %33 = vadd.xlane.f32.xlu0 %v32
    %v34 = vpop.xlane.xlu0 %33
    %v35 = vsel %vm31, %v28, 0.0
    %36 = vadd.xlane.f32.xlu0 %v35
    %v37 = vpop.xlane.xlu0 %36
    %v38 = vrcp.pop 32.0
    %v39 = vmul.f32 %v34, %v38
    %v40 = vmul.f32 %v37, %v38
    %v41 = vsub.f32 %v27, %v39
    %v42 = vsub.f32 %v28, %v40
    %v43 = vmul.f32 %v41, %v41
    %v44 = vmul.f32 %v42, %v42
    %v45 = vsel %vm31, %v43, 0.0
    %46 = vadd.xlane.f32.xlu0 %v45
    %v47 = vpop.xlane.xlu0 %46
    %v48 = vsel %vm31, %v44, 0.0
    %49 = vadd.xlane.f32.xlu0 %v48
    %v50 = vpop.xlane.xlu0 %49
    %v51 = vmul.f32 %v47, %v38
    %v52 = vmul.f32 %v50, %v38
    %v53 = vadd.f32 %v51, 1e-05
    %v54 = vadd.f32 %v52, 1e-05
    %v55 = vrsqrt.pop %v53
    %v56 = vrsqrt.pop %v54
    %v57 = vmul.f32 %v41, %v55
    %v58 = vmul.f32 %v42, %v56
    %v60 = vlaneseq
    %v61 = vshrl.u32 %v60, 7
    %v62 = vsub.s32 0, %v61
    %v63 = vrot.slane %v29, %v62
    %v65 = vmul.f32 %v57, %v63
    %v66 = vmul.f32 %v58, %v63
    %v68 = vlaneseq
    %v69 = vshrl.u32 %v68, 7
    %v70 = vsub.s32 0, %v69
    %v71 = vrot.slane %v30, %v70
    %v73 = vadd.f32 %v65, %v71
    %v74 = vadd.f32 %v66, %v71
    %75 = vst.msk [vmem:[#allocation2] sm:$0xff] %vm31, %v73
    %76 = vst.msk [vmem:[#allocation2 + $0x8] sm:$0xff] %vm31, %v74
  $region25: #{transformer_forward.19} parent=0 // pred_fallthru
    _
  %v77 = vld [vmem:[#allocation2] sm:$0xff]
  %v78 = vld [vmem:[#allocation2 + $0x8] sm:$0xff]
  %v79 = vpack.c.bf16 %v78, %v77
  %v80 = vld [vmem:[%s3] sm:$0xf]
  %v81 = vld [vmem:[%s3 + $0x4] sm:$0xf]
  %v82 = vld [vmem:[%s3 + $0x8] sm:$0xf]
  %v83 = vld [vmem:[%s3 + $0xc] sm:$0xf]
  %v84 = vld [vmem:[%s4] sm:$0x1]
  %v86 = vlaneseq
  %v87 = vshrl.u32 %v86, 7
  %v88 = vsub.s32 0, %v87
  %v89 = vrot.slane %v84, %v88
  %v95 = vunpack.c.l.b16 %v80
  %v96 = vunpack.c.l.b16 %v81
  %v97 = vunpack.c.l.b16 %v82
  %v98 = vunpack.c.l.b16 %v83
  %v99 = vpack.c.b16 %v96, %v95
  %v100 = vpack.c.b16 %v98, %v97
  %vm103 = vcmask 261120
  %v105 = vsel %vm103, %v79, 0
  %107 = vmatprep.subr.bf16.mxu0 0
  %108 = vmatpush1.bf16.msra.mxu0 %v99
  %109 = vmatprep.subr.bf16.mxu0 0
  %110 = vmatpush1.bf16.msra.mxu0 %v100
  %111 = vmatprep.subr.bf16.mxu0 0
  %112 = vmatpush1.bf16.msra.mxu0 0
  %113 = vmatprep.subr.bf16.mxu0 0
  %114 = vmatpush1.bf16.msra.mxu0 0
  %115 = vmatprep.subr.bf16.mxu0 0
  %116 = vmatpush1.bf16.msra.mxu0 0
  %117 = vmatprep.subr.bf16.mxu0 0
  %118 = vmatpush1.bf16.msra.mxu0 0
  %119 = vmatprep.subr.bf16.mxu0 0
  %120 = vmatpush1.bf16.msra.mxu0 0
  %121 = vmatprep.subr.bf16.mxu0 0
  %122 = vmatpush1.bf16.msra.mxu0 0
  %123 = vmatprep.subr.bf16.mxu0 0
  %124 = vmatpush1.bf16.msra.mxu0 0
  %125 = vmatprep.subr.bf16.mxu0 0
  %126 = vmatpush1.bf16.msra.mxu0 0
  %127 = vmatprep.subr.bf16.mxu0 0
  %128 = vmatpush1.bf16.msra.mxu0 0
  %129 = vmatprep.subr.bf16.mxu0 0
  %130 = vmatpush1.bf16.msra.mxu0 0
  %131 = vmatprep.subr.bf16.mxu0 0
  %132 = vmatpush1.bf16.msra.mxu0 0
  %133 = vmatprep.subr.bf16.mxu0 0
  %134 = vmatpush1.bf16.msra.mxu0 0
  %135 = vmatprep.subr.bf16.mxu0 0
  %136 = vmatpush1.bf16.msra.mxu0 0
  %137 = vmatprep.subr.bf16.mxu0 0
  %138 = vmatpush1.bf16.msra.mxu0 0
  %139 = vmatprep.mubr.bf16.mxu0 0
  %140 = vmatmul.mubr.bf16.gmra.mrb[0].mxu0 %v105
  %v141 = vpop.f32.mrb[0].mxu0
  %v142 = vadd.f32 %v89, %v141
  %v143 = vpop.f32.mrb[0].mxu0
  %v144 = vpop.f32.mrb[0].mxu0
  %v145 = vadd.f32 %v89, %v144
  %v146 = vpop.f32.mrb[0].mxu0
  %147 = vdwg.mxu0
  %v148 = vpack.c.bf16 %v145, %v142
  %v150 = vunpack.c.l.b16 %v148
  %v151 = vunpack.c.h.b16 %v148
  %v152 = vpack.c.b16 %v150, %v150
  %v153 = vpack.c.b16 %v151, %v151
  %vm156 = vcmask 781312
  %157 = vst.msk [vmem:[%s5] sm:$0xf] %vm156, %v152
  %158 = vst.msk [vmem:[%s5 + $0x4] sm:$0xf] %vm156, %v153
  // Predicated region
  $region26: #{transformer_forward.19} parent=0 // pred_check
    _
  $region27: #{transformer_forward.19} parent=0 // pred_check_branch
    %160 = sbr.rel (0) target = $region29
  $region28: #{transformer_forward.19} parent=0 // pred_region
    _
  $region29: #{transformer_forward.19} parent=0 // pred_fallthru
    _
  // Predicated region
  $region30: #{transformer_forward.19} parent=0 // pred_check
    _
  $region31: #{transformer_forward.19} parent=0 // pred_check_branch
    %162 = sbr.rel (0) target = $region33
  $region32: #{transformer_forward.19} parent=0 // pred_region
    _
  $region33: #{transformer_forward.19} parent=0 // pred_fallthru
    _

// kernel: transformer_forward.20
$region0: #{transformer_forward.20}
  #allocation0 [shape = 'u32[]', space=smem, size = 0x4, offset = 0x4, fixed_abs, tag = 'smem constant byte address 0x4 - core index']
  #allocation1 [shape = 'u32[144,128]{1,0:T(1,128)}', space=vmem, size = 0x12000, scoped, tag = 'internal scratch']
  %s0 = inlined_call_operand.vmem [shape: bf16[2,8,96], index: 0, kind: input, shape index: {}]
  %s1 = inlined_call_operand.vmem [shape: f32[2,1,8], index: 1, kind: input, shape index: {}]
  %s2 = inlined_call_operand.vmem [shape: bf16[32,32], index: 2, kind: input, shape index: {}]
  %s3 = inlined_call_operand.vmem [shape: f32[1,32], index: 3, kind: input, shape index: {}]
  %s4 = inlined_call_operand.vmem [shape: bf16[2,8,32], index: 4, kind: input, shape index: {}]
  %s5 = inlined_call_operand.vmem [shape: bf16[2,8,32], index: 5, kind: output, shape index: {}]
  %s6 = sld [smem:[#allocation0]]
  $region53: #{transformer_forward.20} parent=0
    _
  %s8 = ssub.s32 1, %s6
  %s9 = scalar_select 0, %s8, %s6
  loop: start=0, step=1, limit=4
  $region2: #{transformer_forward.20} parent=0 // loop_pre_header
    _
  $region3: #{transformer_forward.20} parent=0 // loop_header
    %s11 = sphi 0, %s15
    %p12 = scmp.ge.s32.totalorder %s11, 4
    %s21 = sphi 0, %s23
    %s24 = sphi 0, %s21
    %s25 = sphi 0, %s24
    %s41 = sphi 0, %s25
    %s47 = sphi 0, %s49
    %s50 = sphi 0, %s47
    %s51 = sphi 0, %s50
    %s67 = sphi 0, %s51
    %s71 = sphi 0, %s71
    %s73 = sphi 0, %s71
    %s74 = sphi 0, %s73
    %s88 = sphi 0, %s74
    %s92 = sphi 0, %s92
    %s94 = sphi 0, %s92
    %s95 = sphi 0, %s94
    %s109 = sphi 0, %s95
    %s115 = sphi 0, %s117
    %s118 = sphi 0, %s115
    %s119 = sphi 0, %s118
    %s135 = sphi 0, %s119
    %s141 = sphi 0, %s143
    %s144 = sphi 0, %s141
    %s145 = sphi 0, %s144
    %s161 = sphi 0, %s145
  $region4: #{transformer_forward.20} parent=0 // loop_header_branch
    %14 = sbr.rel (%p12) target = $region8
  $region5: #{transformer_forward.20} parent=0 // loop_body
    %s16 = ssub.s32 %s11, 1
    %s17 = ssub.s32 %s11, 2
    %s18 = sadd.s32 %s11, 1
    %s19 = ssub.s32 %s11, %s18
    %p20 = scmp.eq.s32.totalorder %s19, 0
    %s22 = sadd.s32 %s21, 1
    %s23 = scalar_select %p20, %s21, %s22
    %p26 = pneg %p20
    %p27 = scmp.eq.s32.totalorder %s11, 1
    %p28 = por %p26, %p27
    %p29 = scmp.ne.s32.totalorder %s21, %s24
    %p30 = scmp.eq.s32.totalorder %s11, 0
    %p31 = por %p29, %p30
    %p32 = scmp.ne.s32.totalorder %s21, %s24
    %p33 = scmp.eq.s32.totalorder %s16, 1
    %p34 = por %p32, %p33
    %p35 = scmp.ne.s32.totalorder %s24, %s25
    %p36 = scmp.eq.s32.totalorder %s16, 0
    %p37 = por %p35, %p36
    %p38 = scmp.ne.s32.totalorder %s24, %s25
    %p39 = scmp.eq.s32.totalorder %s17, 1
    %p40 = por %p38, %p39
    %p42 = scmp.ne.s32.totalorder %s25, %s41
    %p43 = scmp.eq.s32.totalorder %s17, 0
    %p44 = por %p42, %p43
    %s45 = ssub.s32 %s11, %s18
    %p46 = scmp.eq.s32.totalorder %s45, 0
    %s48 = sadd.s32 %s47, 1
    %s49 = scalar_select %p46, %s47, %s48
    %p52 = pneg %p46
    %p53 = scmp.eq.s32.totalorder %s11, 1
    %p54 = por %p52, %p53
    %p55 = scmp.ne.s32.totalorder %s47, %s50
    %p56 = scmp.eq.s32.totalorder %s11, 0
    %p57 = por %p55, %p56
    %p58 = scmp.ne.s32.totalorder %s47, %s50
    %p59 = scmp.eq.s32.totalorder %s16, 1
    %p60 = por %p58, %p59
    %p61 = scmp.ne.s32.totalorder %s50, %s51
    %p62 = scmp.eq.s32.totalorder %s16, 0
    %p63 = por %p61, %p62
    %p64 = scmp.ne.s32.totalorder %s50, %s51
    %p65 = scmp.eq.s32.totalorder %s17, 1
    %p66 = por %p64, %p65
    %p68 = scmp.ne.s32.totalorder %s51, %s67
    %p69 = scmp.eq.s32.totalorder %s17, 0
    %p70 = por %p68, %p69
    %s72 = sadd.s32 %s71, 1
    %p75 = scmp.eq.s32.totalorder %s11, 1
    %p76 = scmp.ne.s32.totalorder %s71, %s73
    %p77 = scmp.eq.s32.totalorder %s11, 0
    %p78 = por %p76, %p77
    %p79 = scmp.ne.s32.totalorder %s71, %s73
    %p80 = scmp.eq.s32.totalorder %s16, 1
    %p81 = por %p79, %p80
    %p82 = scmp.ne.s32.totalorder %s73, %s74
    %p83 = scmp.eq.s32.totalorder %s16, 0
    %p84 = por %p82, %p83
    %p85 = scmp.ne.s32.totalorder %s73, %s74
    %p86 = scmp.eq.s32.totalorder %s17, 1
    %p87 = por %p85, %p86
    %p89 = scmp.ne.s32.totalorder %s74, %s88
    %p90 = scmp.eq.s32.totalorder %s17, 0
    %p91 = por %p89, %p90
    %s93 = sadd.s32 %s92, 1
    %p96 = scmp.eq.s32.totalorder %s11, 1
    %p97 = scmp.ne.s32.totalorder %s92, %s94
    %p98 = scmp.eq.s32.totalorder %s11, 0
    %p99 = por %p97, %p98
    %p100 = scmp.ne.s32.totalorder %s92, %s94
    %p101 = scmp.eq.s32.totalorder %s16, 1
    %p102 = por %p100, %p101
    %p103 = scmp.ne.s32.totalorder %s94, %s95
    %p104 = scmp.eq.s32.totalorder %s16, 0
    %p105 = por %p103, %p104
    %p106 = scmp.ne.s32.totalorder %s94, %s95
    %p107 = scmp.eq.s32.totalorder %s17, 1
    %p108 = por %p106, %p107
    %p110 = scmp.ne.s32.totalorder %s95, %s109
    %p111 = scmp.eq.s32.totalorder %s17, 0
    %p112 = por %p110, %p111
    %s113 = ssub.s32 %s11, %s18
    %p114 = scmp.eq.s32.totalorder %s113, 0
    %s116 = sadd.s32 %s115, 1
    %s117 = scalar_select %p114, %s115, %s116
    %p120 = pneg %p114
    %p121 = scmp.eq.s32.totalorder %s11, 1
    %p122 = por %p120, %p121
    %p123 = scmp.ne.s32.totalorder %s115, %s118
    %p124 = scmp.eq.s32.totalorder %s11, 0
    %p125 = por %p123, %p124
    %p126 = scmp.ne.s32.totalorder %s115, %s118
    %p127 = scmp.eq.s32.totalorder %s16, 1
    %p128 = por %p126, %p127
    %p129 = scmp.ne.s32.totalorder %s118, %s119
    %p130 = scmp.eq.s32.totalorder %s16, 0
    %p131 = por %p129, %p130
    %p132 = scmp.ne.s32.totalorder %s118, %s119
    %p133 = scmp.eq.s32.totalorder %s17, 1
    %p134 = por %p132, %p133
    %p136 = scmp.ne.s32.totalorder %s119, %s135
    %p137 = scmp.eq.s32.totalorder %s17, 0
    %p138 = por %p136, %p137
    %s139 = ssub.s32 %s11, %s18
    %p140 = scmp.eq.s32.totalorder %s139, 0
    %s142 = sadd.s32 %s141, 1
    %s143 = scalar_select %p140, %s141, %s142
    %p146 = pneg %p140
    %p147 = scmp.eq.s32.totalorder %s11, 1
    %p148 = por %p146, %p147
    %p149 = scmp.ne.s32.totalorder %s141, %s144
    %p150 = scmp.eq.s32.totalorder %s11, 0
    %p151 = por %p149, %p150
    %p152 = scmp.ne.s32.totalorder %s141, %s144
    %p153 = scmp.eq.s32.totalorder %s16, 1
    %p154 = por %p152, %p153
    %p155 = scmp.ne.s32.totalorder %s144, %s145
    %p156 = scmp.eq.s32.totalorder %s16, 0
    %p157 = por %p155, %p156
    %p158 = scmp.ne.s32.totalorder %s144, %s145
    %p159 = scmp.eq.s32.totalorder %s17, 1
    %p160 = por %p158, %p159
    %p162 = scmp.ne.s32.totalorder %s145, %s161
    %p163 = scmp.eq.s32.totalorder %s17, 0
    %p164 = por %p162, %p163
    %p165 = scmp.le.s32.totalorder 1, %s11
    %p166 = scmp.lt.s32.totalorder %s11, 3
    %p167 = pnand %p165, %p166
    %p168 = pneg %p167
    // Predicated region
    $region9: #{transformer_forward.20} parent=5 // pred_check
      _
    $region10: #{transformer_forward.20} parent=5 // pred_check_branch
      %170 = sbr.rel (%p167) target = $region12
    $region11: #{transformer_forward.20} parent=5 // pred_region
      %s171 = ssub.s32 %s11, 1
      // Predicated region
      $region13: #{transformer_forward.20} parent=11 // pred_check
        %p172 = pneg %p84
      $region14: #{transformer_forward.20} parent=11 // pred_check_branch
        %174 = sbr.rel (%p172) target = $region16
      $region15: #{transformer_forward.20} parent=11 // pred_region
        _
      $region16: #{transformer_forward.20} parent=11 // pred_fallthru
        _
      // Predicated region
      $region17: #{transformer_forward.20} parent=11 // pred_check
        %p175 = pneg %p105
      $region18: #{transformer_forward.20} parent=11 // pred_check_branch
        %177 = sbr.rel (%p175) target = $region20
      $region19: #{transformer_forward.20} parent=11 // pred_region
        _
      $region20: #{transformer_forward.20} parent=11 // pred_fallthru
        _
    $region12: #{transformer_forward.20} parent=5 // pred_fallthru
      _
    %p178 = scmp.lt.s32.totalorder %s11, 2
    // Predicated region
    $region21: #{transformer_forward.20} parent=5 // pred_check
      %p179 = pneg %p178
    $region22: #{transformer_forward.20} parent=5 // pred_check_branch
      %181 = sbr.rel (%p179) target = $region24
    $region23: #{transformer_forward.20} parent=5 // pred_region
      // Predicated region
      $region25: #{transformer_forward.20} parent=23 // pred_check
        %p182 = pneg %p31
      $region26: #{transformer_forward.20} parent=23 // pred_check_branch
        %184 = sbr.rel (%p182) target = $region28
      $region27: #{transformer_forward.20} parent=23 // pred_region
        %p185 = scmp.lt.s32.totalorder %s11, 1
        %s186 = scalar_select %p185, %s11, 1
        %s187 = smul.addr %s186, 4
        %s188 = scalar_lea.vmem %s0, %s187
      $region28: #{transformer_forward.20} parent=23 // pred_fallthru
        _
      // Predicated region
      $region29: #{transformer_forward.20} parent=23 // pred_check
        %p189 = pneg %p57
      $region30: #{transformer_forward.20} parent=23 // pred_check_branch
        %191 = sbr.rel (%p189) target = $region32
      $region31: #{transformer_forward.20} parent=23 // pred_region
        %p192 = scmp.lt.s32.totalorder %s11, 1
        %s193 = scalar_select %p192, %s11, 1
        %s194 = scalar_lea.vmem %s1, %s193
      $region32: #{transformer_forward.20} parent=23 // pred_fallthru
        _
      // Predicated region
      $region33: #{transformer_forward.20} parent=23 // pred_check
        %p195 = pneg %p125
      $region34: #{transformer_forward.20} parent=23 // pred_check_branch
        %197 = sbr.rel (%p195) target = $region36
      $region35: #{transformer_forward.20} parent=23 // pred_region
        %p198 = scmp.lt.s32.totalorder %s11, 1
        %s199 = scalar_select %p198, %s11, 1
        %s200 = smul.addr %s199, 4
        %s201 = scalar_lea.vmem %s4, %s200
      $region36: #{transformer_forward.20} parent=23 // pred_fallthru
        _
    $region24: #{transformer_forward.20} parent=5 // pred_fallthru
      _
    %p202 = scmp.le.s32.totalorder 1, %s11
    %p203 = scmp.lt.s32.totalorder %s11, 3
    %p204 = pnand %p202, %p203
    %p205 = pneg %p204
    // Predicated region
    $region37: #{transformer_forward.20} parent=5 // pred_check
      _
    $region38: #{transformer_forward.20} parent=5 // pred_check_branch
      %207 = sbr.rel (%p204) target = $region40
    $region39: #{transformer_forward.20} parent=5 // pred_region
      %s208 = ssub.s32 %s11, 1
      %p209 = scmp.lt.s32.totalorder %s16, 1
      %s210 = scalar_select %p209, %s16, 1
      %s211 = smul.addr %s210, 4
      %s212 = scalar_lea.vmem %s0, %s211
      %p213 = pneg %p37
      %p214 = pneg %p34
      %p215 = scmp.lt.s32.totalorder %s16, 1
      %s216 = scalar_select %p215, %s16, 1
      %s217 = scalar_lea.vmem %s1, %s216
      %p218 = pneg %p63
      %p219 = pneg %p60
      %p220 = pneg %p84
      %p221 = pneg %p81
      %p222 = pneg %p105
      %p223 = pneg %p102
      %p224 = scmp.lt.s32.totalorder %s16, 1
      %s225 = scalar_select %p224, %s16, 1
      %s226 = smul.addr %s225, 4
      %s227 = scalar_lea.vmem %s4, %s226
      %p228 = pneg %p131
      %p229 = pneg %p128
      %p230 = pneg %p157
      %p231 = pneg %p154
      %p232 = scmp.lt.s32.totalorder %s16, 1
      %s233 = scalar_select %p232, %s16, 1
      %s234 = smul.addr %s233, 4
      %s235 = scalar_lea.vmem %s5, %s234
      %p236 = scmp.lt.s32.totalorder %s16, 1
      %s237 = scalar_select %p236, %s16, 1
      %s238 = smul.addr %s237, 4
      %s239 = scalar_lea.vmem %s0, %s238
      %p240 = scmp.lt.s32.totalorder %s16, 1
      %s241 = scalar_select %p240, %s16, 1
      %s242 = scalar_lea.vmem %s1, %s241
      %p243 = scmp.lt.s32.totalorder %s16, 1
      %s244 = scalar_select %p243, %s16, 1
      %s245 = smul.addr %s244, 4
      %s246 = scalar_lea.vmem %s4, %s245
      %p247 = scmp.lt.s32.totalorder %s16, 1
      %s248 = scalar_select %p247, %s16, 1
      %s249 = smul.addr %s248, 4
      %s250 = scalar_lea.vmem %s5, %s249
      %v252 = vld [vmem:[%s239] sm:$0xf]
      %v253 = vld [vmem:[%s242] sm:$0x1]
      %v254 = vld [vmem:[%s2] sm:$0xf]
      %v255 = vld [vmem:[%s2 + $0x4] sm:$0xf]
      %v256 = vld [vmem:[%s2 + $0x8] sm:$0xf]
      %v257 = vld [vmem:[%s2 + $0xc] sm:$0xf]
      %v258 = vld [vmem:[%s3] sm:$0x1]
      %v259 = vld [vmem:[%s246] sm:$0xf]
      %vm260 = vcmp.gt.f32.partialorder %v253, 0.0
      %v261 = vunpack.c.l.bf16 %v259
      %v263 = vlaneseq
      %v264 = vshrl.u32 %v263, 7
      %v265 = vsub.s32 0, %v264
      %v266 = vrot.slane %v258, %v265
      %v268 = vadd.f32 %v261, %v266
      %v270 = vunpack.c.l.b16 %v252
      %v271 = vpack.c.b16 %v270, %v270
      %272 = vrot.lane.b32.xlu0 %v271, 96
      %v273 = vpop.permute.xlu0 %272
      %vm274 = vcmask 64512
      %v276 = vsel %vm274, %v252, 0
      %v279 = vsel %vm274, %v273, 0
      %281 = vmatprep.subr.bf16.mxu0 0
      %282 = vmatpush1.bf16.xpose.msra.mxu0 %v279
      %283 = vmatprep.subr.bf16.mxu0 0
      %284 = vmatpush1.bf16.xpose.msra.mxu0 0
      %285 = vmatprep.subr.bf16.mxu0 0
      %286 = vmatpush1.bf16.xpose.msra.mxu0 0
      %287 = vmatprep.subr.bf16.mxu0 0
      %288 = vmatpush1.bf16.xpose.msra.mxu0 0
      %289 = vmatprep.subr.bf16.mxu0 0
      %290 = vmatpush1.bf16.xpose.msra.mxu0 0
      %291 = vmatprep.subr.bf16.mxu0 0
      %292 = vmatpush1.bf16.xpose.msra.mxu0 0
      %293 = vmatprep.subr.bf16.mxu0 0
      %294 = vmatpush1.bf16.xpose.msra.mxu0 0
      %295 = vmatprep.subr.bf16.mxu0 0
      %296 = vmatpush1.bf16.xpose.msra.mxu0 0
      %297 = vmatprep.subr.bf16.mxu0 0
      %298 = vmatpush1.bf16.xpose.msra.mxu0 0
      %299 = vmatprep.subr.bf16.mxu0 0
      %300 = vmatpush1.bf16.xpose.msra.mxu0 0
      %301 = vmatprep.subr.bf16.mxu0 0
      %302 = vmatpush1.bf16.xpose.msra.mxu0 0
      %303 = vmatprep.subr.bf16.mxu0 0
      %304 = vmatpush1.bf16.xpose.msra.mxu0 0
      %305 = vmatprep.subr.bf16.mxu0 0
      %306 = vmatpush1.bf16.xpose.msra.mxu0 0
      %307 = vmatprep.subr.bf16.mxu0 0
      %308 = vmatpush1.bf16.xpose.msra.mxu0 0
      %309 = vmatprep.subr.bf16.mxu0 0
      %310 = vmatpush1.bf16.xpose.msra.mxu0 0
      %311 = vmatprep.subr.bf16.mxu0 0
      %312 = vmatpush1.bf16.xpose.msra.mxu0 0
      %313 = vmatprep.mubr.bf16.mxu0 0
      %314 = vmatmul.mubr.bf16.gmra.mrb[0].mxu0 %v276
      %v315 = vpop.f32.mrb[0].mxu0
      %v316 = vadd.f32 0.0, %v315
      %v317 = vpop.f32.mrb[0].mxu0
      %v318 = vpop.f32.mrb[0].mxu0
      %v319 = vpop.f32.mrb[0].mxu0
      %320 = vdwg.mxu0
      %v321 = vmul.f32 %v316, 0.35355338
      %v322 = vsel %vm260, 1, 0
      %v323 = vlaneseq
      %v324 = vshrl.u32 %v323, 7
      %v325 = vsub.s32 0, %v324
      %v326 = vrot.slane %v322, %v325
      %vm327 = vcmp.eq.s32.totalorder %v326, 1
      %v328 = vsel %vm327, %v321, -1e+09
      %v329 = vsel %vm274, %v328, -inf
      %330 = vmax.xlane.f32.xlu0 %v329
      %v331 = vpop.xlane.xlu0 %330
      %v332 = vsub.f32 %v328, %v331
      %v333 = vmul.f32 %v332, 1.442695
      %v334 = vpow.pop %v333
      %v335 = vsel %vm274, %v334, 0.0
      %336 = vadd.xlane.f32.xlu0 %v335
      %v337 = vpop.xlane.xlu0 %336
      %v338 = vrcp.pop %v337
      %v339 = vmul.f32 %v334, %v338
      %v340 = vpack.c.bf16 %v339, %v339
      %341 = vrot.lane.b32.xlu0 %v271, 64
      %v342 = vpop.permute.xlu0 %341
      %v344 = vsel %vm274, %v340, 0
      %vm346 = vcmask 1043456
      %v348 = vsel %vm346, %v342, 0
      %350 = vmatprep.subr.bf16.mxu0 0
      %351 = vmatpush1.bf16.msra.mxu0 %v348
      %352 = vmatprep.subr.bf16.mxu0 0
      %353 = vmatpush1.bf16.msra.mxu0 0
      %354 = vmatprep.subr.bf16.mxu0 0
      %355 = vmatpush1.bf16.msra.mxu0 0
      %356 = vmatprep.subr.bf16.mxu0 0
      %357 = vmatpush1.bf16.msra.mxu0 0
      %358 = vmatprep.subr.bf16.mxu0 0
      %359 = vmatpush1.bf16.msra.mxu0 0
      %360 = vmatprep.subr.bf16.mxu0 0
      %361 = vmatpush1.bf16.msra.mxu0 0
      %362 = vmatprep.subr.bf16.mxu0 0
      %363 = vmatpush1.bf16.msra.mxu0 0
      %364 = vmatprep.subr.bf16.mxu0 0
      %365 = vmatpush1.bf16.msra.mxu0 0
      %366 = vmatprep.subr.bf16.mxu0 0
      %367 = vmatpush1.bf16.msra.mxu0 0
      %368 = vmatprep.subr.bf16.mxu0 0
      %369 = vmatpush1.bf16.msra.mxu0 0
      %370 = vmatprep.subr.bf16.mxu0 0
      %371 = vmatpush1.bf16.msra.mxu0 0
      %372 = vmatprep.subr.bf16.mxu0 0
      %373 = vmatpush1.bf16.msra.mxu0 0
      %374 = vmatprep.subr.bf16.mxu0 0
      %375 = vmatpush1.bf16.msra.mxu0 0
      %376 = vmatprep.subr.bf16.mxu0 0
      %377 = vmatpush1.bf16.msra.mxu0 0
      %378 = vmatprep.subr.bf16.mxu0 0
      %379 = vmatpush1.bf16.msra.mxu0 0
      %380 = vmatprep.subr.bf16.mxu0 0
      %381 = vmatpush1.bf16.msra.mxu0 0
      %382 = vmatprep.mubr.bf16.mxu0 0
      %383 = vmatmul.mubr.bf16.gmra.mrb[0].mxu0 %v344
      %v384 = vpop.f32.mrb[0].mxu0
      %v385 = vadd.f32 0.0, %v384
      %v386 = vpop.f32.mrb[0].mxu0
      %v387 = vpop.f32.mrb[0].mxu0
      %v388 = vpop.f32.mrb[0].mxu0
      %389 = vdwg.mxu0
      %v390 = vpack.c.bf16 %v385, %v385
      %v392 = vsel %vm274, %v390, 0
      %v395 = vsel %vm346, %v254, 0
      %397 = vmatprep.subr.bf16.mxu0 0
      %398 = vmatpush1.bf16.msra.mxu0 %v395
      %399 = vmatprep.subr.bf16.mxu0 0
      %400 = vmatpush1.bf16.msra.mxu0 0
      %401 = vmatprep.subr.bf16.mxu0 0
      %402 = vmatpush1.bf16.msra.mxu0 0
      %403 = vmatprep.subr.bf16.mxu0 0
      %404 = vmatpush1.bf16.msra.mxu0 0
      %405 = vmatprep.subr.bf16.mxu0 0
      %406 = vmatpush1.bf16.msra.mxu0 0
      %407 = vmatprep.subr.bf16.mxu0 0
      %408 = vmatpush1.bf16.msra.mxu0 0
      %409 = vmatprep.subr.bf16.mxu0 0
      %410 = vmatpush1.bf16.msra.mxu0 0
      %411 = vmatprep.subr.bf16.mxu0 0
      %412 = vmatpush1.bf16.msra.mxu0 0
      %413 = vmatprep.subr.bf16.mxu0 0
      %414 = vmatpush1.bf16.msra.mxu0 0
      %415 = vmatprep.subr.bf16.mxu0 0
      %416 = vmatpush1.bf16.msra.mxu0 0
      %417 = vmatprep.subr.bf16.mxu0 0
      %418 = vmatpush1.bf16.msra.mxu0 0
      %419 = vmatprep.subr.bf16.mxu0 0
      %420 = vmatpush1.bf16.msra.mxu0 0
      %421 = vmatprep.subr.bf16.mxu0 0
      %422 = vmatpush1.bf16.msra.mxu0 0
      %423 = vmatprep.subr.bf16.mxu0 0
      %424 = vmatpush1.bf16.msra.mxu0 0
      %425 = vmatprep.subr.bf16.mxu0 0
      %426 = vmatpush1.bf16.msra.mxu0 0
      %427 = vmatprep.subr.bf16.mxu0 0
      %428 = vmatpush1.bf16.msra.mxu0 0
      %429 = vmatprep.mubr.bf16.mxu0 0
      %430 = vmatmul.mubr.bf16.gmra.mrb[0].mxu0 %v392
      %v431 = vpop.f32.mrb[0].mxu0
      %v432 = vadd.f32 0.0, %v431
      %v433 = vpop.f32.mrb[0].mxu0
      %v434 = vpop.f32.mrb[0].mxu0
      %v435 = vpop.f32.mrb[0].mxu0
      %436 = vdwg.mxu0
      %v437 = vadd.f32 %v268, %v432
      %438 = vrot.lane.b32.xlu0 %v271, 120
      %v439 = vpop.permute.xlu0 %438
      %440 = vrot.lane.b32.xlu0 %v271, 88
      %v441 = vpop.permute.xlu0 %440
      %v443 = vsel %vm274, %v439, 0
      %v446 = vsel %vm274, %v441, 0
      %448 = vmatprep.subr.bf16.mxu0 0
      %449 = vmatpush1.bf16.xpose.msra.mxu0 %v446
      %450 = vmatprep.subr.bf16.mxu0 0
      %451 = vmatpush1.bf16.xpose.msra.mxu0 0
      %452 = vmatprep.subr.bf16.mxu0 0
      %453 = vmatpush1.bf16.xpose.msra.mxu0 0
      %454 = vmatprep.subr.bf16.mxu0 0
      %455 = vmatpush1.bf16.xpose.msra.mxu0 0
      %456 = vmatprep.subr.bf16.mxu0 0
      %457 = vmatpush1.bf16.xpose.msra.mxu0 0
      %458 = vmatprep.subr.bf16.mxu0 0
      %459 = vmatpush1.bf16.xpose.msra.mxu0 0
      %460 = vmatprep.subr.bf16.mxu0 0
      %461 = vmatpush1.bf16.xpose.msra.mxu0 0
      %462 = vmatprep.subr.bf16.mxu0 0
      %463 = vmatpush1.bf16.xpose.msra.mxu0 0
      %464 = vmatprep.subr.bf16.mxu0 0
      %465 = vmatpush1.bf16.xpose.msra.mxu0 0
      %466 = vmatprep.subr.bf16.mxu0 0
      %467 = vmatpush1.bf16.xpose.msra.mxu0 0
      %468 = vmatprep.subr.bf16.mxu0 0
      %469 = vmatpush1.bf16.xpose.msra.mxu0 0
      %470 = vmatprep.subr.bf16.mxu0 0
      %471 = vmatpush1.bf16.xpose.msra.mxu0 0
      %472 = vmatprep.subr.bf16.mxu0 0
      %473 = vmatpush1.bf16.xpose.msra.mxu0 0
      %474 = vmatprep.subr.bf16.mxu0 0
      %475 = vmatpush1.bf16.xpose.msra.mxu0 0
      %476 = vmatprep.subr.bf16.mxu0 0
      %477 = vmatpush1.bf16.xpose.msra.mxu0 0
      %478 = vmatprep.subr.bf16.mxu0 0
      %479 = vmatpush1.bf16.xpose.msra.mxu0 0
      %480 = vmatprep.mubr.bf16.mxu0 0
      %481 = vmatmul.mubr.bf16.gmra.mrb[0].mxu0 %v443
      %v482 = vpop.f32.mrb[0].mxu0
      %v483 = vadd.f32 0.0, %v482
      %v484 = vpop.f32.mrb[0].mxu0
      %v485 = vpop.f32.mrb[0].mxu0
      %v486 = vpop.f32.mrb[0].mxu0
      %487 = vdwg.mxu0
      %v488 = vmul.f32 %v483, 0.35355338
      %v489 = vsel %vm327, %v488, -1e+09
      %v490 = vsel %vm274, %v489, -inf
      %491 = vmax.xlane.f32.xlu0 %v490
      %v492 = vpop.xlane.xlu0 %491
      %v493 = vsub.f32 %v489, %v492
      %v494 = vmul.f32 %v493, 1.442695
      %v495 = vpow.pop %v494
      %v496 = vsel %vm274, %v495, 0.0
      %497 = vadd.xlane.f32.xlu0 %v496
      %v498 = vpop.xlane.xlu0 %497
      %v499 = vrcp.pop %v498
      %v500 = vmul.f32 %v495, %v499
      %v501 = vpack.c.bf16 %v500, %v500
      %502 = vrot.lane.b32.xlu0 %v271, 56
      %v503 = vpop.permute.xlu0 %502
      %v505 = vsel %vm274, %v501, 0
      %v508 = vsel %vm346, %v503, 0
      %510 = vmatprep.subr.bf16.mxu0 0
      %511 = vmatpush1.bf16.msra.mxu0 %v508
      %512 = vmatprep.subr.bf16.mxu0 0
      %513 = vmatpush1.bf16.msra.mxu0 0
      %514 = vmatprep.subr.bf16.mxu0 0
      %515 = vmatpush1.bf16.msra.mxu0 0
      %516 = vmatprep.subr.bf16.mxu0 0
      %517 = vmatpush1.bf16.msra.mxu0 0
      %518 = vmatprep.subr.bf16.mxu0 0
      %519 = vmatpush1.bf16.msra.mxu0 0
      %520 = vmatprep.subr.bf16.mxu0 0
      %521 = vmatpush1.bf16.msra.mxu0 0
      %522 = vmatprep.subr.bf16.mxu0 0
      %523 = vmatpush1.bf16.msra.mxu0 0
      %524 = vmatprep.subr.bf16.mxu0 0
      %525 = vmatpush1.bf16.msra.mxu0 0
      %526 = vmatprep.subr.bf16.mxu0 0
      %527 = vmatpush1.bf16.msra.mxu0 0
      %528 = vmatprep.subr.bf16.mxu0 0
      %529 = vmatpush1.bf16.msra.mxu0 0
      %530 = vmatprep.subr.bf16.mxu0 0
      %531 = vmatpush1.bf16.msra.mxu0 0
      %532 = vmatprep.subr.bf16.mxu0 0
      %533 = vmatpush1.bf16.msra.mxu0 0
      %534 = vmatprep.subr.bf16.mxu0 0
      %535 = vmatpush1.bf16.msra.mxu0 0
      %536 = vmatprep.subr.bf16.mxu0 0
      %537 = vmatpush1.bf16.msra.mxu0 0
      %538 = vmatprep.subr.bf16.mxu0 0
      %539 = vmatpush1.bf16.msra.mxu0 0
      %540 = vmatprep.subr.bf16.mxu0 0
      %541 = vmatpush1.bf16.msra.mxu0 0
      %542 = vmatprep.mubr.bf16.mxu0 0
      %543 = vmatmul.mubr.bf16.gmra.mrb[0].mxu0 %v505
      %v544 = vpop.f32.mrb[0].mxu0
      %v545 = vadd.f32 0.0, %v544
      %v546 = vpop.f32.mrb[0].mxu0
      %v547 = vpop.f32.mrb[0].mxu0
      %v548 = vpop.f32.mrb[0].mxu0
      %549 = vdwg.mxu0
      %v550 = vpack.c.bf16 %v545, %v545
      %v552 = vsel %vm274, %v550, 0
      %v555 = vsel %vm346, %v255, 0
      %557 = vmatprep.subr.bf16.mxu0 0
      %558 = vmatpush1.bf16.msra.mxu0 %v555
      %559 = vmatprep.subr.bf16.mxu0 0
      %560 = vmatpush1.bf16.msra.mxu0 0
      %561 = vmatprep.subr.bf16.mxu0 0
      %562 = vmatpush1.bf16.msra.mxu0 0
      %563 = vmatprep.subr.bf16.mxu0 0
      %564 = vmatpush1.bf16.msra.mxu0 0
      %565 = vmatprep.subr.bf16.mxu0 0
      %566 = vmatpush1.bf16.msra.mxu0 0
      %567 = vmatprep.subr.bf16.mxu0 0
      %568 = vmatpush1.bf16.msra.mxu0 0
      %569 = vmatprep.subr.bf16.mxu0 0
      %570 = vmatpush1.bf16.msra.mxu0 0
      %571 = vmatprep.subr.bf16.mxu0 0
      %572 = vmatpush1.bf16.msra.mxu0 0
      %573 = vmatprep.subr.bf16.mxu0 0
      %574 = vmatpush1.bf16.msra.mxu0 0
      %575 = vmatprep.subr.bf16.mxu0 0
      %576 = vmatpush1.bf16.msra.mxu0 0
      %577 = vmatprep.subr.bf16.mxu0 0
      %578 = vmatpush1.bf16.msra.mxu0 0
      %579 = vmatprep.subr.bf16.mxu0 0
      %580 = vmatpush1.bf16.msra.mxu0 0
      %581 = vmatprep.subr.bf16.mxu0 0
      %582 = vmatpush1.bf16.msra.mxu0 0
      %583 = vmatprep.subr.bf16.mxu0 0
      %584 = vmatpush1.bf16.msra.mxu0 0
      %585 = vmatprep.subr.bf16.mxu0 0
      %586 = vmatpush1.bf16.msra.mxu0 0
      %587 = vmatprep.subr.bf16.mxu0 0
      %588 = vmatpush1.bf16.msra.mxu0 0
      %589 = vmatprep.mubr.bf16.mxu0 0
      %590 = vmatmul.mubr.bf16.gmra.mrb[0].mxu0 %v552
      %v591 = vpop.f32.mrb[0].mxu0
      %v592 = vadd.f32 0.0, %v591
      %v593 = vpop.f32.mrb[0].mxu0
      %v594 = vpop.f32.mrb[0].mxu0
      %v595 = vpop.f32.mrb[0].mxu0
      %596 = vdwg.mxu0
      %v597 = vadd.f32 %v437, %v592
      %598 = vrot.lane.b32.xlu0 %v271, 112
      %v599 = vpop.permute.xlu0 %598
      %600 = vrot.lane.b32.xlu0 %v271, 80
      %v601 = vpop.permute.xlu0 %600
      %v603 = vsel %vm274, %v599, 0
      %v606 = vsel %vm274, %v601, 0
      %608 = vmatprep.subr.bf16.mxu0 0
      %609 = vmatpush1.bf16.xpose.msra.mxu0 %v606
      %610 = vmatprep.subr.bf16.mxu0 0
      %611 = vmatpush1.bf16.xpose.msra.mxu0 0
      %612 = vmatprep.subr.bf16.mxu0 0
      %613 = vmatpush1.bf16.xpose.msra.mxu0 0
      %614 = vmatprep.subr.bf16.mxu0 0
      %615 = vmatpush1.bf16.xpose.msra.mxu0 0
      %616 = vmatprep.subr.bf16.mxu0 0
      %617 = vmatpush1.bf16.xpose.msra.mxu0 0
      %618 = vmatprep.subr.bf16.mxu0 0
      %619 = vmatpush1.bf16.xpose.msra.mxu0 0
      %620 = vmatprep.subr.bf16.mxu0 0
      %621 = vmatpush1.bf16.xpose.msra.mxu0 0
      %622 = vmatprep.subr.bf16.mxu0 0
      %623 = vmatpush1.bf16.xpose.msra.mxu0 0
      %624 = vmatprep.subr.bf16.mxu0 0
      %625 = vmatpush1.bf16.xpose.msra.mxu0 0
      %626 = vmatprep.subr.bf16.mxu0 0
      %627 = vmatpush1.bf16.xpose.msra.mxu0 0
      %628 = vmatprep.subr.bf16.mxu0 0
      %629 = vmatpush1.bf16.xpose.msra.mxu0 0
      %630 = vmatprep.subr.bf16.mxu0 0
      %631 = vmatpush1.bf16.xpose.msra.mxu0 0
      %632 = vmatprep.subr.bf16.mxu0 0
      %633 = vmatpush1.bf16.xpose.msra.mxu0 0
      %634 = vmatprep.subr.bf16.mxu0 0
      %635 = vmatpush1.bf16.xpose.msra.mxu0 0
      %636 = vmatprep.subr.bf16.mxu0 0
      %637 = vmatpush1.bf16.xpose.msra.mxu0 0
      %638 = vmatprep.subr.bf16.mxu0 0
      %639 = vmatpush1.bf16.xpose.msra.mxu0 0
      %640 = vmatprep.mubr.bf16.mxu0 0
      %641 = vmatmul.mubr.bf16.gmra.mrb[0].mxu0 %v603
      %v642 = vpop.f32.mrb[0].mxu0
      %v643 = vadd.f32 0.0, %v642
      %v644 = vpop.f32.mrb[0].mxu0
      %v645 = vpop.f32.mrb[0].mxu0
      %v646 = vpop.f32.mrb[0].mxu0
      %647 = vdwg.mxu0
      %v648 = vmul.f32 %v643, 0.35355338
      %v649 = vsel %vm327, %v648, -1e+09
      %v650 = vsel %vm274, %v649, -inf
      %651 = vmax.xlane.f32.xlu0 %v650
      %v652 = vpop.xlane.xlu0 %651
      %v653 = vsub.f32 %v649, %v652
      %v654 = vmul.f32 %v653, 1.442695
      %v655 = vpow.pop %v654
      %v656 = vsel %vm274, %v655, 0.0
      %657 = vadd.xlane.f32.xlu0 %v656
      %v658 = vpop.xlane.xlu0 %657
      %v659 = vrcp.pop %v658
      %v660 = vmul.f32 %v655, %v659
      %v661 = vpack.c.bf16 %v660, %v660
      %662 = vrot.lane.b32.xlu0 %v271, 48
      %v663 = vpop.permute.xlu0 %662
      %v665 = vsel %vm274, %v661, 0
      %v668 = vsel %vm346, %v663, 0
      %670 = vmatprep.subr.bf16.mxu0 0
      %671 = vmatpush1.bf16.msra.mxu0 %v668
      %672 = vmatprep.subr.bf16.mxu0 0
      %673 = vmatpush1.bf16.msra.mxu0 0
      %674 = vmatprep.subr.bf16.mxu0 0
      %675 = vmatpush1.bf16.msra.mxu0 0
      %676 = vmatprep.subr.bf16.mxu0 0
      %677 = vmatpush1.bf16.msra.mxu0 0
      %678 = vmatprep.subr.bf16.mxu0 0
      %679 = vmatpush1.bf16.msra.mxu0 0
      %680 = vmatprep.subr.bf16.mxu0 0
      %681 = vmatpush1.bf16.msra.mxu0 0
      %682 = vmatprep.subr.bf16.mxu0 0
      %683 = vmatpush1.bf16.msra.mxu0 0
      %684 = vmatprep.subr.bf16.mxu0 0
      %685 = vmatpush1.bf16.msra.mxu0 0
      %686 = vmatprep.subr.bf16.mxu0 0
      %687 = vmatpush1.bf16.msra.mxu0 0
      %688 = vmatprep.subr.bf16.mxu0 0
      %689 = vmatpush1.bf16.msra.mxu0 0
      %690 = vmatprep.subr.bf16.mxu0 0
      %691 = vmatpush1.bf16.msra.mxu0 0
      %692 = vmatprep.subr.bf16.mxu0 0
      %693 = vmatpush1.bf16.msra.mxu0 0
      %694 = vmatprep.subr.bf16.mxu0 0
      %695 = vmatpush1.bf16.msra.mxu0 0
      %696 = vmatprep.subr.bf16.mxu0 0
      %697 = vmatpush1.bf16.msra.mxu0 0
      %698 = vmatprep.subr.bf16.mxu0 0
      %699 = vmatpush1.bf16.msra.mxu0 0
      %700 = vmatprep.subr.bf16.mxu0 0
      %701 = vmatpush1.bf16.msra.mxu0 0
      %702 = vmatprep.mubr.bf16.mxu0 0
      %703 = vmatmul.mubr.bf16.gmra.mrb[0].mxu0 %v665
      %v704 = vpop.f32.mrb[0].mxu0
      %v705 = vadd.f32 0.0, %v704
      %v706 = vpop.f32.mrb[0].mxu0
      %v707 = vpop.f32.mrb[0].mxu0
      %v708 = vpop.f32.mrb[0].mxu0
      %709 = vdwg.mxu0
      %v710 = vpack.c.bf16 %v705, %v705
      %v712 = vsel %vm274, %v710, 0
      %v715 = vsel %vm346, %v256, 0
      %717 = vmatprep.subr.bf16.mxu0 0
      %718 = vmatpush1.bf16.msra.mxu0 %v715
      %719 = vmatprep.subr.bf16.mxu0 0
      %720 = vmatpush1.bf16.msra.mxu0 0
      %721 = vmatprep.subr.bf16.mxu0 0
      %722 = vmatpush1.bf16.msra.mxu0 0
      %723 = vmatprep.subr.bf16.mxu0 0
      %724 = vmatpush1.bf16.msra.mxu0 0
      %725 = vmatprep.subr.bf16.mxu0 0
      %726 = vmatpush1.bf16.msra.mxu0 0
      %727 = vmatprep.subr.bf16.mxu0 0
      %728 = vmatpush1.bf16.msra.mxu0 0
      %729 = vmatprep.subr.bf16.mxu0 0
      %730 = vmatpush1.bf16.msra.mxu0 0
      %731 = vmatprep.subr.bf16.mxu0 0
      %732 = vmatpush1.bf16.msra.mxu0 0
      %733 = vmatprep.subr.bf16.mxu0 0
      %734 = vmatpush1.bf16.msra.mxu0 0
      %735 = vmatprep.subr.bf16.mxu0 0
      %736 = vmatpush1.bf16.msra.mxu0 0
      %737 = vmatprep.subr.bf16.mxu0 0
      %738 = vmatpush1.bf16.msra.mxu0 0
      %739 = vmatprep.subr.bf16.mxu0 0
      %740 = vmatpush1.bf16.msra.mxu0 0
      %741 = vmatprep.subr.bf16.mxu0 0
      %742 = vmatpush1.bf16.msra.mxu0 0
      %743 = vmatprep.subr.bf16.mxu0 0
      %744 = vmatpush1.bf16.msra.mxu0 0
      %745 = vmatprep.subr.bf16.mxu0 0
      %746 = vmatpush1.bf16.msra.mxu0 0
      %747 = vmatprep.subr.bf16.mxu0 0
      %748 = vmatpush1.bf16.msra.mxu0 0
      %749 = vmatprep.mubr.bf16.mxu0 0
      %750 = vmatmul.mubr.bf16.gmra.mrb[0].mxu0 %v712
      %v751 = vpop.f32.mrb[0].mxu0
      %v752 = vadd.f32 0.0, %v751
      %v753 = vpop.f32.mrb[0].mxu0
      %v754 = vpop.f32.mrb[0].mxu0
      %v755 = vpop.f32.mrb[0].mxu0
      %756 = vdwg.mxu0
      %v757 = vadd.f32 %v597, %v752
      %758 = vrot.lane.b32.xlu0 %v271, 104
      %v759 = vpop.permute.xlu0 %758
      %760 = vrot.lane.b32.xlu0 %v271, 72
      %v761 = vpop.permute.xlu0 %760
      %v763 = vsel %vm274, %v759, 0
      %v766 = vsel %vm274, %v761, 0
      %768 = vmatprep.subr.bf16.mxu0 0
      %769 = vmatpush1.bf16.xpose.msra.mxu0 %v766
      %770 = vmatprep.subr.bf16.mxu0 0
      %771 = vmatpush1.bf16.xpose.msra.mxu0 0
      %772 = vmatprep.subr.bf16.mxu0 0
      %773 = vmatpush1.bf16.xpose.msra.mxu0 0
      %774 = vmatprep.subr.bf16.mxu0 0
      %775 = vmatpush1.bf16.xpose.msra.mxu0 0
      %776 = vmatprep.subr.bf16.mxu0 0
      %777 = vmatpush1.bf16.xpose.msra.mxu0 0
      %778 = vmatprep.subr.bf16.mxu0 0
      %779 = vmatpush1.bf16.xpose.msra.mxu0 0
      %780 = vmatprep.subr.bf16.mxu0 0
      %781 = vmatpush1.bf16.xpose.msra.mxu0 0
      %782 = vmatprep.subr.bf16.mxu0 0
      %783 = vmatpush1.bf16.xpose.msra.mxu0 0
      %784 = vmatprep.subr.bf16.mxu0 0
      %785 = vmatpush1.bf16.xpose.msra.mxu0 0
      %786 = vmatprep.subr.bf16.mxu0 0
      %787 = vmatpush1.bf16.xpose.msra.mxu0 0
      %788 = vmatprep.subr.bf16.mxu0 0
      %789 = vmatpush1.bf16.xpose.msra.mxu0 0
      %790 = vmatprep.subr.bf16.mxu0 0
      %791 = vmatpush1.bf16.xpose.msra.mxu0 0
      %792 = vmatprep.subr.bf16.mxu0 0
      %793 = vmatpush1.bf16.xpose.msra.mxu0 0
      %794 = vmatprep.subr.bf16.mxu0 0
      %795 = vmatpush1.bf16.xpose.msra.mxu0 0
      %796 = vmatprep.subr.bf16.mxu0 0
      %797 = vmatpush1.bf16.xpose.msra.mxu0 0
      %798 = vmatprep.subr.bf16.mxu0 0
      %799 = vmatpush1.bf16.xpose.msra.mxu0 0
      %800 = vmatprep.mubr.bf16.mxu0 0
      %801 = vmatmul.mubr.bf16.gmra.mrb[0].mxu0 %v763
      %v802 = vpop.f32.mrb[0].mxu0
      %v803 = vadd.f32 0.0, %v802
      %v804 = vpop.f32.mrb[0].mxu0
      %v805 = vpop.f32.mrb[0].mxu0
      %v806 = vpop.f32.mrb[0].mxu0
      %807 = vdwg.mxu0
      %v808 = vmul.f32 %v803, 0.35355338
      %v809 = vsel %vm327, %v808, -1e+09
      %v810 = vsel %vm274, %v809, -inf
      %811 = vmax.xlane.f32.xlu0 %v810
      %v812 = vpop.xlane.xlu0 %811
      %v813 = vsub.f32 %v809, %v812
      %v814 = vmul.f32 %v813, 1.442695
      %v815 = vpow.pop %v814
      %v816 = vsel %vm274, %v815, 0.0
      %817 = vadd.xlane.f32.xlu0 %v816
      %v818 = vpop.xlane.xlu0 %817
      %v819 = vrcp.pop %v818
      %v820 = vmul.f32 %v815, %v819
      %v821 = vpack.c.bf16 %v820, %v820
      %822 = vrot.lane.b32.xlu0 %v271, 40
      %v823 = vpop.permute.xlu0 %822
      %v825 = vsel %vm274, %v821, 0
      %v828 = vsel %vm346, %v823, 0
      %830 = vmatprep.subr.bf16.mxu0 0
      %831 = vmatpush1.bf16.msra.mxu0 %v828
      %832 = vmatprep.subr.bf16.mxu0 0
      %833 = vmatpush1.bf16.msra.mxu0 0
      %834 = vmatprep.subr.bf16.mxu0 0
      %835 = vmatpush1.bf16.msra.mxu0 0
      %836 = vmatprep.subr.bf16.mxu0 0
      %837 = vmatpush1.bf16.msra.mxu0 0
      %838 = vmatprep.subr.bf16.mxu0 0
      %839 = vmatpush1.bf16.msra.mxu0 0
      %840 = vmatprep.subr.bf16.mxu0 0
      %841 = vmatpush1.bf16.msra.mxu0 0
      %842 = vmatprep.subr.bf16.mxu0 0
      %843 = vmatpush1.bf16.msra.mxu0 0
      %844 = vmatprep.subr.bf16.mxu0 0
      %845 = vmatpush1.bf16.msra.mxu0 0
      %846 = vmatprep.subr.bf16.mxu0 0
      %847 = vmatpush1.bf16.msra.mxu0 0
      %848 = vmatprep.subr.bf16.mxu0 0
      %849 = vmatpush1.bf16.msra.mxu0 0
      %850 = vmatprep.subr.bf16.mxu0 0
      %851 = vmatpush1.bf16.msra.mxu0 0
      %852 = vmatprep.subr.bf16.mxu0 0
      %853 = vmatpush1.bf16.msra.mxu0 0
      %854 = vmatprep.subr.bf16.mxu0 0
      %855 = vmatpush1.bf16.msra.mxu0 0
      %856 = vmatprep.subr.bf16.mxu0 0
      %857 = vmatpush1.bf16.msra.mxu0 0
      %858 = vmatprep.subr.bf16.mxu0 0
      %859 = vmatpush1.bf16.msra.mxu0 0
      %860 = vmatprep.subr.bf16.mxu0 0
      %861 = vmatpush1.bf16.msra.mxu0 0
      %862 = vmatprep.mubr.bf16.mxu0 0
      %863 = vmatmul.mubr.bf16.gmra.mrb[0].mxu0 %v825
      %v864 = vpop.f32.mrb[0].mxu0
      %v865 = vadd.f32 0.0, %v864
      %v866 = vpop.f32.mrb[0].mxu0
      %v867 = vpop.f32.mrb[0].mxu0
      %v868 = vpop.f32.mrb[0].mxu0
      %869 = vdwg.mxu0
      %v870 = vpack.c.bf16 %v865, %v865
      %v872 = vsel %vm274, %v870, 0
      %v875 = vsel %vm346, %v257, 0
      %877 = vmatprep.subr.bf16.mxu0 0
      %878 = vmatpush1.bf16.msra.mxu0 %v875
      %879 = vmatprep.subr.bf16.mxu0 0
      %880 = vmatpush1.bf16.msra.mxu0 0
      %881 = vmatprep.subr.bf16.mxu0 0
      %882 = vmatpush1.bf16.msra.mxu0 0
      %883 = vmatprep.subr.bf16.mxu0 0
      %884 = vmatpush1.bf16.msra.mxu0 0
      %885 = vmatprep.subr.bf16.mxu0 0
      %886 = vmatpush1.bf16.msra.mxu0 0
      %887 = vmatprep.subr.bf16.mxu0 0
      %888 = vmatpush1.bf16.msra.mxu0 0
      %889 = vmatprep.subr.bf16.mxu0 0
      %890 = vmatpush1.bf16.msra.mxu0 0
      %891 = vmatprep.subr.bf16.mxu0 0
      %892 = vmatpush1.bf16.msra.mxu0 0
      %893 = vmatprep.subr.bf16.mxu0 0
      %894 = vmatpush1.bf16.msra.mxu0 0
      %895 = vmatprep.subr.bf16.mxu0 0
      %896 = vmatpush1.bf16.msra.mxu0 0
      %897 = vmatprep.subr.bf16.mxu0 0
      %898 = vmatpush1.bf16.msra.mxu0 0
      %899 = vmatprep.subr.bf16.mxu0 0
      %900 = vmatpush1.bf16.msra.mxu0 0
      %901 = vmatprep.subr.bf16.mxu0 0
      %902 = vmatpush1.bf16.msra.mxu0 0
      %903 = vmatprep.subr.bf16.mxu0 0
      %904 = vmatpush1.bf16.msra.mxu0 0
      %905 = vmatprep.subr.bf16.mxu0 0
      %906 = vmatpush1.bf16.msra.mxu0 0
      %907 = vmatprep.subr.bf16.mxu0 0
      %908 = vmatpush1.bf16.msra.mxu0 0
      %909 = vmatprep.mubr.bf16.mxu0 0
      %910 = vmatmul.mubr.bf16.gmra.mrb[0].mxu0 %v872
      %v911 = vpop.f32.mrb[0].mxu0
      %v912 = vadd.f32 0.0, %v911
      %v913 = vpop.f32.mrb[0].mxu0
      %v914 = vpop.f32.mrb[0].mxu0
      %v915 = vpop.f32.mrb[0].mxu0
      %916 = vdwg.mxu0
      %v917 = vadd.f32 %v757, %v912
      %v918 = vpack.c.bf16 %v917, %v917
      %vm919 = vcmask 257024
      %920 = vst.msk [vmem:[%s250] sm:$0xf] %vm919, %v918
      %p921 = scmp.lt.s32.totalorder %s16, 1
      %s922 = scalar_select %p921, %s16, 1
      %s923 = smul.addr %s922, 4
      %s924 = scalar_lea.vmem %s5, %s923
      // Predicated region
      $region41: #{transformer_forward.20} parent=39 // pred_check
        %p925 = pneg %p154
      $region42: #{transformer_forward.20} parent=39 // pred_check_branch
        %927 = sbr.rel (%p925) target = $region44
      $region43: #{transformer_forward.20} parent=39 // pred_region
        _
      $region44: #{transformer_forward.20} parent=39 // pred_fallthru
        _
    $region40: #{transformer_forward.20} parent=5 // pred_fallthru
      _
    %p928 = scmp.le.s32.totalorder 2, %s11
    // Predicated region
    $region45: #{transformer_forward.20} parent=5 // pred_check
      %p929 = pneg %p928
    $region46: #{transformer_forward.20} parent=5 // pred_check_branch
      %931 = sbr.rel (%p929) target = $region48
    $region47: #{transformer_forward.20} parent=5 // pred_region
      %s932 = ssub.s32 %s11, 2
      // Predicated region
      $region49: #{transformer_forward.20} parent=47 // pred_check
        %p933 = pneg %p160
      $region50: #{transformer_forward.20} parent=47 // pred_check_branch
        %935 = sbr.rel (%p933) target = $region52
      $region51: #{transformer_forward.20} parent=47 // pred_region
        %p936 = scmp.lt.s32.totalorder %s17, 1
        %s937 = scalar_select %p936, %s17, 1
        %s938 = smul.addr %s937, 4
        %s939 = scalar_lea.vmem %s5, %s938
      $region52: #{transformer_forward.20} parent=47 // pred_fallthru
        _
    $region48: #{transformer_forward.20} parent=5 // pred_fallthru
      _
  $region6: #{transformer_forward.20} parent=0 // loop_footer
    %s15 = sadd.s32 1, %s11
  $region7: #{transformer_forward.20} parent=0 // loop_footer_branch
    %10 = sbr.rel target = $region3
  $region8: #{transformer_forward.20} parent=0 // loop_exit
    _

// kernel: transformer_forward.21
$region0: #{transformer_forward.21}
  #allocation0 [shape = 'u32[]', space=smem, size = 0x4, offset = 0x4, fixed_abs, tag = 'smem constant byte address 0x4 - core index']
  #allocation1 [shape = 'u32[144,128]{1,0:T(1,128)}', space=vmem, size = 0x12000, scoped, tag = 'internal scratch']
  %s0 = inlined_call_operand.vmem [shape: bf16[16,32], index: 0, kind: input, shape index: {}]
  %s1 = inlined_call_operand.vmem [shape: f32[1,32], index: 1, kind: input, shape index: {}]
  %s2 = inlined_call_operand.vmem [shape: f32[1,32], index: 2, kind: input, shape index: {}]
  %s3 = inlined_call_operand.vmem [shape: bf16[32,64], index: 3, kind: input, shape index: {}]
  %s4 = inlined_call_operand.vmem [shape: f32[1,64], index: 4, kind: input, shape index: {}]
  %s5 = inlined_call_operand.vmem [shape: bf16[64,32], index: 5, kind: input, shape index: {}]
  %s6 = inlined_call_operand.vmem [shape: f32[1,32], index: 6, kind: input, shape index: {}]
  %s7 = inlined_call_operand.vmem [shape: bf16[16,32], index: 7, kind: output, shape index: {}]
  %s8 = sld [smem:[#allocation0]]
  $region38: #{transformer_forward.21} parent=0
    _
  %s10 = ssub.s32 1, %s8
  %s11 = scalar_select 0, %s10, %s8
  // Predicated region
  $region2: #{transformer_forward.21} parent=0 // pred_check
    _
  $region3: #{transformer_forward.21} parent=0 // pred_check_branch
    %13 = sbr.rel (0) target = $region5
  $region4: #{transformer_forward.21} parent=0 // pred_region
    _
  $region5: #{transformer_forward.21} parent=0 // pred_fallthru
    _
  // Predicated region
  $region6: #{transformer_forward.21} parent=0 // pred_check
    _
  $region7: #{transformer_forward.21} parent=0 // pred_check_branch
    %15 = sbr.rel (0) target = $region9
  $region8: #{transformer_forward.21} parent=0 // pred_region
    _
  $region9: #{transformer_forward.21} parent=0 // pred_fallthru
    _
  // Predicated region
  $region10: #{transformer_forward.21} parent=0 // pred_check
    _
  $region11: #{transformer_forward.21} parent=0 // pred_check_branch
    %17 = sbr.rel (0) target = $region13
  $region12: #{transformer_forward.21} parent=0 // pred_region
    _
  $region13: #{transformer_forward.21} parent=0 // pred_fallthru
    _
  // Predicated region
  $region14: #{transformer_forward.21} parent=0 // pred_check
    _
  $region15: #{transformer_forward.21} parent=0 // pred_check_branch
    %19 = sbr.rel (0) target = $region17
  $region16: #{transformer_forward.21} parent=0 // pred_region
    _
  $region17: #{transformer_forward.21} parent=0 // pred_fallthru
    _
  // Predicated region
  $region18: #{transformer_forward.21} parent=0 // pred_check
    _
  $region19: #{transformer_forward.21} parent=0 // pred_check_branch
    %21 = sbr.rel (0) target = $region21
  $region20: #{transformer_forward.21} parent=0 // pred_region
    _
  $region21: #{transformer_forward.21} parent=0 // pred_fallthru
    _
  // Predicated region
  $region22: #{transformer_forward.21} parent=0 // pred_check
    _
  $region23: #{transformer_forward.21} parent=0 // pred_check_branch
    %23 = sbr.rel (0) target = $region25
  $region24: #{transformer_forward.21} parent=0 // pred_region
    _
  $region25: #{transformer_forward.21} parent=0 // pred_fallthru
    _
  // Predicated region
  $region26: #{transformer_forward.21} parent=0 // pred_check
    _
  $region27: #{transformer_forward.21} parent=0 // pred_check_branch
    %25 = sbr.rel (0) target = $region29
  $region28: #{transformer_forward.21} parent=0 // pred_region
    _
  $region29: #{transformer_forward.21} parent=0 // pred_fallthru
    _
  %v27 = vld [vmem:[%s0] sm:$0xf]
  %v28 = vld [vmem:[%s0 + $0x4] sm:$0xf]
  %v29 = vunpack.c.l.bf16 %v27
  %v30 = vunpack.c.l.bf16 %v28
  %v31 = vld [vmem:[%s1] sm:$0x1]
  %v32 = vld [vmem:[%s2] sm:$0x1]
  %vm33 = vcmask 261120
  %v34 = vsel %vm33, %v29, 0.0
  %35 = vadd.xlane.f32.xlu0 %v34
  %v36 = vpop.xlane.xlu0 %35
  %v37 = vsel %vm33, %v30, 0.0
  %38 = vadd.xlane.f32.xlu0 %v37
  %v39 = vpop.xlane.xlu0 %38
  %v40 = vrcp.pop 32.0
  %v41 = vmul.f32 %v36, %v40
  %v42 = vmul.f32 %v39, %v40
  %v43 = vsub.f32 %v29, %v41
  %v44 = vsub.f32 %v30, %v42
  %v45 = vmul.f32 %v43, %v43
  %v46 = vmul.f32 %v44, %v44
  %v47 = vsel %vm33, %v45, 0.0
  %48 = vadd.xlane.f32.xlu0 %v47
  %v49 = vpop.xlane.xlu0 %48
  %v50 = vsel %vm33, %v46, 0.0
  %51 = vadd.xlane.f32.xlu0 %v50
  %v52 = vpop.xlane.xlu0 %51
  %v53 = vmul.f32 %v49, %v40
  %v54 = vmul.f32 %v52, %v40
  %v55 = vadd.f32 %v53, 1e-05
  %v56 = vadd.f32 %v54, 1e-05
  %v57 = vrsqrt.pop %v55
  %v58 = vrsqrt.pop %v56
  %v59 = vmul.f32 %v43, %v57
  %v60 = vmul.f32 %v44, %v58
  %v62 = vlaneseq
  %v63 = vshrl.u32 %v62, 7
  %v64 = vsub.s32 0, %v63
  %v65 = vrot.slane %v31, %v64
  %v67 = vmul.f32 %v59, %v65
  %v68 = vmul.f32 %v60, %v65
  %v70 = vlaneseq
  %v71 = vshrl.u32 %v70, 7
  %v72 = vsub.s32 0, %v71
  %v73 = vrot.slane %v32, %v72
  %v75 = vadd.f32 %v67, %v73
  %v76 = vadd.f32 %v68, %v73
  %v77 = vpack.c.bf16 %v76, %v75
  %v78 = vld [vmem:[%s3] sm:$0xf]
  %v79 = vld [vmem:[%s3 + $0x4] sm:$0xf]
  %v80 = vld [vmem:[%s3 + $0x8] sm:$0xf]
  %v81 = vld [vmem:[%s3 + $0xc] sm:$0xf]
  %v82 = vld [vmem:[%s4] sm:$0x1]
  %v84 = vlaneseq
  %v85 = vshrl.u32 %v84, 7
  %v86 = vsub.s32 0, %v85
  %v87 = vrot.slane %v82, %v86
  %v93 = vunpack.c.l.b16 %v78
  %v94 = vunpack.c.l.b16 %v79
  %v95 = vunpack.c.l.b16 %v80
  %v96 = vunpack.c.l.b16 %v81
  %v97 = vpack.c.b16 %v94, %v93
  %v98 = vpack.c.b16 %v96, %v95
  %v102 = vsel %vm33, %v77, 0
  %104 = vmatprep.subr.bf16.mxu0 0
  %105 = vmatpush1.bf16.msra.mxu0 %v97
  %106 = vmatprep.subr.bf16.mxu0 0
  %107 = vmatpush1.bf16.msra.mxu0 %v98
  %108 = vmatprep.subr.bf16.mxu0 0
  %109 = vmatpush1.bf16.msra.mxu0 0
  %110 = vmatprep.subr.bf16.mxu0 0
  %111 = vmatpush1.bf16.msra.mxu0 0
  %112 = vmatprep.subr.bf16.mxu0 0
  %113 = vmatpush1.bf16.msra.mxu0 0
  %114 = vmatprep.subr.bf16.mxu0 0
  %115 = vmatpush1.bf16.msra.mxu0 0
  %116 = vmatprep.subr.bf16.mxu0 0
  %117 = vmatpush1.bf16.msra.mxu0 0
  %118 = vmatprep.subr.bf16.mxu0 0
  %119 = vmatpush1.bf16.msra.mxu0 0
  %120 = vmatprep.subr.bf16.mxu0 0
  %121 = vmatpush1.bf16.msra.mxu0 0
  %122 = vmatprep.subr.bf16.mxu0 0
  %123 = vmatpush1.bf16.msra.mxu0 0
  %124 = vmatprep.subr.bf16.mxu0 0
  %125 = vmatpush1.bf16.msra.mxu0 0
  %126 = vmatprep.subr.bf16.mxu0 0
  %127 = vmatpush1.bf16.msra.mxu0 0
  %128 = vmatprep.subr.bf16.mxu0 0
  %129 = vmatpush1.bf16.msra.mxu0 0
  %130 = vmatprep.subr.bf16.mxu0 0
  %131 = vmatpush1.bf16.msra.mxu0 0
  %132 = vmatprep.subr.bf16.mxu0 0
  %133 = vmatpush1.bf16.msra.mxu0 0
  %134 = vmatprep.subr.bf16.mxu0 0
  %135 = vmatpush1.bf16.msra.mxu0 0
  %136 = vmatprep.mubr.bf16.mxu0 0
  %137 = vmatmul.mubr.bf16.gmra.mrb[0].mxu0 %v102
  %v138 = vpop.f32.mrb[0].mxu0
  %v139 = vadd.f32 %v87, %v138
  %v140 = vpop.f32.mrb[0].mxu0
  %v141 = vpop.f32.mrb[0].mxu0
  %v142 = vadd.f32 %v87, %v141
  %v143 = vpop.f32.mrb[0].mxu0
  %144 = vdwg.mxu0
  %v145 = vmax.f32 %v139, 0.0
  %v146 = vmax.f32 %v142, 0.0
  %v147 = vpack.c.bf16 %v146, %v145
  %v148 = vld [vmem:[%s5] sm:$0xf]
  %v149 = vld [vmem:[%s5 + $0x4] sm:$0xf]
  %v150 = vld [vmem:[%s5 + $0x8] sm:$0xf]
  %v151 = vld [vmem:[%s5 + $0xc] sm:$0xf]
  %v152 = vld [vmem:[%s5 + $0x10] sm:$0xf]
  %v153 = vld [vmem:[%s5 + $0x14] sm:$0xf]
  %v154 = vld [vmem:[%s5 + $0x18] sm:$0xf]
  %v155 = vld [vmem:[%s5 + $0x1c] sm:$0xf]
  %v156 = vld [vmem:[%s6] sm:$0x1]
  %v158 = vlaneseq
  %v159 = vshrl.u32 %v158, 7
  %v160 = vsub.s32 0, %v159
  %v161 = vrot.slane %v156, %v160
  %v171 = vunpack.c.l.b16 %v148
  %v172 = vunpack.c.l.b16 %v149
  %v173 = vunpack.c.l.b16 %v150
  %v174 = vunpack.c.l.b16 %v151
  %v175 = vunpack.c.l.b16 %v152
  %v176 = vunpack.c.l.b16 %v153
  %v177 = vunpack.c.l.b16 %v154
  %v178 = vunpack.c.l.b16 %v155
  %v179 = vpack.c.b16 %v172, %v171
  %v180 = vpack.c.b16 %v174, %v173
  %v181 = vpack.c.b16 %v176, %v175
  %v182 = vpack.c.b16 %v178, %v177
  %vm187 = vcmask 523264
  %v189 = vsel %vm187, %v147, 0
  %191 = vmatprep.subr.bf16.mxu0 0
  %192 = vmatpush1.bf16.msra.mxu0 %v179
  %193 = vmatprep.subr.bf16.mxu0 0
  %194 = vmatpush1.bf16.msra.mxu0 %v180
  %195 = vmatprep.subr.bf16.mxu0 0
  %196 = vmatpush1.bf16.msra.mxu0 %v181
  %197 = vmatprep.subr.bf16.mxu0 0
  %198 = vmatpush1.bf16.msra.mxu0 %v182
  %199 = vmatprep.subr.bf16.mxu0 0
  %200 = vmatpush1.bf16.msra.mxu0 0
  %201 = vmatprep.subr.bf16.mxu0 0
  %202 = vmatpush1.bf16.msra.mxu0 0
  %203 = vmatprep.subr.bf16.mxu0 0
  %204 = vmatpush1.bf16.msra.mxu0 0
  %205 = vmatprep.subr.bf16.mxu0 0
  %206 = vmatpush1.bf16.msra.mxu0 0
  %207 = vmatprep.subr.bf16.mxu0 0
  %208 = vmatpush1.bf16.msra.mxu0 0
  %209 = vmatprep.subr.bf16.mxu0 0
  %210 = vmatpush1.bf16.msra.mxu0 0
  %211 = vmatprep.subr.bf16.mxu0 0
  %212 = vmatpush1.bf16.msra.mxu0 0
  %213 = vmatprep.subr.bf16.mxu0 0
  %214 = vmatpush1.bf16.msra.mxu0 0
  %215 = vmatprep.subr.bf16.mxu0 0
  %216 = vmatpush1.bf16.msra.mxu0 0
  %217 = vmatprep.subr.bf16.mxu0 0
  %218 = vmatpush1.bf16.msra.mxu0 0
  %219 = vmatprep.subr.bf16.mxu0 0
  %220 = vmatpush1.bf16.msra.mxu0 0
  %221 = vmatprep.subr.bf16.mxu0 0
  %222 = vmatpush1.bf16.msra.mxu0 0
  %223 = vmatprep.mubr.bf16.mxu0 0
  %224 = vmatmul.mubr.bf16.gmra.mrb[0].mxu0 %v189
  %v225 = vpop.f32.mrb[0].mxu0
  %v226 = vadd.f32 %v161, %v225
  %v227 = vpop.f32.mrb[0].mxu0
  %v228 = vpop.f32.mrb[0].mxu0
  %v229 = vadd.f32 %v161, %v228
  %v230 = vpop.f32.mrb[0].mxu0
  %231 = vdwg.mxu0
  %v232 = vadd.f32 %v29, %v226
  %v233 = vadd.f32 %v30, %v229
  %v234 = vpack.c.bf16 %v233, %v232
  %v236 = vunpack.c.l.b16 %v234
  %v237 = vunpack.c.h.b16 %v234
  %v238 = vpack.c.b16 %v236, %v236
  %v239 = vpack.c.b16 %v237, %v237
  %vm242 = vcmask 257024
  %243 = vst.msk [vmem:[%s7] sm:$0xf] %vm242, %v238
  %244 = vst.msk [vmem:[%s7 + $0x4] sm:$0xf] %vm242, %v239
  // Predicated region
  $region30: #{transformer_forward.21} parent=0 // pred_check
    _
  $region31: #{transformer_forward.21} parent=0 // pred_check_branch
    %246 = sbr.rel (0) target = $region33
  $region32: #{transformer_forward.21} parent=0 // pred_region
    _
  $region33: #{transformer_forward.21} parent=0 // pred_fallthru
    _
  // Predicated region
  $region34: #{transformer_forward.21} parent=0 // pred_check
    _
  $region35: #{transformer_forward.21} parent=0 // pred_check_branch
    %248 = sbr.rel (0) target = $region37
  $region36: #{transformer_forward.21} parent=0 // pred_region
    _
  $region37: #{transformer_forward.21} parent=0 // pred_fallthru
    _

// kernel: transformer_forward.27
$region0: #{transformer_forward.27}
  #allocation0 [shape = 'u32[]', space=smem, size = 0x4, offset = 0x4, fixed_abs, tag = 'smem constant byte address 0x4 - core index']
  #allocation1 [shape = 'u32[144,128]{1,0:T(1,128)}', space=vmem, size = 0x12000, scoped, tag = 'internal scratch']
  #allocation2 [shape = 'f32[16,32]{1,0:T(8,128)}', space=vmem, size = 0x2000, scoped, tag = 'scratch operand']
  %s0 = inlined_call_operand.vmem [shape: bf16[16,32], index: 0, kind: input, shape index: {}]
  %s1 = inlined_call_operand.vmem [shape: f32[1,32], index: 1, kind: input, shape index: {}]
  %s2 = inlined_call_operand.vmem [shape: f32[1,32], index: 2, kind: input, shape index: {}]
  %s3 = inlined_call_operand.vmem [shape: bf16[32,32], index: 3, kind: input, shape index: {}]
  %s4 = inlined_call_operand.vmem [shape: f32[1,32], index: 4, kind: input, shape index: {}]
  %s5 = inlined_call_operand.vmem [shape: bf16[16,32], index: 5, kind: output, shape index: {}]
  %s6 = sld [smem:[#allocation0]]
  $region34: #{transformer_forward.27} parent=0
    _
  %s8 = ssub.s32 1, %s6
  %s9 = scalar_select 0, %s8, %s6
  // Predicated region
  $region2: #{transformer_forward.27} parent=0 // pred_check
    _
  $region3: #{transformer_forward.27} parent=0 // pred_check_branch
    %11 = sbr.rel (0) target = $region5
  $region4: #{transformer_forward.27} parent=0 // pred_region
    _
  $region5: #{transformer_forward.27} parent=0 // pred_fallthru
    _
  // Predicated region
  $region6: #{transformer_forward.27} parent=0 // pred_check
    _
  $region7: #{transformer_forward.27} parent=0 // pred_check_branch
    %13 = sbr.rel (0) target = $region9
  $region8: #{transformer_forward.27} parent=0 // pred_region
    _
  $region9: #{transformer_forward.27} parent=0 // pred_fallthru
    _
  // Predicated region
  $region10: #{transformer_forward.27} parent=0 // pred_check
    _
  $region11: #{transformer_forward.27} parent=0 // pred_check_branch
    %15 = sbr.rel (0) target = $region13
  $region12: #{transformer_forward.27} parent=0 // pred_region
    _
  $region13: #{transformer_forward.27} parent=0 // pred_fallthru
    _
  // Predicated region
  $region14: #{transformer_forward.27} parent=0 // pred_check
    _
  $region15: #{transformer_forward.27} parent=0 // pred_check_branch
    %17 = sbr.rel (0) target = $region17
  $region16: #{transformer_forward.27} parent=0 // pred_region
    _
  $region17: #{transformer_forward.27} parent=0 // pred_fallthru
    _
  // Predicated region
  $region18: #{transformer_forward.27} parent=0 // pred_check
    _
  $region19: #{transformer_forward.27} parent=0 // pred_check_branch
    %19 = sbr.rel (0) target = $region21
  $region20: #{transformer_forward.27} parent=0 // pred_region
    _
  $region21: #{transformer_forward.27} parent=0 // pred_fallthru
    _
  %p21 = scmp.eq.s32.totalorder 0, 0
  // Predicated region
  $region22: #{transformer_forward.27} parent=0 // pred_check
    %p22 = pneg %p21
  $region23: #{transformer_forward.27} parent=0 // pred_check_branch
    %24 = sbr.rel (%p22) target = $region25
  $region24: #{transformer_forward.27} parent=0 // pred_region
    %v25 = vld [vmem:[%s0] sm:$0xf]
    %v26 = vld [vmem:[%s0 + $0x4] sm:$0xf]
    %v27 = vunpack.c.l.bf16 %v25
    %v28 = vunpack.c.l.bf16 %v26
    %v29 = vld [vmem:[%s1] sm:$0x1]
    %v30 = vld [vmem:[%s2] sm:$0x1]
    %vm31 = vcmask 261120
    %v32 = vsel %vm31, %v27, 0.0
    %33 = vadd.xlane.f32.xlu0 %v32
    %v34 = vpop.xlane.xlu0 %33
    %v35 = vsel %vm31, %v28, 0.0
    %36 = vadd.xlane.f32.xlu0 %v35
    %v37 = vpop.xlane.xlu0 %36
    %v38 = vrcp.pop 32.0
    %v39 = vmul.f32 %v34, %v38
    %v40 = vmul.f32 %v37, %v38
    %v41 = vsub.f32 %v27, %v39
    %v42 = vsub.f32 %v28, %v40
    %v43 = vmul.f32 %v41, %v41
    %v44 = vmul.f32 %v42, %v42
    %v45 = vsel %vm31, %v43, 0.0
    %46 = vadd.xlane.f32.xlu0 %v45
    %v47 = vpop.xlane.xlu0 %46
    %v48 = vsel %vm31, %v44, 0.0
    %49 = vadd.xlane.f32.xlu0 %v48
    %v50 = vpop.xlane.xlu0 %49
    %v51 = vmul.f32 %v47, %v38
    %v52 = vmul.f32 %v50, %v38
    %v53 = vadd.f32 %v51, 1e-05
    %v54 = vadd.f32 %v52, 1e-05
    %v55 = vrsqrt.pop %v53
    %v56 = vrsqrt.pop %v54
    %v57 = vmul.f32 %v41, %v55
    %v58 = vmul.f32 %v42, %v56
    %v60 = vlaneseq
    %v61 = vshrl.u32 %v60, 7
    %v62 = vsub.s32 0, %v61
    %v63 = vrot.slane %v29, %v62
    %v65 = vmul.f32 %v57, %v63
    %v66 = vmul.f32 %v58, %v63
    %v68 = vlaneseq
    %v69 = vshrl.u32 %v68, 7
    %v70 = vsub.s32 0, %v69
    %v71 = vrot.slane %v30, %v70
    %v73 = vadd.f32 %v65, %v71
    %v74 = vadd.f32 %v66, %v71
    %75 = vst.msk [vmem:[#allocation2] sm:$0xff] %vm31, %v73
    %76 = vst.msk [vmem:[#allocation2 + $0x8] sm:$0xff] %vm31, %v74
  $region25: #{transformer_forward.27} parent=0 // pred_fallthru
    _
  %v77 = vld [vmem:[#allocation2] sm:$0xff]
  %v78 = vld [vmem:[#allocation2 + $0x8] sm:$0xff]
  %v79 = vpack.c.bf16 %v78, %v77
  %v80 = vld [vmem:[%s3] sm:$0xf]
  %v81 = vld [vmem:[%s3 + $0x4] sm:$0xf]
  %v82 = vld [vmem:[%s3 + $0x8] sm:$0xf]
  %v83 = vld [vmem:[%s3 + $0xc] sm:$0xf]
  %v84 = vld [vmem:[%s4] sm:$0x1]
  %v86 = vlaneseq
  %v87 = vshrl.u32 %v86, 7
  %v88 = vsub.s32 0, %v87
  %v89 = vrot.slane %v84, %v88
  %v95 = vunpack.c.l.b16 %v80
  %v96 = vunpack.c.l.b16 %v81
  %v97 = vunpack.c.l.b16 %v82
  %v98 = vunpack.c.l.b16 %v83
  %v99 = vpack.c.b16 %v96, %v95
  %v100 = vpack.c.b16 %v98, %v97
  %vm103 = vcmask 261120
  %v105 = vsel %vm103, %v79, 0
  %107 = vmatprep.subr.bf16.mxu0 0
  %108 = vmatpush1.bf16.msra.mxu0 %v99
  %109 = vmatprep.subr.bf16.mxu0 0
  %110 = vmatpush1.bf16.msra.mxu0 %v100
  %111 = vmatprep.subr.bf16.mxu0 0
  %112 = vmatpush1.bf16.msra.mxu0 0
  %113 = vmatprep.subr.bf16.mxu0 0
  %114 = vmatpush1.bf16.msra.mxu0 0
  %115 = vmatprep.subr.bf16.mxu0 0
  %116 = vmatpush1.bf16.msra.mxu0 0
  %117 = vmatprep.subr.bf16.mxu0 0
  %118 = vmatpush1.bf16.msra.mxu0 0
  %119 = vmatprep.subr.bf16.mxu0 0
  %120 = vmatpush1.bf16.msra.mxu0 0
  %121 = vmatprep.subr.bf16.mxu0 0
  %122 = vmatpush1.bf16.msra.mxu0 0
  %123 = vmatprep.subr.bf16.mxu0 0
  %124 = vmatpush1.bf16.msra.mxu0 0
  %125 = vmatprep.subr.bf16.mxu0 0
  %126 = vmatpush1.bf16.msra.mxu0 0
  %127 = vmatprep.subr.bf16.mxu0 0
  %128 = vmatpush1.bf16.msra.mxu0 0
  %129 = vmatprep.subr.bf16.mxu0 0
  %130 = vmatpush1.bf16.msra.mxu0 0
  %131 = vmatprep.subr.bf16.mxu0 0
  %132 = vmatpush1.bf16.msra.mxu0 0
  %133 = vmatprep.subr.bf16.mxu0 0
  %134 = vmatpush1.bf16.msra.mxu0 0
  %135 = vmatprep.subr.bf16.mxu0 0
  %136 = vmatpush1.bf16.msra.mxu0 0
  %137 = vmatprep.subr.bf16.mxu0 0
  %138 = vmatpush1.bf16.msra.mxu0 0
  %139 = vmatprep.mubr.bf16.mxu0 0
  %140 = vmatmul.mubr.bf16.gmra.mrb[0].mxu0 %v105
  %v141 = vpop.f32.mrb[0].mxu0
  %v142 = vadd.f32 %v89, %v141
  %v143 = vpop.f32.mrb[0].mxu0
  %v144 = vpop.f32.mrb[0].mxu0
  %v145 = vadd.f32 %v89, %v144
  %v146 = vpop.f32.mrb[0].mxu0
  %147 = vdwg.mxu0
  %v148 = vpack.c.bf16 %v145, %v142
  %v150 = vunpack.c.l.b16 %v148
  %v151 = vunpack.c.h.b16 %v148
  %v152 = vpack.c.b16 %v150, %v150
  %v153 = vpack.c.b16 %v151, %v151
  %vm156 = vcmask 257024
  %157 = vst.msk [vmem:[%s5] sm:$0xf] %vm156, %v152
  %158 = vst.msk [vmem:[%s5 + $0x4] sm:$0xf] %vm156, %v153
  // Predicated region
  $region26: #{transformer_forward.27} parent=0 // pred_check
    _
  $region27: #{transformer_forward.27} parent=0 // pred_check_branch
    %160 = sbr.rel (0) target = $region29
  $region28: #{transformer_forward.27} parent=0 // pred_region
    _
  $region29: #{transformer_forward.27} parent=0 // pred_fallthru
    _
  // Predicated region
  $region30: #{transformer_forward.27} parent=0 // pred_check
    _
  $region31: #{transformer_forward.27} parent=0 // pred_check_branch
    %162 = sbr.rel (0) target = $region33
  $region32: #{transformer_forward.27} parent=0 // pred_region
    _
  $region33: #{transformer_forward.27} parent=0 // pred_fallthru
    _

// kernel: transformer_forward.26
$region0: #{transformer_forward.26}
  #allocation0 [shape = 'u32[]', space=smem, size = 0x4, offset = 0x4, fixed_abs, tag = 'smem constant byte address 0x4 - core index']
  #allocation1 [shape = 'u32[144,128]{1,0:T(1,128)}', space=vmem, size = 0x12000, scoped, tag = 'internal scratch']
  %s0 = inlined_call_operand.vmem [shape: bf16[2,8,96], index: 0, kind: input, shape index: {}]
  %s1 = inlined_call_operand.vmem [shape: f32[2,1,8], index: 1, kind: input, shape index: {}]
  %s2 = inlined_call_operand.vmem [shape: bf16[32,32], index: 2, kind: input, shape index: {}]
  %s3 = inlined_call_operand.vmem [shape: f32[1,32], index: 3, kind: input, shape index: {}]
  %s4 = inlined_call_operand.vmem [shape: bf16[2,8,32], index: 4, kind: input, shape index: {}]
  %s5 = inlined_call_operand.vmem [shape: bf16[2,8,32], index: 5, kind: output, shape index: {}]
  %s6 = sld [smem:[#allocation0]]
  $region53: #{transformer_forward.26} parent=0
    _
  %s8 = ssub.s32 1, %s6
  %s9 = scalar_select 0, %s8, %s6
  loop: start=0, step=1, limit=4
  $region2: #{transformer_forward.26} parent=0 // loop_pre_header
    _
  $region3: #{transformer_forward.26} parent=0 // loop_header
    %s11 = sphi 0, %s15
    %p12 = scmp.ge.s32.totalorder %s11, 4
    %s21 = sphi 0, %s23
    %s24 = sphi 0, %s21
    %s25 = sphi 0, %s24
    %s41 = sphi 0, %s25
    %s47 = sphi 0, %s49
    %s50 = sphi 0, %s47
    %s51 = sphi 0, %s50
    %s67 = sphi 0, %s51
    %s71 = sphi 0, %s71
    %s73 = sphi 0, %s71
    %s74 = sphi 0, %s73
    %s88 = sphi 0, %s74
    %s92 = sphi 0, %s92
    %s94 = sphi 0, %s92
    %s95 = sphi 0, %s94
    %s109 = sphi 0, %s95
    %s115 = sphi 0, %s117
    %s118 = sphi 0, %s115
    %s119 = sphi 0, %s118
    %s135 = sphi 0, %s119
    %s141 = sphi 0, %s143
    %s144 = sphi 0, %s141
    %s145 = sphi 0, %s144
    %s161 = sphi 0, %s145
  $region4: #{transformer_forward.26} parent=0 // loop_header_branch
    %14 = sbr.rel (%p12) target = $region8
  $region5: #{transformer_forward.26} parent=0 // loop_body
    %s16 = ssub.s32 %s11, 1
    %s17 = ssub.s32 %s11, 2
    %s18 = sadd.s32 %s11, 1
    %s19 = ssub.s32 %s11, %s18
    %p20 = scmp.eq.s32.totalorder %s19, 0
    %s22 = sadd.s32 %s21, 1
    %s23 = scalar_select %p20, %s21, %s22
    %p26 = pneg %p20
    %p27 = scmp.eq.s32.totalorder %s11, 1
    %p28 = por %p26, %p27
    %p29 = scmp.ne.s32.totalorder %s21, %s24
    %p30 = scmp.eq.s32.totalorder %s11, 0
    %p31 = por %p29, %p30
    %p32 = scmp.ne.s32.totalorder %s21, %s24
    %p33 = scmp.eq.s32.totalorder %s16, 1
    %p34 = por %p32, %p33
    %p35 = scmp.ne.s32.totalorder %s24, %s25
    %p36 = scmp.eq.s32.totalorder %s16, 0
    %p37 = por %p35, %p36
    %p38 = scmp.ne.s32.totalorder %s24, %s25
    %p39 = scmp.eq.s32.totalorder %s17, 1
    %p40 = por %p38, %p39
    %p42 = scmp.ne.s32.totalorder %s25, %s41
    %p43 = scmp.eq.s32.totalorder %s17, 0
    %p44 = por %p42, %p43
    %s45 = ssub.s32 %s11, %s18
    %p46 = scmp.eq.s32.totalorder %s45, 0
    %s48 = sadd.s32 %s47, 1
    %s49 = scalar_select %p46, %s47, %s48
    %p52 = pneg %p46
    %p53 = scmp.eq.s32.totalorder %s11, 1
    %p54 = por %p52, %p53
    %p55 = scmp.ne.s32.totalorder %s47, %s50
    %p56 = scmp.eq.s32.totalorder %s11, 0
    %p57 = por %p55, %p56
    %p58 = scmp.ne.s32.totalorder %s47, %s50
    %p59 = scmp.eq.s32.totalorder %s16, 1
    %p60 = por %p58, %p59
    %p61 = scmp.ne.s32.totalorder %s50, %s51
    %p62 = scmp.eq.s32.totalorder %s16, 0
    %p63 = por %p61, %p62
    %p64 = scmp.ne.s32.totalorder %s50, %s51
    %p65 = scmp.eq.s32.totalorder %s17, 1
    %p66 = por %p64, %p65
    %p68 = scmp.ne.s32.totalorder %s51, %s67
    %p69 = scmp.eq.s32.totalorder %s17, 0
    %p70 = por %p68, %p69
    %s72 = sadd.s32 %s71, 1
    %p75 = scmp.eq.s32.totalorder %s11, 1
    %p76 = scmp.ne.s32.totalorder %s71, %s73
    %p77 = scmp.eq.s32.totalorder %s11, 0
    %p78 = por %p76, %p77
    %p79 = scmp.ne.s32.totalorder %s71, %s73
    %p80 = scmp.eq.s32.totalorder %s16, 1
    %p81 = por %p79, %p80
    %p82 = scmp.ne.s32.totalorder %s73, %s74
    %p83 = scmp.eq.s32.totalorder %s16, 0
    %p84 = por %p82, %p83
    %p85 = scmp.ne.s32.totalorder %s73, %s74
    %p86 = scmp.eq.s32.totalorder %s17, 1
    %p87 = por %p85, %p86
    %p89 = scmp.ne.s32.totalorder %s74, %s88
    %p90 = scmp.eq.s32.totalorder %s17, 0
    %p91 = por %p89, %p90
    %s93 = sadd.s32 %s92, 1
    %p96 = scmp.eq.s32.totalorder %s11, 1
    %p97 = scmp.ne.s32.totalorder %s92, %s94
    %p98 = scmp.eq.s32.totalorder %s11, 0
    %p99 = por %p97, %p98
    %p100 = scmp.ne.s32.totalorder %s92, %s94
    %p101 = scmp.eq.s32.totalorder %s16, 1
    %p102 = por %p100, %p101
    %p103 = scmp.ne.s32.totalorder %s94, %s95
    %p104 = scmp.eq.s32.totalorder %s16, 0
    %p105 = por %p103, %p104
    %p106 = scmp.ne.s32.totalorder %s94, %s95
    %p107 = scmp.eq.s32.totalorder %s17, 1
    %p108 = por %p106, %p107
    %p110 = scmp.ne.s32.totalorder %s95, %s109
    %p111 = scmp.eq.s32.totalorder %s17, 0
    %p112 = por %p110, %p111
    %s113 = ssub.s32 %s11, %s18
    %p114 = scmp.eq.s32.totalorder %s113, 0
    %s116 = sadd.s32 %s115, 1
    %s117 = scalar_select %p114, %s115, %s116
    %p120 = pneg %p114
    %p121 = scmp.eq.s32.totalorder %s11, 1
    %p122 = por %p120, %p121
    %p123 = scmp.ne.s32.totalorder %s115, %s118
    %p124 = scmp.eq.s32.totalorder %s11, 0
    %p125 = por %p123, %p124
    %p126 = scmp.ne.s32.totalorder %s115, %s118
    %p127 = scmp.eq.s32.totalorder %s16, 1
    %p128 = por %p126, %p127
    %p129 = scmp.ne.s32.totalorder %s118, %s119
    %p130 = scmp.eq.s32.totalorder %s16, 0
    %p131 = por %p129, %p130
    %p132 = scmp.ne.s32.totalorder %s118, %s119
    %p133 = scmp.eq.s32.totalorder %s17, 1
    %p134 = por %p132, %p133
    %p136 = scmp.ne.s32.totalorder %s119, %s135
    %p137 = scmp.eq.s32.totalorder %s17, 0
    %p138 = por %p136, %p137
    %s139 = ssub.s32 %s11, %s18
    %p140 = scmp.eq.s32.totalorder %s139, 0
    %s142 = sadd.s32 %s141, 1
    %s143 = scalar_select %p140, %s141, %s142
    %p146 = pneg %p140
    %p147 = scmp.eq.s32.totalorder %s11, 1
    %p148 = por %p146, %p147
    %p149 = scmp.ne.s32.totalorder %s141, %s144
    %p150 = scmp.eq.s32.totalorder %s11, 0
    %p151 = por %p149, %p150
    %p152 = scmp.ne.s32.totalorder %s141, %s144
    %p153 = scmp.eq.s32.totalorder %s16, 1
    %p154 = por %p152, %p153
    %p155 = scmp.ne.s32.totalorder %s144, %s145
    %p156 = scmp.eq.s32.totalorder %s16, 0
    %p157 = por %p155, %p156
    %p158 = scmp.ne.s32.totalorder %s144, %s145
    %p159 = scmp.eq.s32.totalorder %s17, 1
    %p160 = por %p158, %p159
    %p162 = scmp.ne.s32.totalorder %s145, %s161
    %p163 = scmp.eq.s32.totalorder %s17, 0
    %p164 = por %p162, %p163
    %p165 = scmp.le.s32.totalorder 1, %s11
    %p166 = scmp.lt.s32.totalorder %s11, 3
    %p167 = pnand %p165, %p166
    %p168 = pneg %p167
    // Predicated region
    $region9: #{transformer_forward.26} parent=5 // pred_check
      _
    $region10: #{transformer_forward.26} parent=5 // pred_check_branch
      %170 = sbr.rel (%p167) target = $region12
    $region11: #{transformer_forward.26} parent=5 // pred_region
      %s171 = ssub.s32 %s11, 1
      // Predicated region
      $region13: #{transformer_forward.26} parent=11 // pred_check
        %p172 = pneg %p84
      $region14: #{transformer_forward.26} parent=11 // pred_check_branch
        %174 = sbr.rel (%p172) target = $region16
      $region15: #{transformer_forward.26} parent=11 // pred_region
        _
      $region16: #{transformer_forward.26} parent=11 // pred_fallthru
        _
      // Predicated region
      $region17: #{transformer_forward.26} parent=11 // pred_check
        %p175 = pneg %p105
      $region18: #{transformer_forward.26} parent=11 // pred_check_branch
        %177 = sbr.rel (%p175) target = $region20
      $region19: #{transformer_forward.26} parent=11 // pred_region
        _
      $region20: #{transformer_forward.26} parent=11 // pred_fallthru
        _
    $region12: #{transformer_forward.26} parent=5 // pred_fallthru
      _
    %p178 = scmp.lt.s32.totalorder %s11, 2
    // Predicated region
    $region21: #{transformer_forward.26} parent=5 // pred_check
      %p179 = pneg %p178
    $region22: #{transformer_forward.26} parent=5 // pred_check_branch
      %181 = sbr.rel (%p179) target = $region24
    $region23: #{transformer_forward.26} parent=5 // pred_region
      // Predicated region
      $region25: #{transformer_forward.26} parent=23 // pred_check
        %p182 = pneg %p31
      $region26: #{transformer_forward.26} parent=23 // pred_check_branch
        %184 = sbr.rel (%p182) target = $region28
      $region27: #{transformer_forward.26} parent=23 // pred_region
        %p185 = scmp.lt.s32.totalorder %s11, 1
        %s186 = scalar_select %p185, %s11, 1
        %s187 = smul.addr %s186, 4
        %s188 = scalar_lea.vmem %s0, %s187
      $region28: #{transformer_forward.26} parent=23 // pred_fallthru
        _
      // Predicated region
      $region29: #{transformer_forward.26} parent=23 // pred_check
        %p189 = pneg %p57
      $region30: #{transformer_forward.26} parent=23 // pred_check_branch
        %191 = sbr.rel (%p189) target = $region32
      $region31: #{transformer_forward.26} parent=23 // pred_region
        %p192 = scmp.lt.s32.totalorder %s11, 1
        %s193 = scalar_select %p192, %s11, 1
        %s194 = scalar_lea.vmem %s1, %s193
      $region32: #{transformer_forward.26} parent=23 // pred_fallthru
        _
      // Predicated region
      $region33: #{transformer_forward.26} parent=23 // pred_check
        %p195 = pneg %p125
      $region34: #{transformer_forward.26} parent=23 // pred_check_branch
        %197 = sbr.rel (%p195) target = $region36
      $region35: #{transformer_forward.26} parent=23 // pred_region
        %p198 = scmp.lt.s32.totalorder %s11, 1
        %s199 = scalar_select %p198, %s11, 1
        %s200 = smul.addr %s199, 4
        %s201 = scalar_lea.vmem %s4, %s200
      $region36: #{transformer_forward.26} parent=23 // pred_fallthru
        _
    $region24: #{transformer_forward.26} parent=5 // pred_fallthru
      _
    %p202 = scmp.le.s32.totalorder 1, %s11
    %p203 = scmp.lt.s32.totalorder %s11, 3
    %p204 = pnand %p202, %p203
    %p205 = pneg %p204
    // Predicated region
    $region37: #{transformer_forward.26} parent=5 // pred_check
      _
    $region38: #{transformer_forward.26} parent=5 // pred_check_branch
      %207 = sbr.rel (%p204) target = $region40
    $region39: #{transformer_forward.26} parent=5 // pred_region
      %s208 = ssub.s32 %s11, 1
      %p209 = scmp.lt.s32.totalorder %s16, 1
      %s210 = scalar_select %p209, %s16, 1
      %s211 = smul.addr %s210, 4
      %s212 = scalar_lea.vmem %s0, %s211
      %p213 = pneg %p37
      %p214 = pneg %p34
      %p215 = scmp.lt.s32.totalorder %s16, 1
      %s216 = scalar_select %p215, %s16, 1
      %s217 = scalar_lea.vmem %s1, %s216
      %p218 = pneg %p63
      %p219 = pneg %p60
      %p220 = pneg %p84
      %p221 = pneg %p81
      %p222 = pneg %p105
      %p223 = pneg %p102
      %p224 = scmp.lt.s32.totalorder %s16, 1
      %s225 = scalar_select %p224, %s16, 1
      %s226 = smul.addr %s225, 4
      %s227 = scalar_lea.vmem %s4, %s226
      %p228 = pneg %p131
      %p229 = pneg %p128
      %p230 = pneg %p157
      %p231 = pneg %p154
      %p232 = scmp.lt.s32.totalorder %s16, 1
      %s233 = scalar_select %p232, %s16, 1
      %s234 = smul.addr %s233, 4
      %s235 = scalar_lea.vmem %s5, %s234
      %p236 = scmp.lt.s32.totalorder %s16, 1
      %s237 = scalar_select %p236, %s16, 1
      %s238 = smul.addr %s237, 4
      %s239 = scalar_lea.vmem %s0, %s238
      %p240 = scmp.lt.s32.totalorder %s16, 1
      %s241 = scalar_select %p240, %s16, 1
      %s242 = scalar_lea.vmem %s1, %s241
      %p243 = scmp.lt.s32.totalorder %s16, 1
      %s244 = scalar_select %p243, %s16, 1
      %s245 = smul.addr %s244, 4
      %s246 = scalar_lea.vmem %s4, %s245
      %p247 = scmp.lt.s32.totalorder %s16, 1
      %s248 = scalar_select %p247, %s16, 1
      %s249 = smul.addr %s248, 4
      %s250 = scalar_lea.vmem %s5, %s249
      %v252 = vld [vmem:[%s239] sm:$0xf]
      %v253 = vld [vmem:[%s242] sm:$0x1]
      %v254 = vld [vmem:[%s2] sm:$0xf]
      %v255 = vld [vmem:[%s2 + $0x4] sm:$0xf]
      %v256 = vld [vmem:[%s2 + $0x8] sm:$0xf]
      %v257 = vld [vmem:[%s2 + $0xc] sm:$0xf]
      %v258 = vld [vmem:[%s3] sm:$0x1]
      %v259 = vld [vmem:[%s246] sm:$0xf]
      %vm260 = vcmp.gt.f32.partialorder %v253, 0.0
      %v261 = vlaneseq
      %v262 = vshrl.u32 %v261, 7
      %v263 = vlaneseq
      %v264 = vand.u32 %v263, 127
      %vm265 = vcmp.le.s32.totalorder %v264, %v262
      %v266 = vsel %vm260, 1, 0
      %v267 = vlaneseq
      %v268 = vshrl.u32 %v267, 7
      %v269 = vsub.s32 0, %v268
      %v270 = vrot.slane %v266, %v269
      %vm271 = vcmp.eq.s32.totalorder %v270, 1
      %vm272 = vmand %vm271, %vm265
      %v273 = vunpack.c.l.bf16 %v259
      %v275 = vlaneseq
      %v276 = vshrl.u32 %v275, 7
      %v277 = vsub.s32 0, %v276
      %v278 = vrot.slane %v258, %v277
      %v280 = vadd.f32 %v273, %v278
      %v282 = vunpack.c.l.b16 %v252
      %v283 = vpack.c.b16 %v282, %v282
      %284 = vrot.lane.b32.xlu0 %v283, 96
      %v285 = vpop.permute.xlu0 %284
      %vm286 = vcmask 64512
      %v288 = vsel %vm286, %v252, 0
      %v291 = vsel %vm286, %v285, 0
      %293 = vmatprep.subr.bf16.mxu0 0
      %294 = vmatpush1.bf16.xpose.msra.mxu0 %v291
      %295 = vmatprep.subr.bf16.mxu0 0
      %296 = vmatpush1.bf16.xpose.msra.mxu0 0
      %297 = vmatprep.subr.bf16.mxu0 0
      %298 = vmatpush1.bf16.xpose.msra.mxu0 0
      %299 = vmatprep.subr.bf16.mxu0 0
      %300 = vmatpush1.bf16.xpose.msra.mxu0 0
      %301 = vmatprep.subr.bf16.mxu0 0
      %302 = vmatpush1.bf16.xpose.msra.mxu0 0
      %303 = vmatprep.subr.bf16.mxu0 0
      %304 = vmatpush1.bf16.xpose.msra.mxu0 0
      %305 = vmatprep.subr.bf16.mxu0 0
      %306 = vmatpush1.bf16.xpose.msra.mxu0 0
      %307 = vmatprep.subr.bf16.mxu0 0
      %308 = vmatpush1.bf16.xpose.msra.mxu0 0
      %309 = vmatprep.subr.bf16.mxu0 0
      %310 = vmatpush1.bf16.xpose.msra.mxu0 0
      %311 = vmatprep.subr.bf16.mxu0 0
      %312 = vmatpush1.bf16.xpose.msra.mxu0 0
      %313 = vmatprep.subr.bf16.mxu0 0
      %314 = vmatpush1.bf16.xpose.msra.mxu0 0
      %315 = vmatprep.subr.bf16.mxu0 0
      %316 = vmatpush1.bf16.xpose.msra.mxu0 0
      %317 = vmatprep.subr.bf16.mxu0 0
      %318 = vmatpush1.bf16.xpose.msra.mxu0 0
      %319 = vmatprep.subr.bf16.mxu0 0
      %320 = vmatpush1.bf16.xpose.msra.mxu0 0
      %321 = vmatprep.subr.bf16.mxu0 0
      %322 = vmatpush1.bf16.xpose.msra.mxu0 0
      %323 = vmatprep.subr.bf16.mxu0 0
      %324 = vmatpush1.bf16.xpose.msra.mxu0 0
      %325 = vmatprep.mubr.bf16.mxu0 0
      %326 = vmatmul.mubr.bf16.gmra.mrb[0].mxu0 %v288
      %v327 = vpop.f32.mrb[0].mxu0
      %v328 = vadd.f32 0.0, %v327
      %v329 = vpop.f32.mrb[0].mxu0
      %v330 = vpop.f32.mrb[0].mxu0
      %v331 = vpop.f32.mrb[0].mxu0
      %332 = vdwg.mxu0
      %v333 = vmul.f32 %v328, 0.35355338
      %v334 = vsel %vm272, %v333, -1e+09
      %v335 = vsel %vm286, %v334, -inf
      %336 = vmax.xlane.f32.xlu0 %v335
      %v337 = vpop.xlane.xlu0 %336
      %v338 = vsub.f32 %v334, %v337
      %v339 = vmul.f32 %v338, 1.442695
      %v340 = vpow.pop %v339
      %v341 = vsel %vm286, %v340, 0.0
      %342 = vadd.xlane.f32.xlu0 %v341
      %v343 = vpop.xlane.xlu0 %342
      %v344 = vrcp.pop %v343
      %v345 = vmul.f32 %v340, %v344
      %v346 = vpack.c.bf16 %v345, %v345
      %347 = vrot.lane.b32.xlu0 %v283, 64
      %v348 = vpop.permute.xlu0 %347
      %v350 = vsel %vm286, %v346, 0
      %vm352 = vcmask 1043456
      %v354 = vsel %vm352, %v348, 0
      %356 = vmatprep.subr.bf16.mxu0 0
      %357 = vmatpush1.bf16.msra.mxu0 %v354
      %358 = vmatprep.subr.bf16.mxu0 0
      %359 = vmatpush1.bf16.msra.mxu0 0
      %360 = vmatprep.subr.bf16.mxu0 0
      %361 = vmatpush1.bf16.msra.mxu0 0
      %362 = vmatprep.subr.bf16.mxu0 0
      %363 = vmatpush1.bf16.msra.mxu0 0
      %364 = vmatprep.subr.bf16.mxu0 0
      %365 = vmatpush1.bf16.msra.mxu0 0
      %366 = vmatprep.subr.bf16.mxu0 0
      %367 = vmatpush1.bf16.msra.mxu0 0
      %368 = vmatprep.subr.bf16.mxu0 0
      %369 = vmatpush1.bf16.msra.mxu0 0
      %370 = vmatprep.subr.bf16.mxu0 0
      %371 = vmatpush1.bf16.msra.mxu0 0
      %372 = vmatprep.subr.bf16.mxu0 0
      %373 = vmatpush1.bf16.msra.mxu0 0
      %374 = vmatprep.subr.bf16.mxu0 0
      %375 = vmatpush1.bf16.msra.mxu0 0
      %376 = vmatprep.subr.bf16.mxu0 0
      %377 = vmatpush1.bf16.msra.mxu0 0
      %378 = vmatprep.subr.bf16.mxu0 0
      %379 = vmatpush1.bf16.msra.mxu0 0
      %380 = vmatprep.subr.bf16.mxu0 0
      %381 = vmatpush1.bf16.msra.mxu0 0
      %382 = vmatprep.subr.bf16.mxu0 0
      %383 = vmatpush1.bf16.msra.mxu0 0
      %384 = vmatprep.subr.bf16.mxu0 0
      %385 = vmatpush1.bf16.msra.mxu0 0
      %386 = vmatprep.subr.bf16.mxu0 0
      %387 = vmatpush1.bf16.msra.mxu0 0
      %388 = vmatprep.mubr.bf16.mxu0 0
      %389 = vmatmul.mubr.bf16.gmra.mrb[0].mxu0 %v350
      %v390 = vpop.f32.mrb[0].mxu0
      %v391 = vadd.f32 0.0, %v390
      %v392 = vpop.f32.mrb[0].mxu0
      %v393 = vpop.f32.mrb[0].mxu0
      %v394 = vpop.f32.mrb[0].mxu0
      %395 = vdwg.mxu0
      %v396 = vpack.c.bf16 %v391, %v391
      %v398 = vsel %vm286, %v396, 0
      %v401 = vsel %vm352, %v254, 0
      %403 = vmatprep.subr.bf16.mxu0 0
      %404 = vmatpush1.bf16.msra.mxu0 %v401
      %405 = vmatprep.subr.bf16.mxu0 0
      %406 = vmatpush1.bf16.msra.mxu0 0
      %407 = vmatprep.subr.bf16.mxu0 0
      %408 = vmatpush1.bf16.msra.mxu0 0
      %409 = vmatprep.subr.bf16.mxu0 0
      %410 = vmatpush1.bf16.msra.mxu0 0
      %411 = vmatprep.subr.bf16.mxu0 0
      %412 = vmatpush1.bf16.msra.mxu0 0
      %413 = vmatprep.subr.bf16.mxu0 0
      %414 = vmatpush1.bf16.msra.mxu0 0
      %415 = vmatprep.subr.bf16.mxu0 0
      %416 = vmatpush1.bf16.msra.mxu0 0
      %417 = vmatprep.subr.bf16.mxu0 0
      %418 = vmatpush1.bf16.msra.mxu0 0
      %419 = vmatprep.subr.bf16.mxu0 0
      %420 = vmatpush1.bf16.msra.mxu0 0
      %421 = vmatprep.subr.bf16.mxu0 0
      %422 = vmatpush1.bf16.msra.mxu0 0
      %423 = vmatprep.subr.bf16.mxu0 0
      %424 = vmatpush1.bf16.msra.mxu0 0
      %425 = vmatprep.subr.bf16.mxu0 0
      %426 = vmatpush1.bf16.msra.mxu0 0
      %427 = vmatprep.subr.bf16.mxu0 0
      %428 = vmatpush1.bf16.msra.mxu0 0
      %429 = vmatprep.subr.bf16.mxu0 0
      %430 = vmatpush1.bf16.msra.mxu0 0
      %431 = vmatprep.subr.bf16.mxu0 0
      %432 = vmatpush1.bf16.msra.mxu0 0
      %433 = vmatprep.subr.bf16.mxu0 0
      %434 = vmatpush1.bf16.msra.mxu0 0
      %435 = vmatprep.mubr.bf16.mxu0 0
      %436 = vmatmul.mubr.bf16.gmra.mrb[0].mxu0 %v398
      %v437 = vpop.f32.mrb[0].mxu0
      %v438 = vadd.f32 0.0, %v437
      %v439 = vpop.f32.mrb[0].mxu0
      %v440 = vpop.f32.mrb[0].mxu0
      %v441 = vpop.f32.mrb[0].mxu0
      %442 = vdwg.mxu0
      %v443 = vadd.f32 %v280, %v438
      %444 = vrot.lane.b32.xlu0 %v283, 120
      %v445 = vpop.permute.xlu0 %444
      %446 = vrot.lane.b32.xlu0 %v283, 88
      %v447 = vpop.permute.xlu0 %446
      %v449 = vsel %vm286, %v445, 0
      %v452 = vsel %vm286, %v447, 0
      %454 = vmatprep.subr.bf16.mxu0 0
      %455 = vmatpush1.bf16.xpose.msra.mxu0 %v452
      %456 = vmatprep.subr.bf16.mxu0 0
      %457 = vmatpush1.bf16.xpose.msra.mxu0 0
      %458 = vmatprep.subr.bf16.mxu0 0
      %459 = vmatpush1.bf16.xpose.msra.mxu0 0
      %460 = vmatprep.subr.bf16.mxu0 0
      %461 = vmatpush1.bf16.xpose.msra.mxu0 0
      %462 = vmatprep.subr.bf16.mxu0 0
      %463 = vmatpush1.bf16.xpose.msra.mxu0 0
      %464 = vmatprep.subr.bf16.mxu0 0
      %465 = vmatpush1.bf16.xpose.msra.mxu0 0
      %466 = vmatprep.subr.bf16.mxu0 0
      %467 = vmatpush1.bf16.xpose.msra.mxu0 0
      %468 = vmatprep.subr.bf16.mxu0 0
      %469 = vmatpush1.bf16.xpose.msra.mxu0 0
      %470 = vmatprep.subr.bf16.mxu0 0
      %471 = vmatpush1.bf16.xpose.msra.mxu0 0
      %472 = vmatprep.subr.bf16.mxu0 0
      %473 = vmatpush1.bf16.xpose.msra.mxu0 0
      %474 = vmatprep.subr.bf16.mxu0 0
      %475 = vmatpush1.bf16.xpose.msra.mxu0 0
      %476 = vmatprep.subr.bf16.mxu0 0
      %477 = vmatpush1.bf16.xpose.msra.mxu0 0
      %478 = vmatprep.subr.bf16.mxu0 0
      %479 = vmatpush1.bf16.xpose.msra.mxu0 0
      %480 = vmatprep.subr.bf16.mxu0 0
      %481 = vmatpush1.bf16.xpose.msra.mxu0 0
      %482 = vmatprep.subr.bf16.mxu0 0
      %483 = vmatpush1.bf16.xpose.msra.mxu0 0
      %484 = vmatprep.subr.bf16.mxu0 0
      %485 = vmatpush1.bf16.xpose.msra.mxu0 0
      %486 = vmatprep.mubr.bf16.mxu0 0
      %487 = vmatmul.mubr.bf16.gmra.mrb[0].mxu0 %v449
      %v488 = vpop.f32.mrb[0].mxu0
      %v489 = vadd.f32 0.0, %v488
      %v490 = vpop.f32.mrb[0].mxu0
      %v491 = vpop.f32.mrb[0].mxu0
      %v492 = vpop.f32.mrb[0].mxu0
      %493 = vdwg.mxu0
      %v494 = vmul.f32 %v489, 0.35355338
      %v495 = vsel %vm272, %v494, -1e+09
      %v496 = vsel %vm286, %v495, -inf
      %497 = vmax.xlane.f32.xlu0 %v496
      %v498 = vpop.xlane.xlu0 %497
      %v499 = vsub.f32 %v495, %v498
      %v500 = vmul.f32 %v499, 1.442695
      %v501 = vpow.pop %v500
      %v502 = vsel %vm286, %v501, 0.0
      %503 = vadd.xlane.f32.xlu0 %v502
      %v504 = vpop.xlane.xlu0 %503
      %v505 = vrcp.pop %v504
      %v506 = vmul.f32 %v501, %v505
      %v507 = vpack.c.bf16 %v506, %v506
      %508 = vrot.lane.b32.xlu0 %v283, 56
      %v509 = vpop.permute.xlu0 %508
      %v511 = vsel %vm286, %v507, 0
      %v514 = vsel %vm352, %v509, 0
      %516 = vmatprep.subr.bf16.mxu0 0
      %517 = vmatpush1.bf16.msra.mxu0 %v514
      %518 = vmatprep.subr.bf16.mxu0 0
      %519 = vmatpush1.bf16.msra.mxu0 0
      %520 = vmatprep.subr.bf16.mxu0 0
      %521 = vmatpush1.bf16.msra.mxu0 0
      %522 = vmatprep.subr.bf16.mxu0 0
      %523 = vmatpush1.bf16.msra.mxu0 0
      %524 = vmatprep.subr.bf16.mxu0 0
      %525 = vmatpush1.bf16.msra.mxu0 0
      %526 = vmatprep.subr.bf16.mxu0 0
      %527 = vmatpush1.bf16.msra.mxu0 0
      %528 = vmatprep.subr.bf16.mxu0 0
      %529 = vmatpush1.bf16.msra.mxu0 0
      %530 = vmatprep.subr.bf16.mxu0 0
      %531 = vmatpush1.bf16.msra.mxu0 0
      %532 = vmatprep.subr.bf16.mxu0 0
      %533 = vmatpush1.bf16.msra.mxu0 0
      %534 = vmatprep.subr.bf16.mxu0 0
      %535 = vmatpush1.bf16.msra.mxu0 0
      %536 = vmatprep.subr.bf16.mxu0 0
      %537 = vmatpush1.bf16.msra.mxu0 0
      %538 = vmatprep.subr.bf16.mxu0 0
      %539 = vmatpush1.bf16.msra.mxu0 0
      %540 = vmatprep.subr.bf16.mxu0 0
      %541 = vmatpush1.bf16.msra.mxu0 0
      %542 = vmatprep.subr.bf16.mxu0 0
      %543 = vmatpush1.bf16.msra.mxu0 0
      %544 = vmatprep.subr.bf16.mxu0 0
      %545 = vmatpush1.bf16.msra.mxu0 0
      %546 = vmatprep.subr.bf16.mxu0 0
      %547 = vmatpush1.bf16.msra.mxu0 0
      %548 = vmatprep.mubr.bf16.mxu0 0
      %549 = vmatmul.mubr.bf16.gmra.mrb[0].mxu0 %v511
      %v550 = vpop.f32.mrb[0].mxu0
      %v551 = vadd.f32 0.0, %v550
      %v552 = vpop.f32.mrb[0].mxu0
      %v553 = vpop.f32.mrb[0].mxu0
      %v554 = vpop.f32.mrb[0].mxu0
      %555 = vdwg.mxu0
      %v556 = vpack.c.bf16 %v551, %v551
      %v558 = vsel %vm286, %v556, 0
      %v561 = vsel %vm352, %v255, 0
      %563 = vmatprep.subr.bf16.mxu0 0
      %564 = vmatpush1.bf16.msra.mxu0 %v561
      %565 = vmatprep.subr.bf16.mxu0 0
      %566 = vmatpush1.bf16.msra.mxu0 0
      %567 = vmatprep.subr.bf16.mxu0 0
      %568 = vmatpush1.bf16.msra.mxu0 0
      %569 = vmatprep.subr.bf16.mxu0 0
      %570 = vmatpush1.bf16.msra.mxu0 0
      %571 = vmatprep.subr.bf16.mxu0 0
      %572 = vmatpush1.bf16.msra.mxu0 0
      %573 = vmatprep.subr.bf16.mxu0 0
      %574 = vmatpush1.bf16.msra.mxu0 0
      %575 = vmatprep.subr.bf16.mxu0 0
      %576 = vmatpush1.bf16.msra.mxu0 0
      %577 = vmatprep.subr.bf16.mxu0 0
      %578 = vmatpush1.bf16.msra.mxu0 0
      %579 = vmatprep.subr.bf16.mxu0 0
      %580 = vmatpush1.bf16.msra.mxu0 0
      %581 = vmatprep.subr.bf16.mxu0 0
      %582 = vmatpush1.bf16.msra.mxu0 0
      %583 = vmatprep.subr.bf16.mxu0 0
      %584 = vmatpush1.bf16.msra.mxu0 0
      %585 = vmatprep.subr.bf16.mxu0 0
      %586 = vmatpush1.bf16.msra.mxu0 0
      %587 = vmatprep.subr.bf16.mxu0 0
      %588 = vmatpush1.bf16.msra.mxu0 0
      %589 = vmatprep.subr.bf16.mxu0 0
      %590 = vmatpush1.bf16.msra.mxu0 0
      %591 = vmatprep.subr.bf16.mxu0 0
      %592 = vmatpush1.bf16.msra.mxu0 0
      %593 = vmatprep.subr.bf16.mxu0 0
      %594 = vmatpush1.bf16.msra.mxu0 0
      %595 = vmatprep.mubr.bf16.mxu0 0
      %596 = vmatmul.mubr.bf16.gmra.mrb[0].mxu0 %v558
      %v597 = vpop.f32.mrb[0].mxu0
      %v598 = vadd.f32 0.0, %v597
      %v599 = vpop.f32.mrb[0].mxu0
      %v600 = vpop.f32.mrb[0].mxu0
      %v601 = vpop.f32.mrb[0].mxu0
      %602 = vdwg.mxu0
      %v603 = vadd.f32 %v443, %v598
      %604 = vrot.lane.b32.xlu0 %v283, 112
      %v605 = vpop.permute.xlu0 %604
      %606 = vrot.lane.b32.xlu0 %v283, 80
      %v607 = vpop.permute.xlu0 %606
      %v609 = vsel %vm286, %v605, 0
      %v612 = vsel %vm286, %v607, 0
      %614 = vmatprep.subr.bf16.mxu0 0
      %615 = vmatpush1.bf16.xpose.msra.mxu0 %v612
      %616 = vmatprep.subr.bf16.mxu0 0
      %617 = vmatpush1.bf16.xpose.msra.mxu0 0
      %618 = vmatprep.subr.bf16.mxu0 0
      %619 = vmatpush1.bf16.xpose.msra.mxu0 0
      %620 = vmatprep.subr.bf16.mxu0 0
      %621 = vmatpush1.bf16.xpose.msra.mxu0 0
      %622 = vmatprep.subr.bf16.mxu0 0
      %623 = vmatpush1.bf16.xpose.msra.mxu0 0
      %624 = vmatprep.subr.bf16.mxu0 0
      %625 = vmatpush1.bf16.xpose.msra.mxu0 0
      %626 = vmatprep.subr.bf16.mxu0 0
      %627 = vmatpush1.bf16.xpose.msra.mxu0 0
      %628 = vmatprep.subr.bf16.mxu0 0
      %629 = vmatpush1.bf16.xpose.msra.mxu0 0
      %630 = vmatprep.subr.bf16.mxu0 0
      %631 = vmatpush1.bf16.xpose.msra.mxu0 0
      %632 = vmatprep.subr.bf16.mxu0 0
      %633 = vmatpush1.bf16.xpose.msra.mxu0 0
      %634 = vmatprep.subr.bf16.mxu0 0
      %635 = vmatpush1.bf16.xpose.msra.mxu0 0
      %636 = vmatprep.subr.bf16.mxu0 0
      %637 = vmatpush1.bf16.xpose.msra.mxu0 0
      %638 = vmatprep.subr.bf16.mxu0 0
      %639 = vmatpush1.bf16.xpose.msra.mxu0 0
      %640 = vmatprep.subr.bf16.mxu0 0
      %641 = vmatpush1.bf16.xpose.msra.mxu0 0
      %642 = vmatprep.subr.bf16.mxu0 0
      %643 = vmatpush1.bf16.xpose.msra.mxu0 0
      %644 = vmatprep.subr.bf16.mxu0 0
      %645 = vmatpush1.bf16.xpose.msra.mxu0 0
      %646 = vmatprep.mubr.bf16.mxu0 0
      %647 = vmatmul.mubr.bf16.gmra.mrb[0].mxu0 %v609
      %v648 = vpop.f32.mrb[0].mxu0
      %v649 = vadd.f32 0.0, %v648
      %v650 = vpop.f32.mrb[0].mxu0
      %v651 = vpop.f32.mrb[0].mxu0
      %v652 = vpop.f32.mrb[0].mxu0
      %653 = vdwg.mxu0
      %v654 = vmul.f32 %v649, 0.35355338
      %v655 = vsel %vm272, %v654, -1e+09
      %v656 = vsel %vm286, %v655, -inf
      %657 = vmax.xlane.f32.xlu0 %v656
      %v658 = vpop.xlane.xlu0 %657
      %v659 = vsub.f32 %v655, %v658
      %v660 = vmul.f32 %v659, 1.442695
      %v661 = vpow.pop %v660
      %v662 = vsel %vm286, %v661, 0.0
      %663 = vadd.xlane.f32.xlu0 %v662
      %v664 = vpop.xlane.xlu0 %663
      %v665 = vrcp.pop %v664
      %v666 = vmul.f32 %v661, %v665
      %v667 = vpack.c.bf16 %v666, %v666
      %668 = vrot.lane.b32.xlu0 %v283, 48
      %v669 = vpop.permute.xlu0 %668
      %v671 = vsel %vm286, %v667, 0
      %v674 = vsel %vm352, %v669, 0
      %676 = vmatprep.subr.bf16.mxu0 0
      %677 = vmatpush1.bf16.msra.mxu0 %v674
      %678 = vmatprep.subr.bf16.mxu0 0
      %679 = vmatpush1.bf16.msra.mxu0 0
      %680 = vmatprep.subr.bf16.mxu0 0
      %681 = vmatpush1.bf16.msra.mxu0 0
      %682 = vmatprep.subr.bf16.mxu0 0
      %683 = vmatpush1.bf16.msra.mxu0 0
      %684 = vmatprep.subr.bf16.mxu0 0
      %685 = vmatpush1.bf16.msra.mxu0 0
      %686 = vmatprep.subr.bf16.mxu0 0
      %687 = vmatpush1.bf16.msra.mxu0 0
      %688 = vmatprep.subr.bf16.mxu0 0
      %689 = vmatpush1.bf16.msra.mxu0 0
      %690 = vmatprep.subr.bf16.mxu0 0
      %691 = vmatpush1.bf16.msra.mxu0 0
      %692 = vmatprep.subr.bf16.mxu0 0
      %693 = vmatpush1.bf16.msra.mxu0 0
      %694 = vmatprep.subr.bf16.mxu0 0
      %695 = vmatpush1.bf16.msra.mxu0 0
      %696 = vmatprep.subr.bf16.mxu0 0
      %697 = vmatpush1.bf16.msra.mxu0 0
      %698 = vmatprep.subr.bf16.mxu0 0
      %699 = vmatpush1.bf16.msra.mxu0 0
      %700 = vmatprep.subr.bf16.mxu0 0
      %701 = vmatpush1.bf16.msra.mxu0 0
      %702 = vmatprep.subr.bf16.mxu0 0
      %703 = vmatpush1.bf16.msra.mxu0 0
      %704 = vmatprep.subr.bf16.mxu0 0
      %705 = vmatpush1.bf16.msra.mxu0 0
      %706 = vmatprep.subr.bf16.mxu0 0
      %707 = vmatpush1.bf16.msra.mxu0 0
      %708 = vmatprep.mubr.bf16.mxu0 0
      %709 = vmatmul.mubr.bf16.gmra.mrb[0].mxu0 %v671
      %v710 = vpop.f32.mrb[0].mxu0
      %v711 = vadd.f32 0.0, %v710
      %v712 = vpop.f32.mrb[0].mxu0
      %v713 = vpop.f32.mrb[0].mxu0
      %v714 = vpop.f32.mrb[0].mxu0
      %715 = vdwg.mxu0
      %v716 = vpack.c.bf16 %v711, %v711
      %v718 = vsel %vm286, %v716, 0
      %v721 = vsel %vm352, %v256, 0
      %723 = vmatprep.subr.bf16.mxu0 0
      %724 = vmatpush1.bf16.msra.mxu0 %v721
      %725 = vmatprep.subr.bf16.mxu0 0
      %726 = vmatpush1.bf16.msra.mxu0 0
      %727 = vmatprep.subr.bf16.mxu0 0
      %728 = vmatpush1.bf16.msra.mxu0 0
      %729 = vmatprep.subr.bf16.mxu0 0
      %730 = vmatpush1.bf16.msra.mxu0 0
      %731 = vmatprep.subr.bf16.mxu0 0
      %732 = vmatpush1.bf16.msra.mxu0 0
      %733 = vmatprep.subr.bf16.mxu0 0
      %734 = vmatpush1.bf16.msra.mxu0 0
      %735 = vmatprep.subr.bf16.mxu0 0
      %736 = vmatpush1.bf16.msra.mxu0 0
      %737 = vmatprep.subr.bf16.mxu0 0
      %738 = vmatpush1.bf16.msra.mxu0 0
      %739 = vmatprep.subr.bf16.mxu0 0
      %740 = vmatpush1.bf16.msra.mxu0 0
      %741 = vmatprep.subr.bf16.mxu0 0
      %742 = vmatpush1.bf16.msra.mxu0 0
      %743 = vmatprep.subr.bf16.mxu0 0
      %744 = vmatpush1.bf16.msra.mxu0 0
      %745 = vmatprep.subr.bf16.mxu0 0
      %746 = vmatpush1.bf16.msra.mxu0 0
      %747 = vmatprep.subr.bf16.mxu0 0
      %748 = vmatpush1.bf16.msra.mxu0 0
      %749 = vmatprep.subr.bf16.mxu0 0
      %750 = vmatpush1.bf16.msra.mxu0 0
      %751 = vmatprep.subr.bf16.mxu0 0
      %752 = vmatpush1.bf16.msra.mxu0 0
      %753 = vmatprep.subr.bf16.mxu0 0
      %754 = vmatpush1.bf16.msra.mxu0 0
      %755 = vmatprep.mubr.bf16.mxu0 0
      %756 = vmatmul.mubr.bf16.gmra.mrb[0].mxu0 %v718
      %v757 = vpop.f32.mrb[0].mxu0
      %v758 = vadd.f32 0.0, %v757
      %v759 = vpop.f32.mrb[0].mxu0
      %v760 = vpop.f32.mrb[0].mxu0
      %v761 = vpop.f32.mrb[0].mxu0
      %762 = vdwg.mxu0
      %v763 = vadd.f32 %v603, %v758
      %764 = vrot.lane.b32.xlu0 %v283, 104
      %v765 = vpop.permute.xlu0 %764
      %766 = vrot.lane.b32.xlu0 %v283, 72
      %v767 = vpop.permute.xlu0 %766
      %v769 = vsel %vm286, %v765, 0
      %v772 = vsel %vm286, %v767, 0
      %774 = vmatprep.subr.bf16.mxu0 0
      %775 = vmatpush1.bf16.xpose.msra.mxu0 %v772
      %776 = vmatprep.subr.bf16.mxu0 0
      %777 = vmatpush1.bf16.xpose.msra.mxu0 0
      %778 = vmatprep.subr.bf16.mxu0 0
      %779 = vmatpush1.bf16.xpose.msra.mxu0 0
      %780 = vmatprep.subr.bf16.mxu0 0
      %781 = vmatpush1.bf16.xpose.msra.mxu0 0
      %782 = vmatprep.subr.bf16.mxu0 0
      %783 = vmatpush1.bf16.xpose.msra.mxu0 0
      %784 = vmatprep.subr.bf16.mxu0 0
      %785 = vmatpush1.bf16.xpose.msra.mxu0 0
      %786 = vmatprep.subr.bf16.mxu0 0
      %787 = vmatpush1.bf16.xpose.msra.mxu0 0
      %788 = vmatprep.subr.bf16.mxu0 0
      %789 = vmatpush1.bf16.xpose.msra.mxu0 0
      %790 = vmatprep.subr.bf16.mxu0 0
      %791 = vmatpush1.bf16.xpose.msra.mxu0 0
      %792 = vmatprep.subr.bf16.mxu0 0
      %793 = vmatpush1.bf16.xpose.msra.mxu0 0
      %794 = vmatprep.subr.bf16.mxu0 0
      %795 = vmatpush1.bf16.xpose.msra.mxu0 0
      %796 = vmatprep.subr.bf16.mxu0 0
      %797 = vmatpush1.bf16.xpose.msra.mxu0 0
      %798 = vmatprep.subr.bf16.mxu0 0
      %799 = vmatpush1.bf16.xpose.msra.mxu0 0
      %800 = vmatprep.subr.bf16.mxu0 0
      %801 = vmatpush1.bf16.xpose.msra.mxu0 0
      %802 = vmatprep.subr.bf16.mxu0 0
      %803 = vmatpush1.bf16.xpose.msra.mxu0 0
      %804 = vmatprep.subr.bf16.mxu0 0
      %805 = vmatpush1.bf16.xpose.msra.mxu0 0
      %806 = vmatprep.mubr.bf16.mxu0 0
      %807 = vmatmul.mubr.bf16.gmra.mrb[0].mxu0 %v769
      %v808 = vpop.f32.mrb[0].mxu0
      %v809 = vadd.f32 0.0, %v808
      %v810 = vpop.f32.mrb[0].mxu0
      %v811 = vpop.f32.mrb[0].mxu0
      %v812 = vpop.f32.mrb[0].mxu0
      %813 = vdwg.mxu0
      %v814 = vmul.f32 %v809, 0.35355338
      %v815 = vsel %vm272, %v814, -1e+09
      %v816 = vsel %vm286, %v815, -inf
      %817 = vmax.xlane.f32.xlu0 %v816
      %v818 = vpop.xlane.xlu0 %817
      %v819 = vsub.f32 %v815, %v818
      %v820 = vmul.f32 %v819, 1.442695
      %v821 = vpow.pop %v820
      %v822 = vsel %vm286, %v821, 0.0
      %823 = vadd.xlane.f32.xlu0 %v822
      %v824 = vpop.xlane.xlu0 %823
      %v825 = vrcp.pop %v824
      %v826 = vmul.f32 %v821, %v825
      %v827 = vpack.c.bf16 %v826, %v826
      %828 = vrot.lane.b32.xlu0 %v283, 40
      %v829 = vpop.permute.xlu0 %828
      %v831 = vsel %vm286, %v827, 0
      %v834 = vsel %vm352, %v829, 0
      %836 = vmatprep.subr.bf16.mxu0 0
      %837 = vmatpush1.bf16.msra.mxu0 %v834
      %838 = vmatprep.subr.bf16.mxu0 0
      %839 = vmatpush1.bf16.msra.mxu0 0
      %840 = vmatprep.subr.bf16.mxu0 0
      %841 = vmatpush1.bf16.msra.mxu0 0
      %842 = vmatprep.subr.bf16.mxu0 0
      %843 = vmatpush1.bf16.msra.mxu0 0
      %844 = vmatprep.subr.bf16.mxu0 0
      %845 = vmatpush1.bf16.msra.mxu0 0
      %846 = vmatprep.subr.bf16.mxu0 0
      %847 = vmatpush1.bf16.msra.mxu0 0
      %848 = vmatprep.subr.bf16.mxu0 0
      %849 = vmatpush1.bf16.msra.mxu0 0
      %850 = vmatprep.subr.bf16.mxu0 0
      %851 = vmatpush1.bf16.msra.mxu0 0
      %852 = vmatprep.subr.bf16.mxu0 0
      %853 = vmatpush1.bf16.msra.mxu0 0
      %854 = vmatprep.subr.bf16.mxu0 0
      %855 = vmatpush1.bf16.msra.mxu0 0
      %856 = vmatprep.subr.bf16.mxu0 0
      %857 = vmatpush1.bf16.msra.mxu0 0
      %858 = vmatprep.subr.bf16.mxu0 0
      %859 = vmatpush1.bf16.msra.mxu0 0
      %860 = vmatprep.subr.bf16.mxu0 0
      %861 = vmatpush1.bf16.msra.mxu0 0
      %862 = vmatprep.subr.bf16.mxu0 0
      %863 = vmatpush1.bf16.msra.mxu0 0
      %864 = vmatprep.subr.bf16.mxu0 0
      %865 = vmatpush1.bf16.msra.mxu0 0
      %866 = vmatprep.subr.bf16.mxu0 0
      %867 = vmatpush1.bf16.msra.mxu0 0
      %868 = vmatprep.mubr.bf16.mxu0 0
      %869 = vmatmul.mubr.bf16.gmra.mrb[0].mxu0 %v831
      %v870 = vpop.f32.mrb[0].mxu0
      %v871 = vadd.f32 0.0, %v870
      %v872 = vpop.f32.mrb[0].mxu0
      %v873 = vpop.f32.mrb[0].mxu0
      %v874 = vpop.f32.mrb[0].mxu0
      %875 = vdwg.mxu0
      %v876 = vpack.c.bf16 %v871, %v871
      %v878 = vsel %vm286, %v876, 0
      %v881 = vsel %vm352, %v257, 0
      %883 = vmatprep.subr.bf16.mxu0 0
      %884 = vmatpush1.bf16.msra.mxu0 %v881
      %885 = vmatprep.subr.bf16.mxu0 0
      %886 = vmatpush1.bf16.msra.mxu0 0
      %887 = vmatprep.subr.bf16.mxu0 0
      %888 = vmatpush1.bf16.msra.mxu0 0
      %889 = vmatprep.subr.bf16.mxu0 0
      %890 = vmatpush1.bf16.msra.mxu0 0
      %891 = vmatprep.subr.bf16.mxu0 0
      %892 = vmatpush1.bf16.msra.mxu0 0
      %893 = vmatprep.subr.bf16.mxu0 0
      %894 = vmatpush1.bf16.msra.mxu0 0
      %895 = vmatprep.subr.bf16.mxu0 0
      %896 = vmatpush1.bf16.msra.mxu0 0
      %897 = vmatprep.subr.bf16.mxu0 0
      %898 = vmatpush1.bf16.msra.mxu0 0
      %899 = vmatprep.subr.bf16.mxu0 0
      %900 = vmatpush1.bf16.msra.mxu0 0
      %901 = vmatprep.subr.bf16.mxu0 0
      %902 = vmatpush1.bf16.msra.mxu0 0
      %903 = vmatprep.subr.bf16.mxu0 0
      %904 = vmatpush1.bf16.msra.mxu0 0
      %905 = vmatprep.subr.bf16.mxu0 0
      %906 = vmatpush1.bf16.msra.mxu0 0
      %907 = vmatprep.subr.bf16.mxu0 0
      %908 = vmatpush1.bf16.msra.mxu0 0
      %909 = vmatprep.subr.bf16.mxu0 0
      %910 = vmatpush1.bf16.msra.mxu0 0
      %911 = vmatprep.subr.bf16.mxu0 0
      %912 = vmatpush1.bf16.msra.mxu0 0
      %913 = vmatprep.subr.bf16.mxu0 0
      %914 = vmatpush1.bf16.msra.mxu0 0
      %915 = vmatprep.mubr.bf16.mxu0 0
      %916 = vmatmul.mubr.bf16.gmra.mrb[0].mxu0 %v878
      %v917 = vpop.f32.mrb[0].mxu0
      %v918 = vadd.f32 0.0, %v917
      %v919 = vpop.f32.mrb[0].mxu0
      %v920 = vpop.f32.mrb[0].mxu0
      %v921 = vpop.f32.mrb[0].mxu0
      %922 = vdwg.mxu0
      %v923 = vadd.f32 %v763, %v918
      %v924 = vpack.c.bf16 %v923, %v923
      %vm925 = vcmask 257024
      %926 = vst.msk [vmem:[%s250] sm:$0xf] %vm925, %v924
      %p927 = scmp.lt.s32.totalorder %s16, 1
      %s928 = scalar_select %p927, %s16, 1
      %s929 = smul.addr %s928, 4
      %s930 = scalar_lea.vmem %s5, %s929
      // Predicated region
      $region41: #{transformer_forward.26} parent=39 // pred_check
        %p931 = pneg %p154
      $region42: #{transformer_forward.26} parent=39 // pred_check_branch
        %933 = sbr.rel (%p931) target = $region44
      $region43: #{transformer_forward.26} parent=39 // pred_region
        _
      $region44: #{transformer_forward.26} parent=39 // pred_fallthru
        _
    $region40: #{transformer_forward.26} parent=5 // pred_fallthru
      _
    %p934 = scmp.le.s32.totalorder 2, %s11
    // Predicated region
    $region45: #{transformer_forward.26} parent=5 // pred_check
      %p935 = pneg %p934
    $region46: #{transformer_forward.26} parent=5 // pred_check_branch
      %937 = sbr.rel (%p935) target = $region48
    $region47: #{transformer_forward.26} parent=5 // pred_region
      %s938 = ssub.s32 %s11, 2
      // Predicated region
      $region49: #{transformer_forward.26} parent=47 // pred_check
        %p939 = pneg %p160
      $region50: #{transformer_forward.26} parent=47 // pred_check_branch
        %941 = sbr.rel (%p939) target = $region52
      $region51: #{transformer_forward.26} parent=47 // pred_region
        %p942 = scmp.lt.s32.totalorder %s17, 1
        %s943 = scalar_select %p942, %s17, 1
        %s944 = smul.addr %s943, 4
        %s945 = scalar_lea.vmem %s5, %s944
      $region52: #{transformer_forward.26} parent=47 // pred_fallthru
        _
    $region48: #{transformer_forward.26} parent=5 // pred_fallthru
      _
  $region6: #{transformer_forward.26} parent=0 // loop_footer
    %s15 = sadd.s32 1, %s11
  $region7: #{transformer_forward.26} parent=0 // loop_footer_branch
    %10 = sbr.rel target = $region3
  $region8: #{transformer_forward.26} parent=0 // loop_exit
    _

// kernel: transformer_forward.37
$region0: #{transformer_forward.37}
  #allocation0 [shape = 'u32[]', space=smem, size = 0x4, offset = 0x4, fixed_abs, tag = 'smem constant byte address 0x4 - core index']
  #allocation1 [shape = 'u32[144,128]{1,0:T(1,128)}', space=vmem, size = 0x12000, scoped, tag = 'internal scratch']
  #allocation2 [shape = 'f32[16,32]{1,0:T(8,128)}', space=vmem, size = 0x2000, scoped, tag = 'scratch operand']
  %s0 = inlined_call_operand.vmem [shape: bf16[16,32], index: 0, kind: input, shape index: {}]
  %s1 = inlined_call_operand.vmem [shape: f32[1,32], index: 1, kind: input, shape index: {}]
  %s2 = inlined_call_operand.vmem [shape: f32[1,32], index: 2, kind: input, shape index: {}]
  %s3 = inlined_call_operand.vmem [shape: bf16[32,128], index: 3, kind: input, shape index: {}]
  %s4 = inlined_call_operand.vmem [shape: f32[1,128], index: 4, kind: input, shape index: {}]
  %s5 = inlined_call_operand.hbm [shape: f32[16,128], index: 5, kind: output, shape index: {}]
  %s6 = sld [smem:[#allocation0]]
  $region34: #{transformer_forward.37} parent=0
    _
  %s8 = ssub.s32 1, %s6
  %s9 = scalar_select 0, %s8, %s6
  $region1: #{transformer_forward.37} parent=0
    #allocation3 [shape = 'u8[8192]{0}', space=vmem, size = 0x2000, scoped, tag = 'output window, operand 0, single buffered']
    #allocation4 [shape = 's32[1]{0}', space=sflag, size = 0x4, scoped, tag = 'scoped memory for transformer_forward.37']
    %10 = vsyncpa [#allocation4], 0
    // Predicated region
    $region2: #{transformer_forward.37} parent=1 // pred_check
      _
    $region3: #{transformer_forward.37} parent=1 // pred_check_branch
      %12 = sbr.rel (0) target = $region5
    $region4: #{transformer_forward.37} parent=1 // pred_region
      _
    $region5: #{transformer_forward.37} parent=1 // pred_fallthru
      _
    // Predicated region
    $region6: #{transformer_forward.37} parent=1 // pred_check
      _
    $region7: #{transformer_forward.37} parent=1 // pred_check_branch
      %14 = sbr.rel (0) target = $region9
    $region8: #{transformer_forward.37} parent=1 // pred_region
      _
    $region9: #{transformer_forward.37} parent=1 // pred_fallthru
      _
    // Predicated region
    $region10: #{transformer_forward.37} parent=1 // pred_check
      _
    $region11: #{transformer_forward.37} parent=1 // pred_check_branch
      %16 = sbr.rel (0) target = $region13
    $region12: #{transformer_forward.37} parent=1 // pred_region
      _
    $region13: #{transformer_forward.37} parent=1 // pred_fallthru
      _
    // Predicated region
    $region14: #{transformer_forward.37} parent=1 // pred_check
      _
    $region15: #{transformer_forward.37} parent=1 // pred_check_branch
      %18 = sbr.rel (0) target = $region17
    $region16: #{transformer_forward.37} parent=1 // pred_region
      _
    $region17: #{transformer_forward.37} parent=1 // pred_fallthru
      _
    // Predicated region
    $region18: #{transformer_forward.37} parent=1 // pred_check
      _
    $region19: #{transformer_forward.37} parent=1 // pred_check_branch
      %20 = sbr.rel (0) target = $region21
    $region20: #{transformer_forward.37} parent=1 // pred_region
      _
    $region21: #{transformer_forward.37} parent=1 // pred_fallthru
      _
    %p22 = scmp.eq.s32.totalorder 0, 0
    // Predicated region
    $region22: #{transformer_forward.37} parent=1 // pred_check
      %p23 = pneg %p22
    $region23: #{transformer_forward.37} parent=1 // pred_check_branch
      %25 = sbr.rel (%p23) target = $region25
    $region24: #{transformer_forward.37} parent=1 // pred_region
      %v26 = vld [vmem:[%s0] sm:$0xf]
      %v27 = vld [vmem:[%s0 + $0x4] sm:$0xf]
      %v28 = vunpack.c.l.bf16 %v26
      %v29 = vunpack.c.l.bf16 %v27
      %v30 = vld [vmem:[%s1] sm:$0x1]
      %v31 = vld [vmem:[%s2] sm:$0x1]
      %vm32 = vcmask 261120
      %v33 = vsel %vm32, %v28, 0.0
      %34 = vadd.xlane.f32.xlu0 %v33
      %v35 = vpop.xlane.xlu0 %34
      %v36 = vsel %vm32, %v29, 0.0
      %37 = vadd.xlane.f32.xlu0 %v36
      %v38 = vpop.xlane.xlu0 %37
      %v39 = vrcp.pop 32.0
      %v40 = vmul.f32 %v35, %v39
      %v41 = vmul.f32 %v38, %v39
      %v42 = vsub.f32 %v28, %v40
      %v43 = vsub.f32 %v29, %v41
      %v44 = vmul.f32 %v42, %v42
      %v45 = vmul.f32 %v43, %v43
      %v46 = vsel %vm32, %v44, 0.0
      %47 = vadd.xlane.f32.xlu0 %v46
      %v48 = vpop.xlane.xlu0 %47
      %v49 = vsel %vm32, %v45, 0.0
      %50 = vadd.xlane.f32.xlu0 %v49
      %v51 = vpop.xlane.xlu0 %50
      %v52 = vmul.f32 %v48, %v39
      %v53 = vmul.f32 %v51, %v39
      %v54 = vadd.f32 %v52, 1e-05
      %v55 = vadd.f32 %v53, 1e-05
      %v56 = vrsqrt.pop %v54
      %v57 = vrsqrt.pop %v55
      %v58 = vmul.f32 %v42, %v56
      %v59 = vmul.f32 %v43, %v57
      %v61 = vlaneseq
      %v62 = vshrl.u32 %v61, 7
      %v63 = vsub.s32 0, %v62
      %v64 = vrot.slane %v30, %v63
      %v66 = vmul.f32 %v58, %v64
      %v67 = vmul.f32 %v59, %v64
      %v69 = vlaneseq
      %v70 = vshrl.u32 %v69, 7
      %v71 = vsub.s32 0, %v70
      %v72 = vrot.slane %v31, %v71
      %v74 = vadd.f32 %v66, %v72
      %v75 = vadd.f32 %v67, %v72
      %76 = vst.msk [vmem:[#allocation2] sm:$0xff] %vm32, %v74
      %77 = vst.msk [vmem:[#allocation2 + $0x8] sm:$0xff] %vm32, %v75
    $region25: #{transformer_forward.37} parent=1 // pred_fallthru
      _
    %v78 = vld [vmem:[#allocation2] sm:$0xff]
    %v79 = vld [vmem:[#allocation2 + $0x8] sm:$0xff]
    %v80 = vpack.c.bf16 %v79, %v78
    %v81 = vld [vmem:[%s3] sm:$0xf]
    %v82 = vld [vmem:[%s3 + $0x4] sm:$0xf]
    %v83 = vld [vmem:[%s3 + $0x8] sm:$0xf]
    %v84 = vld [vmem:[%s3 + $0xc] sm:$0xf]
    %v85 = vld [vmem:[%s4] sm:$0x1]
    %v87 = vlaneseq
    %v88 = vshrl.u32 %v87, 7
    %v89 = vsub.s32 0, %v88
    %v90 = vrot.slane %v85, %v89
    %v96 = vunpack.c.l.b16 %v81
    %v97 = vunpack.c.l.b16 %v82
    %v98 = vunpack.c.l.b16 %v83
    %v99 = vunpack.c.l.b16 %v84
    %v100 = vpack.c.b16 %v97, %v96
    %v101 = vpack.c.b16 %v99, %v98
    %vm104 = vcmask 261120
    %v106 = vsel %vm104, %v80, 0
    %108 = vmatprep.subr.bf16.mxu0 0
    %109 = vmatpush1.bf16.msra.mxu0 %v100
    %110 = vmatprep.subr.bf16.mxu0 0
    %111 = vmatpush1.bf16.msra.mxu0 %v101
    %112 = vmatprep.subr.bf16.mxu0 0
    %113 = vmatpush1.bf16.msra.mxu0 0
    %114 = vmatprep.subr.bf16.mxu0 0
    %115 = vmatpush1.bf16.msra.mxu0 0
    %116 = vmatprep.subr.bf16.mxu0 0
    %117 = vmatpush1.bf16.msra.mxu0 0
    %118 = vmatprep.subr.bf16.mxu0 0
    %119 = vmatpush1.bf16.msra.mxu0 0
    %120 = vmatprep.subr.bf16.mxu0 0
    %121 = vmatpush1.bf16.msra.mxu0 0
    %122 = vmatprep.subr.bf16.mxu0 0
    %123 = vmatpush1.bf16.msra.mxu0 0
    %124 = vmatprep.subr.bf16.mxu0 0
    %125 = vmatpush1.bf16.msra.mxu0 0
    %126 = vmatprep.subr.bf16.mxu0 0
    %127 = vmatpush1.bf16.msra.mxu0 0
    %128 = vmatprep.subr.bf16.mxu0 0
    %129 = vmatpush1.bf16.msra.mxu0 0
    %130 = vmatprep.subr.bf16.mxu0 0
    %131 = vmatpush1.bf16.msra.mxu0 0
    %132 = vmatprep.subr.bf16.mxu0 0
    %133 = vmatpush1.bf16.msra.mxu0 0
    %134 = vmatprep.subr.bf16.mxu0 0
    %135 = vmatpush1.bf16.msra.mxu0 0
    %136 = vmatprep.subr.bf16.mxu0 0
    %137 = vmatpush1.bf16.msra.mxu0 0
    %138 = vmatprep.subr.bf16.mxu0 0
    %139 = vmatpush1.bf16.msra.mxu0 0
    %140 = vmatprep.mubr.bf16.mxu0 0
    %141 = vmatmul.mubr.bf16.gmra.mrb[0].mxu0 %v106
    %v142 = vpop.f32.mrb[0].mxu0
    %v143 = vadd.f32 %v90, %v142
    %v144 = vpop.f32.mrb[0].mxu0
    %v145 = vpop.f32.mrb[0].mxu0
    %v146 = vadd.f32 %v90, %v145
    %v147 = vpop.f32.mrb[0].mxu0
    %148 = vdwg.mxu0
    %149 = vst [vmem:[#allocation3] sm:$0xff] %v143
    %150 = vst [vmem:[#allocation3 + $0x8] sm:$0xff] %v146
    // Predicated region
    $region26: #{transformer_forward.37} parent=1 // pred_check
      _
    $region27: #{transformer_forward.37} parent=1 // pred_check_branch
      %152 = sbr.rel (0) target = $region29
    $region28: #{transformer_forward.37} parent=1 // pred_region
      %s154 = ssub.s32 256, 256
      %155 = vsyncadd [#allocation4], %s154
      %s156 = sshll.u32 [#allocation3], 4
      %s157 = int_to_ptr.vmem [resolvable:$true] %s156
      %162 = dma.vmem_to_hbm [thread:$0]  %s157, 256, %s5, [#allocation4], 128, 128, 8
    $region29: #{transformer_forward.37} parent=1 // pred_fallthru
      _
    // Predicated region
    $region30: #{transformer_forward.37} parent=1 // pred_check
      _
    $region31: #{transformer_forward.37} parent=1 // pred_check_branch
      %164 = sbr.rel (0) target = $region33
    $region32: #{transformer_forward.37} parent=1 // pred_region
      %165 = dma.done [#allocation4], 256
    $region33: #{transformer_forward.37} parent=1 // pred_fallthru
      _
    %166 = vsyncpa [#allocation4], 1

// kernel: transformer_forward.29
$region0: #{transformer_forward.29}
  #allocation0 [shape = 'u32[]', space=smem, size = 0x4, offset = 0x4, fixed_abs, tag = 'smem constant byte address 0x4 - core index']
  #allocation1 [shape = 'u32[144,128]{1,0:T(1,128)}', space=vmem, size = 0x12000, scoped, tag = 'internal scratch']
  %s0 = inlined_call_operand.vmem [shape: bf16[2,8,32], index: 0, kind: input, shape index: {}]
  %s1 = inlined_call_operand.vmem [shape: bf16[2,8,64], index: 1, kind: input, shape index: {}]
  %s2 = inlined_call_operand.vmem [shape: f32[2,1,8], index: 2, kind: input, shape index: {}]
  %s3 = inlined_call_operand.vmem [shape: bf16[32,32], index: 3, kind: input, shape index: {}]
  %s4 = inlined_call_operand.vmem [shape: f32[1,32], index: 4, kind: input, shape index: {}]
  %s5 = inlined_call_operand.vmem [shape: bf16[2,8,32], index: 5, kind: input, shape index: {}]
  %s6 = inlined_call_operand.vmem [shape: bf16[2,8,32], index: 6, kind: output, shape index: {}]
  %s7 = sld [smem:[#allocation0]]
  $region57: #{transformer_forward.29} parent=0
    _
  %s9 = ssub.s32 1, %s7
  %s10 = scalar_select 0, %s9, %s7
  loop: start=0, step=1, limit=4
  $region2: #{transformer_forward.29} parent=0 // loop_pre_header
    _
  $region3: #{transformer_forward.29} parent=0 // loop_header
    %s12 = sphi 0, %s16
    %p13 = scmp.ge.s32.totalorder %s12, 4
    %s19 = sphi 0, %s31
    %s20 = sphi 0, %s27
    %s21 = sphi 0, %s19
    %s22 = sphi 0, %s20
    %s23 = sphi 0, %s21
    %s24 = sphi 0, %s22
    %s36 = sphi 0, %s38
    %s39 = sphi 0, %s36
    %s40 = sphi 0, %s39
    %s56 = sphi 0, %s40
    %s62 = sphi 0, %s64
    %s65 = sphi 0, %s62
    %s66 = sphi 0, %s65
    %s82 = sphi 0, %s66
    %s88 = sphi 0, %s90
    %s91 = sphi 0, %s88
    %s92 = sphi 0, %s91
    %s108 = sphi 0, %s92
    %s112 = sphi 0, %s112
    %s114 = sphi 0, %s112
    %s115 = sphi 0, %s114
    %s129 = sphi 0, %s115
    %s133 = sphi 0, %s133
    %s135 = sphi 0, %s133
    %s136 = sphi 0, %s135
    %s150 = sphi 0, %s136
    %s158 = sphi 0, %s160
    %s161 = sphi 0, %s158
    %s162 = sphi 0, %s161
    %s178 = sphi 0, %s162
    %s186 = sphi 0, %s188
    %s189 = sphi 0, %s186
    %s190 = sphi 0, %s189
    %s206 = sphi 0, %s190
  $region4: #{transformer_forward.29} parent=0 // loop_header_branch
    %15 = sbr.rel (%p13) target = $region8
  $region5: #{transformer_forward.29} parent=0 // loop_body
    %s17 = ssub.s32 %s12, 1
    %s18 = ssub.s32 %s12, 2
    %s25 = sadd.s32 1, %s20
    %p26 = scmp.ge.s32.totalorder %s25, 1
    %s27 = scalar_select %p26, 0, %s25
    %s28 = sadd.s32 1, %s19
    %s29 = scalar_select %p26, %s28, %s19
    %p30 = scmp.ge.s32.totalorder %s29, 2
    %s31 = scalar_select %p30, 0, %s29
    %s32 = ssub.s32 %s19, %s31
    %s33 = ssub.s32 %s20, %s27
    %s34 = sor.u32 %s32, %s33
    %p35 = scmp.eq.s32.totalorder %s34, 0
    %s37 = sadd.s32 %s36, 1
    %s38 = scalar_select %p35, %s36, %s37
    %p41 = pneg %p35
    %p42 = scmp.eq.s32.totalorder %s12, 1
    %p43 = por %p41, %p42
    %p44 = scmp.ne.s32.totalorder %s36, %s39
    %p45 = scmp.eq.s32.totalorder %s12, 0
    %p46 = por %p44, %p45
    %p47 = scmp.ne.s32.totalorder %s36, %s39
    %p48 = scmp.eq.s32.totalorder %s17, 1
    %p49 = por %p47, %p48
    %p50 = scmp.ne.s32.totalorder %s39, %s40
    %p51 = scmp.eq.s32.totalorder %s17, 0
    %p52 = por %p50, %p51
    %p53 = scmp.ne.s32.totalorder %s39, %s40
    %p54 = scmp.eq.s32.totalorder %s18, 1
    %p55 = por %p53, %p54
    %p57 = scmp.ne.s32.totalorder %s40, %s56
    %p58 = scmp.eq.s32.totalorder %s18, 0
    %p59 = por %p57, %p58
    %s60 = ssub.s32 %s19, %s31
    %p61 = scmp.eq.s32.totalorder %s60, 0
    %s63 = sadd.s32 %s62, 1
    %s64 = scalar_select %p61, %s62, %s63
    %p67 = pneg %p61
    %p68 = scmp.eq.s32.totalorder %s12, 1
    %p69 = por %p67, %p68
    %p70 = scmp.ne.s32.totalorder %s62, %s65
    %p71 = scmp.eq.s32.totalorder %s12, 0
    %p72 = por %p70, %p71
    %p73 = scmp.ne.s32.totalorder %s62, %s65
    %p74 = scmp.eq.s32.totalorder %s17, 1
    %p75 = por %p73, %p74
    %p76 = scmp.ne.s32.totalorder %s65, %s66
    %p77 = scmp.eq.s32.totalorder %s17, 0
    %p78 = por %p76, %p77
    %p79 = scmp.ne.s32.totalorder %s65, %s66
    %p80 = scmp.eq.s32.totalorder %s18, 1
    %p81 = por %p79, %p80
    %p83 = scmp.ne.s32.totalorder %s66, %s82
    %p84 = scmp.eq.s32.totalorder %s18, 0
    %p85 = por %p83, %p84
    %s86 = ssub.s32 %s19, %s31
    %p87 = scmp.eq.s32.totalorder %s86, 0
    %s89 = sadd.s32 %s88, 1
    %s90 = scalar_select %p87, %s88, %s89
    %p93 = pneg %p87
    %p94 = scmp.eq.s32.totalorder %s12, 1
    %p95 = por %p93, %p94
    %p96 = scmp.ne.s32.totalorder %s88, %s91
    %p97 = scmp.eq.s32.totalorder %s12, 0
    %p98 = por %p96, %p97
    %p99 = scmp.ne.s32.totalorder %s88, %s91
    %p100 = scmp.eq.s32.totalorder %s17, 1
    %p101 = por %p99, %p100
    %p102 = scmp.ne.s32.totalorder %s91, %s92
    %p103 = scmp.eq.s32.totalorder %s17, 0
    %p104 = por %p102, %p103
    %p105 = scmp.ne.s32.totalorder %s91, %s92
    %p106 = scmp.eq.s32.totalorder %s18, 1
    %p107 = por %p105, %p106
    %p109 = scmp.ne.s32.totalorder %s92, %s108
    %p110 = scmp.eq.s32.totalorder %s18, 0
    %p111 = por %p109, %p110
    %s113 = sadd.s32 %s112, 1
    %p116 = scmp.eq.s32.totalorder %s12, 1
    %p117 = scmp.ne.s32.totalorder %s112, %s114
    %p118 = scmp.eq.s32.totalorder %s12, 0
    %p119 = por %p117, %p118
    %p120 = scmp.ne.s32.totalorder %s112, %s114
    %p121 = scmp.eq.s32.totalorder %s17, 1
    %p122 = por %p120, %p121
    %p123 = scmp.ne.s32.totalorder %s114, %s115
    %p124 = scmp.eq.s32.totalorder %s17, 0
    %p125 = por %p123, %p124
    %p126 = scmp.ne.s32.totalorder %s114, %s115
    %p127 = scmp.eq.s32.totalorder %s18, 1
    %p128 = por %p126, %p127
    %p130 = scmp.ne.s32.totalorder %s115, %s129
    %p131 = scmp.eq.s32.totalorder %s18, 0
    %p132 = por %p130, %p131
    %s134 = sadd.s32 %s133, 1
    %p137 = scmp.eq.s32.totalorder %s12, 1
    %p138 = scmp.ne.s32.totalorder %s133, %s135
    %p139 = scmp.eq.s32.totalorder %s12, 0
    %p140 = por %p138, %p139
    %p141 = scmp.ne.s32.totalorder %s133, %s135
    %p142 = scmp.eq.s32.totalorder %s17, 1
    %p143 = por %p141, %p142
    %p144 = scmp.ne.s32.totalorder %s135, %s136
    %p145 = scmp.eq.s32.totalorder %s17, 0
    %p146 = por %p144, %p145
    %p147 = scmp.ne.s32.totalorder %s135, %s136
    %p148 = scmp.eq.s32.totalorder %s18, 1
    %p149 = por %p147, %p148
    %p151 = scmp.ne.s32.totalorder %s136, %s150
    %p152 = scmp.eq.s32.totalorder %s18, 0
    %p153 = por %p151, %p152
    %s154 = ssub.s32 %s19, %s31
    %s155 = ssub.s32 %s20, %s27
    %s156 = sor.u32 %s154, %s155
    %p157 = scmp.eq.s32.totalorder %s156, 0
    %s159 = sadd.s32 %s158, 1
    %s160 = scalar_select %p157, %s158, %s159
    %p163 = pneg %p157
    %p164 = scmp.eq.s32.totalorder %s12, 1
    %p165 = por %p163, %p164
    %p166 = scmp.ne.s32.totalorder %s158, %s161
    %p167 = scmp.eq.s32.totalorder %s12, 0
    %p168 = por %p166, %p167
    %p169 = scmp.ne.s32.totalorder %s158, %s161
    %p170 = scmp.eq.s32.totalorder %s17, 1
    %p171 = por %p169, %p170
    %p172 = scmp.ne.s32.totalorder %s161, %s162
    %p173 = scmp.eq.s32.totalorder %s17, 0
    %p174 = por %p172, %p173
    %p175 = scmp.ne.s32.totalorder %s161, %s162
    %p176 = scmp.eq.s32.totalorder %s18, 1
    %p177 = por %p175, %p176
    %p179 = scmp.ne.s32.totalorder %s162, %s178
    %p180 = scmp.eq.s32.totalorder %s18, 0
    %p181 = por %p179, %p180
    %s182 = ssub.s32 %s19, %s31
    %s183 = ssub.s32 %s20, %s27
    %s184 = sor.u32 %s182, %s183
    %p185 = scmp.eq.s32.totalorder %s184, 0
    %s187 = sadd.s32 %s186, 1
    %s188 = scalar_select %p185, %s186, %s187
    %p191 = pneg %p185
    %p192 = scmp.eq.s32.totalorder %s12, 1
    %p193 = por %p191, %p192
    %p194 = scmp.ne.s32.totalorder %s186, %s189
    %p195 = scmp.eq.s32.totalorder %s12, 0
    %p196 = por %p194, %p195
    %p197 = scmp.ne.s32.totalorder %s186, %s189
    %p198 = scmp.eq.s32.totalorder %s17, 1
    %p199 = por %p197, %p198
    %p200 = scmp.ne.s32.totalorder %s189, %s190
    %p201 = scmp.eq.s32.totalorder %s17, 0
    %p202 = por %p200, %p201
    %p203 = scmp.ne.s32.totalorder %s189, %s190
    %p204 = scmp.eq.s32.totalorder %s18, 1
    %p205 = por %p203, %p204
    %p207 = scmp.ne.s32.totalorder %s190, %s206
    %p208 = scmp.eq.s32.totalorder %s18, 0
    %p209 = por %p207, %p208
    %p210 = scmp.le.s32.totalorder 1, %s12
    %p211 = scmp.lt.s32.totalorder %s12, 3
    %p212 = pnand %p210, %p211
    %p213 = pneg %p212
    // Predicated region
    $region9: #{transformer_forward.29} parent=5 // pred_check
      _
    $region10: #{transformer_forward.29} parent=5 // pred_check_branch
      %215 = sbr.rel (%p212) target = $region12
    $region11: #{transformer_forward.29} parent=5 // pred_region
      %s216 = ssub.s32 %s12, 1
      // Predicated region
      $region13: #{transformer_forward.29} parent=11 // pred_check
        %p217 = pneg %p125
      $region14: #{transformer_forward.29} parent=11 // pred_check_branch
        %219 = sbr.rel (%p217) target = $region16
      $region15: #{transformer_forward.29} parent=11 // pred_region
        _
      $region16: #{transformer_forward.29} parent=11 // pred_fallthru
        _
      // Predicated region
      $region17: #{transformer_forward.29} parent=11 // pred_check
        %p220 = pneg %p146
      $region18: #{transformer_forward.29} parent=11 // pred_check_branch
        %222 = sbr.rel (%p220) target = $region20
      $region19: #{transformer_forward.29} parent=11 // pred_region
        _
      $region20: #{transformer_forward.29} parent=11 // pred_fallthru
        _
    $region12: #{transformer_forward.29} parent=5 // pred_fallthru
      _
    %p223 = scmp.lt.s32.totalorder %s12, 2
    // Predicated region
    $region21: #{transformer_forward.29} parent=5 // pred_check
      %p224 = pneg %p223
    $region22: #{transformer_forward.29} parent=5 // pred_check_branch
      %226 = sbr.rel (%p224) target = $region24
    $region23: #{transformer_forward.29} parent=5 // pred_region
      // Predicated region
      $region25: #{transformer_forward.29} parent=23 // pred_check
        %p227 = pneg %p46
      $region26: #{transformer_forward.29} parent=23 // pred_check_branch
        %229 = sbr.rel (%p227) target = $region28
      $region27: #{transformer_forward.29} parent=23 // pred_region
        %p230 = scmp.lt.s32.totalorder %s19, 1
        %s231 = scalar_select %p230, %s19, 1
        %p232 = scmp.lt.s32.totalorder %s20, 0
        %s233 = scalar_select %p232, %s20, 0
        %s234 = sadd.s32 %s233, %s231
        %s235 = smul.addr %s234, 4
        %s236 = scalar_lea.vmem %s0, %s235
      $region28: #{transformer_forward.29} parent=23 // pred_fallthru
        _
      // Predicated region
      $region29: #{transformer_forward.29} parent=23 // pred_check
        %p237 = pneg %p72
      $region30: #{transformer_forward.29} parent=23 // pred_check_branch
        %239 = sbr.rel (%p237) target = $region32
      $region31: #{transformer_forward.29} parent=23 // pred_region
        %p240 = scmp.lt.s32.totalorder %s19, 1
        %s241 = scalar_select %p240, %s19, 1
        %s242 = smul.addr %s241, 4
        %s243 = scalar_lea.vmem %s1, %s242
      $region32: #{transformer_forward.29} parent=23 // pred_fallthru
        _
      // Predicated region
      $region33: #{transformer_forward.29} parent=23 // pred_check
        %p244 = pneg %p98
      $region34: #{transformer_forward.29} parent=23 // pred_check_branch
        %246 = sbr.rel (%p244) target = $region36
      $region35: #{transformer_forward.29} parent=23 // pred_region
        %p247 = scmp.lt.s32.totalorder %s19, 1
        %s248 = scalar_select %p247, %s19, 1
        %s249 = scalar_lea.vmem %s2, %s248
      $region36: #{transformer_forward.29} parent=23 // pred_fallthru
        _
      // Predicated region
      $region37: #{transformer_forward.29} parent=23 // pred_check
        %p250 = pneg %p168
      $region38: #{transformer_forward.29} parent=23 // pred_check_branch
        %252 = sbr.rel (%p250) target = $region40
      $region39: #{transformer_forward.29} parent=23 // pred_region
        %p253 = scmp.lt.s32.totalorder %s19, 1
        %s254 = scalar_select %p253, %s19, 1
        %p255 = scmp.lt.s32.totalorder %s20, 0
        %s256 = scalar_select %p255, %s20, 0
        %s257 = sadd.s32 %s256, %s254
        %s258 = smul.addr %s257, 4
        %s259 = scalar_lea.vmem %s5, %s258
      $region40: #{transformer_forward.29} parent=23 // pred_fallthru
        _
    $region24: #{transformer_forward.29} parent=5 // pred_fallthru
      _
    %p260 = scmp.le.s32.totalorder 1, %s12
    %p261 = scmp.lt.s32.totalorder %s12, 3
    %p262 = pnand %p260, %p261
    %p263 = pneg %p262
    // Predicated region
    $region41: #{transformer_forward.29} parent=5 // pred_check
      _
    $region42: #{transformer_forward.29} parent=5 // pred_check_branch
      %265 = sbr.rel (%p262) target = $region44
    $region43: #{transformer_forward.29} parent=5 // pred_region
      %s266 = ssub.s32 %s12, 1
      %p267 = scmp.lt.s32.totalorder %s21, 1
      %s268 = scalar_select %p267, %s21, 1
      %p269 = scmp.lt.s32.totalorder %s22, 0
      %s270 = scalar_select %p269, %s22, 0
      %s271 = sadd.s32 %s270, %s268
      %s272 = smul.addr %s271, 4
      %s273 = scalar_lea.vmem %s0, %s272
      %p274 = pneg %p52
      %p275 = pneg %p49
      %p276 = scmp.lt.s32.totalorder %s21, 1
      %s277 = scalar_select %p276, %s21, 1
      %s278 = smul.addr %s277, 4
      %s279 = scalar_lea.vmem %s1, %s278
      %p280 = pneg %p78
      %p281 = pneg %p75
      %p282 = scmp.lt.s32.totalorder %s21, 1
      %s283 = scalar_select %p282, %s21, 1
      %s284 = scalar_lea.vmem %s2, %s283
      %p285 = pneg %p104
      %p286 = pneg %p101
      %p287 = pneg %p125
      %p288 = pneg %p122
      %p289 = pneg %p146
      %p290 = pneg %p143
      %p291 = scmp.lt.s32.totalorder %s21, 1
      %s292 = scalar_select %p291, %s21, 1
      %p293 = scmp.lt.s32.totalorder %s22, 0
      %s294 = scalar_select %p293, %s22, 0
      %s295 = sadd.s32 %s294, %s292
      %s296 = smul.addr %s295, 4
      %s297 = scalar_lea.vmem %s5, %s296
      %p298 = pneg %p174
      %p299 = pneg %p171
      %p300 = pneg %p202
      %p301 = pneg %p199
      %p302 = scmp.lt.s32.totalorder %s21, 1
      %s303 = scalar_select %p302, %s21, 1
      %p304 = scmp.lt.s32.totalorder %s22, 0
      %s305 = scalar_select %p304, %s22, 0
      %s306 = sadd.s32 %s305, %s303
      %s307 = smul.addr %s306, 4
      %s308 = scalar_lea.vmem %s6, %s307
      %p309 = scmp.lt.s32.totalorder %s21, 1
      %s310 = scalar_select %p309, %s21, 1
      %p311 = scmp.lt.s32.totalorder %s22, 0
      %s312 = scalar_select %p311, %s22, 0
      %s313 = sadd.s32 %s312, %s310
      %s314 = smul.addr %s313, 4
      %s315 = scalar_lea.vmem %s0, %s314
      %p316 = scmp.lt.s32.totalorder %s21, 1
      %s317 = scalar_select %p316, %s21, 1
      %s318 = smul.addr %s317, 4
      %s319 = scalar_lea.vmem %s1, %s318
      %p320 = scmp.lt.s32.totalorder %s21, 1
      %s321 = scalar_select %p320, %s21, 1
      %s322 = scalar_lea.vmem %s2, %s321
      %p323 = scmp.lt.s32.totalorder %s21, 1
      %s324 = scalar_select %p323, %s21, 1
      %p325 = scmp.lt.s32.totalorder %s22, 0
      %s326 = scalar_select %p325, %s22, 0
      %s327 = sadd.s32 %s326, %s324
      %s328 = smul.addr %s327, 4
      %s329 = scalar_lea.vmem %s5, %s328
      %p330 = scmp.lt.s32.totalorder %s21, 1
      %s331 = scalar_select %p330, %s21, 1
      %p332 = scmp.lt.s32.totalorder %s22, 0
      %s333 = scalar_select %p332, %s22, 0
      %s334 = sadd.s32 %s333, %s331
      %s335 = smul.addr %s334, 4
      %s336 = scalar_lea.vmem %s6, %s335
      %v338 = vld [vmem:[%s319] sm:$0xf]
      %v339 = vld [vmem:[%s315] sm:$0xf]
      %v340 = vld [vmem:[%s322] sm:$0x1]
      %v341 = vld [vmem:[%s3] sm:$0xf]
      %v342 = vld [vmem:[%s3 + $0x4] sm:$0xf]
      %v343 = vld [vmem:[%s3 + $0x8] sm:$0xf]
      %v344 = vld [vmem:[%s3 + $0xc] sm:$0xf]
      %v345 = vld [vmem:[%s4] sm:$0x1]
      %v346 = vld [vmem:[%s329] sm:$0xf]
      %vm347 = vcmp.gt.f32.partialorder %v340, 0.0
      %v348 = vunpack.c.l.bf16 %v346
      %v350 = vlaneseq
      %v351 = vshrl.u32 %v350, 7
      %v352 = vsub.s32 0, %v351
      %v353 = vrot.slane %v345, %v352
      %v355 = vadd.f32 %v348, %v353
      %vm356 = vcmask 64512
      %v358 = vsel %vm356, %v339, 0
      %v361 = vsel %vm356, %v338, 0
      %363 = vmatprep.subr.bf16.mxu0 0
      %364 = vmatpush1.bf16.xpose.msra.mxu0 %v361
      %365 = vmatprep.subr.bf16.mxu0 0
      %366 = vmatpush1.bf16.xpose.msra.mxu0 0
      %367 = vmatprep.subr.bf16.mxu0 0
      %368 = vmatpush1.bf16.xpose.msra.mxu0 0
      %369 = vmatprep.subr.bf16.mxu0 0
      %370 = vmatpush1.bf16.xpose.msra.mxu0 0
      %371 = vmatprep.subr.bf16.mxu0 0
      %372 = vmatpush1.bf16.xpose.msra.mxu0 0
      %373 = vmatprep.subr.bf16.mxu0 0
      %374 = vmatpush1.bf16.xpose.msra.mxu0 0
      %375 = vmatprep.subr.bf16.mxu0 0
      %376 = vmatpush1.bf16.xpose.msra.mxu0 0
      %377 = vmatprep.subr.bf16.mxu0 0
      %378 = vmatpush1.bf16.xpose.msra.mxu0 0
      %379 = vmatprep.subr.bf16.mxu0 0
      %380 = vmatpush1.bf16.xpose.msra.mxu0 0
      %381 = vmatprep.subr.bf16.mxu0 0
      %382 = vmatpush1.bf16.xpose.msra.mxu0 0
      %383 = vmatprep.subr.bf16.mxu0 0
      %384 = vmatpush1.bf16.xpose.msra.mxu0 0
      %385 = vmatprep.subr.bf16.mxu0 0
      %386 = vmatpush1.bf16.xpose.msra.mxu0 0
      %387 = vmatprep.subr.bf16.mxu0 0
      %388 = vmatpush1.bf16.xpose.msra.mxu0 0
      %389 = vmatprep.subr.bf16.mxu0 0
      %390 = vmatpush1.bf16.xpose.msra.mxu0 0
      %391 = vmatprep.subr.bf16.mxu0 0
      %392 = vmatpush1.bf16.xpose.msra.mxu0 0
      %393 = vmatprep.subr.bf16.mxu0 0
      %394 = vmatpush1.bf16.xpose.msra.mxu0 0
      %395 = vmatprep.mubr.bf16.mxu0 0
      %396 = vmatmul.mubr.bf16.gmra.mrb[0].mxu0 %v358
      %v397 = vpop.f32.mrb[0].mxu0
      %v398 = vadd.f32 0.0, %v397
      %v399 = vpop.f32.mrb[0].mxu0
      %v400 = vpop.f32.mrb[0].mxu0
      %v401 = vpop.f32.mrb[0].mxu0
      %402 = vdwg.mxu0
      %v403 = vmul.f32 %v398, 0.35355338
      %v404 = vsel %vm347, 1, 0
      %v405 = vlaneseq
      %v406 = vshrl.u32 %v405, 7
      %v407 = vsub.s32 0, %v406
      %v408 = vrot.slane %v404, %v407
      %vm409 = vcmp.eq.s32.totalorder %v408, 1
      %v410 = vsel %vm409, %v403, -1e+09
      %v411 = vsel %vm356, %v410, -inf
      %412 = vmax.xlane.f32.xlu0 %v411
      %v413 = vpop.xlane.xlu0 %412
      %v414 = vsub.f32 %v410, %v413
      %v415 = vmul.f32 %v414, 1.442695
      %v416 = vpow.pop %v415
      %v417 = vsel %vm356, %v416, 0.0
      %418 = vadd.xlane.f32.xlu0 %v417
      %v419 = vpop.xlane.xlu0 %418
      %v420 = vrcp.pop %v419
      %v421 = vmul.f32 %v416, %v420
      %v422 = vpack.c.bf16 %v421, %v421
      %v424 = vunpack.c.l.b16 %v338
      %v425 = vpack.c.b16 %v424, %v424
      %426 = vrot.lane.b32.xlu0 %v425, 96
      %v427 = vpop.permute.xlu0 %426
      %v429 = vsel %vm356, %v422, 0
      %vm431 = vcmask 1043456
      %v433 = vsel %vm431, %v427, 0
      %435 = vmatprep.subr.bf16.mxu0 0
      %436 = vmatpush1.bf16.msra.mxu0 %v433
      %437 = vmatprep.subr.bf16.mxu0 0
      %438 = vmatpush1.bf16.msra.mxu0 0
      %439 = vmatprep.subr.bf16.mxu0 0
      %440 = vmatpush1.bf16.msra.mxu0 0
      %441 = vmatprep.subr.bf16.mxu0 0
      %442 = vmatpush1.bf16.msra.mxu0 0
      %443 = vmatprep.subr.bf16.mxu0 0
      %444 = vmatpush1.bf16.msra.mxu0 0
      %445 = vmatprep.subr.bf16.mxu0 0
      %446 = vmatpush1.bf16.msra.mxu0 0
      %447 = vmatprep.subr.bf16.mxu0 0
      %448 = vmatpush1.bf16.msra.mxu0 0
      %449 = vmatprep.subr.bf16.mxu0 0
      %450 = vmatpush1.bf16.msra.mxu0 0
      %451 = vmatprep.subr.bf16.mxu0 0
      %452 = vmatpush1.bf16.msra.mxu0 0
      %453 = vmatprep.subr.bf16.mxu0 0
      %454 = vmatpush1.bf16.msra.mxu0 0
      %455 = vmatprep.subr.bf16.mxu0 0
      %456 = vmatpush1.bf16.msra.mxu0 0
      %457 = vmatprep.subr.bf16.mxu0 0
      %458 = vmatpush1.bf16.msra.mxu0 0
      %459 = vmatprep.subr.bf16.mxu0 0
      %460 = vmatpush1.bf16.msra.mxu0 0
      %461 = vmatprep.subr.bf16.mxu0 0
      %462 = vmatpush1.bf16.msra.mxu0 0
      %463 = vmatprep.subr.bf16.mxu0 0
      %464 = vmatpush1.bf16.msra.mxu0 0
      %465 = vmatprep.subr.bf16.mxu0 0
      %466 = vmatpush1.bf16.msra.mxu0 0
      %467 = vmatprep.mubr.bf16.mxu0 0
      %468 = vmatmul.mubr.bf16.gmra.mrb[0].mxu0 %v429
      %v469 = vpop.f32.mrb[0].mxu0
      %v470 = vadd.f32 0.0, %v469
      %v471 = vpop.f32.mrb[0].mxu0
      %v472 = vpop.f32.mrb[0].mxu0
      %v473 = vpop.f32.mrb[0].mxu0
      %474 = vdwg.mxu0
      %v475 = vpack.c.bf16 %v470, %v470
      %v477 = vsel %vm356, %v475, 0
      %v480 = vsel %vm431, %v341, 0
      %482 = vmatprep.subr.bf16.mxu0 0
      %483 = vmatpush1.bf16.msra.mxu0 %v480
      %484 = vmatprep.subr.bf16.mxu0 0
      %485 = vmatpush1.bf16.msra.mxu0 0
      %486 = vmatprep.subr.bf16.mxu0 0
      %487 = vmatpush1.bf16.msra.mxu0 0
      %488 = vmatprep.subr.bf16.mxu0 0
      %489 = vmatpush1.bf16.msra.mxu0 0
      %490 = vmatprep.subr.bf16.mxu0 0
      %491 = vmatpush1.bf16.msra.mxu0 0
      %492 = vmatprep.subr.bf16.mxu0 0
      %493 = vmatpush1.bf16.msra.mxu0 0
      %494 = vmatprep.subr.bf16.mxu0 0
      %495 = vmatpush1.bf16.msra.mxu0 0
      %496 = vmatprep.subr.bf16.mxu0 0
      %497 = vmatpush1.bf16.msra.mxu0 0
      %498 = vmatprep.subr.bf16.mxu0 0
      %499 = vmatpush1.bf16.msra.mxu0 0
      %500 = vmatprep.subr.bf16.mxu0 0
      %501 = vmatpush1.bf16.msra.mxu0 0
      %502 = vmatprep.subr.bf16.mxu0 0
      %503 = vmatpush1.bf16.msra.mxu0 0
      %504 = vmatprep.subr.bf16.mxu0 0
      %505 = vmatpush1.bf16.msra.mxu0 0
      %506 = vmatprep.subr.bf16.mxu0 0
      %507 = vmatpush1.bf16.msra.mxu0 0
      %508 = vmatprep.subr.bf16.mxu0 0
      %509 = vmatpush1.bf16.msra.mxu0 0
      %510 = vmatprep.subr.bf16.mxu0 0
      %511 = vmatpush1.bf16.msra.mxu0 0
      %512 = vmatprep.subr.bf16.mxu0 0
      %513 = vmatpush1.bf16.msra.mxu0 0
      %514 = vmatprep.mubr.bf16.mxu0 0
      %515 = vmatmul.mubr.bf16.gmra.mrb[0].mxu0 %v477
      %v516 = vpop.f32.mrb[0].mxu0
      %v517 = vadd.f32 0.0, %v516
      %v518 = vpop.f32.mrb[0].mxu0
      %v519 = vpop.f32.mrb[0].mxu0
      %v520 = vpop.f32.mrb[0].mxu0
      %521 = vdwg.mxu0
      %v522 = vadd.f32 %v355, %v517
      %v524 = vunpack.c.l.b16 %v339
      %v525 = vpack.c.b16 %v524, %v524
      %526 = vrot.lane.b32.xlu0 %v525, 120
      %v527 = vpop.permute.xlu0 %526
      %528 = vrot.lane.b32.xlu0 %v425, 120
      %v529 = vpop.permute.xlu0 %528
      %v531 = vsel %vm356, %v527, 0
      %v534 = vsel %vm356, %v529, 0
      %536 = vmatprep.subr.bf16.mxu0 0
      %537 = vmatpush1.bf16.xpose.msra.mxu0 %v534
      %538 = vmatprep.subr.bf16.mxu0 0
      %539 = vmatpush1.bf16.xpose.msra.mxu0 0
      %540 = vmatprep.subr.bf16.mxu0 0
      %541 = vmatpush1.bf16.xpose.msra.mxu0 0
      %542 = vmatprep.subr.bf16.mxu0 0
      %543 = vmatpush1.bf16.xpose.msra.mxu0 0
      %544 = vmatprep.subr.bf16.mxu0 0
      %545 = vmatpush1.bf16.xpose.msra.mxu0 0
      %546 = vmatprep.subr.bf16.mxu0 0
      %547 = vmatpush1.bf16.xpose.msra.mxu0 0
      %548 = vmatprep.subr.bf16.mxu0 0
      %549 = vmatpush1.bf16.xpose.msra.mxu0 0
      %550 = vmatprep.subr.bf16.mxu0 0
      %551 = vmatpush1.bf16.xpose.msra.mxu0 0
      %552 = vmatprep.subr.bf16.mxu0 0
      %553 = vmatpush1.bf16.xpose.msra.mxu0 0
      %554 = vmatprep.subr.bf16.mxu0 0
      %555 = vmatpush1.bf16.xpose.msra.mxu0 0
      %556 = vmatprep.subr.bf16.mxu0 0
      %557 = vmatpush1.bf16.xpose.msra.mxu0 0
      %558 = vmatprep.subr.bf16.mxu0 0
      %559 = vmatpush1.bf16.xpose.msra.mxu0 0
      %560 = vmatprep.subr.bf16.mxu0 0
      %561 = vmatpush1.bf16.xpose.msra.mxu0 0
      %562 = vmatprep.subr.bf16.mxu0 0
      %563 = vmatpush1.bf16.xpose.msra.mxu0 0
      %564 = vmatprep.subr.bf16.mxu0 0
      %565 = vmatpush1.bf16.xpose.msra.mxu0 0
      %566 = vmatprep.subr.bf16.mxu0 0
      %567 = vmatpush1.bf16.xpose.msra.mxu0 0
      %568 = vmatprep.mubr.bf16.mxu0 0
      %569 = vmatmul.mubr.bf16.gmra.mrb[0].mxu0 %v531
      %v570 = vpop.f32.mrb[0].mxu0
      %v571 = vadd.f32 0.0, %v570
      %v572 = vpop.f32.mrb[0].mxu0
      %v573 = vpop.f32.mrb[0].mxu0
      %v574 = vpop.f32.mrb[0].mxu0
      %575 = vdwg.mxu0
      %v576 = vmul.f32 %v571, 0.35355338
      %v577 = vsel %vm409, %v576, -1e+09
      %v578 = vsel %vm356, %v577, -inf
      %579 = vmax.xlane.f32.xlu0 %v578
      %v580 = vpop.xlane.xlu0 %579
      %v581 = vsub.f32 %v577, %v580
      %v582 = vmul.f32 %v581, 1.442695
      %v583 = vpow.pop %v582
      %v584 = vsel %vm356, %v583, 0.0
      %585 = vadd.xlane.f32.xlu0 %v584
      %v586 = vpop.xlane.xlu0 %585
      %v587 = vrcp.pop %v586
      %v588 = vmul.f32 %v583, %v587
      %v589 = vpack.c.bf16 %v588, %v588
      %590 = vrot.lane.b32.xlu0 %v425, 88
      %v591 = vpop.permute.xlu0 %590
      %v593 = vsel %vm356, %v589, 0
      %v596 = vsel %vm431, %v591, 0
      %598 = vmatprep.subr.bf16.mxu0 0
      %599 = vmatpush1.bf16.msra.mxu0 %v596
      %600 = vmatprep.subr.bf16.mxu0 0
      %601 = vmatpush1.bf16.msra.mxu0 0
      %602 = vmatprep.subr.bf16.mxu0 0
      %603 = vmatpush1.bf16.msra.mxu0 0
      %604 = vmatprep.subr.bf16.mxu0 0
      %605 = vmatpush1.bf16.msra.mxu0 0
      %606 = vmatprep.subr.bf16.mxu0 0
      %607 = vmatpush1.bf16.msra.mxu0 0
      %608 = vmatprep.subr.bf16.mxu0 0
      %609 = vmatpush1.bf16.msra.mxu0 0
      %610 = vmatprep.subr.bf16.mxu0 0
      %611 = vmatpush1.bf16.msra.mxu0 0
      %612 = vmatprep.subr.bf16.mxu0 0
      %613 = vmatpush1.bf16.msra.mxu0 0
      %614 = vmatprep.subr.bf16.mxu0 0
      %615 = vmatpush1.bf16.msra.mxu0 0
      %616 = vmatprep.subr.bf16.mxu0 0
      %617 = vmatpush1.bf16.msra.mxu0 0
      %618 = vmatprep.subr.bf16.mxu0 0
      %619 = vmatpush1.bf16.msra.mxu0 0
      %620 = vmatprep.subr.bf16.mxu0 0
      %621 = vmatpush1.bf16.msra.mxu0 0
      %622 = vmatprep.subr.bf16.mxu0 0
      %623 = vmatpush1.bf16.msra.mxu0 0
      %624 = vmatprep.subr.bf16.mxu0 0
      %625 = vmatpush1.bf16.msra.mxu0 0
      %626 = vmatprep.subr.bf16.mxu0 0
      %627 = vmatpush1.bf16.msra.mxu0 0
      %628 = vmatprep.subr.bf16.mxu0 0
      %629 = vmatpush1.bf16.msra.mxu0 0
      %630 = vmatprep.mubr.bf16.mxu0 0
      %631 = vmatmul.mubr.bf16.gmra.mrb[0].mxu0 %v593
      %v632 = vpop.f32.mrb[0].mxu0
      %v633 = vadd.f32 0.0, %v632
      %v634 = vpop.f32.mrb[0].mxu0
      %v635 = vpop.f32.mrb[0].mxu0
      %v636 = vpop.f32.mrb[0].mxu0
      %637 = vdwg.mxu0
      %v638 = vpack.c.bf16 %v633, %v633
      %v640 = vsel %vm356, %v638, 0
      %v643 = vsel %vm431, %v342, 0
      %645 = vmatprep.subr.bf16.mxu0 0
      %646 = vmatpush1.bf16.msra.mxu0 %v643
      %647 = vmatprep.subr.bf16.mxu0 0
      %648 = vmatpush1.bf16.msra.mxu0 0
      %649 = vmatprep.subr.bf16.mxu0 0
      %650 = vmatpush1.bf16.msra.mxu0 0
      %651 = vmatprep.subr.bf16.mxu0 0
      %652 = vmatpush1.bf16.msra.mxu0 0
      %653 = vmatprep.subr.bf16.mxu0 0
      %654 = vmatpush1.bf16.msra.mxu0 0
      %655 = vmatprep.subr.bf16.mxu0 0
      %656 = vmatpush1.bf16.msra.mxu0 0
      %657 = vmatprep.subr.bf16.mxu0 0
      %658 = vmatpush1.bf16.msra.mxu0 0
      %659 = vmatprep.subr.bf16.mxu0 0
      %660 = vmatpush1.bf16.msra.mxu0 0
      %661 = vmatprep.subr.bf16.mxu0 0
      %662 = vmatpush1.bf16.msra.mxu0 0
      %663 = vmatprep.subr.bf16.mxu0 0
      %664 = vmatpush1.bf16.msra.mxu0 0
      %665 = vmatprep.subr.bf16.mxu0 0
      %666 = vmatpush1.bf16.msra.mxu0 0
      %667 = vmatprep.subr.bf16.mxu0 0
      %668 = vmatpush1.bf16.msra.mxu0 0
      %669 = vmatprep.subr.bf16.mxu0 0
      %670 = vmatpush1.bf16.msra.mxu0 0
      %671 = vmatprep.subr.bf16.mxu0 0
      %672 = vmatpush1.bf16.msra.mxu0 0
      %673 = vmatprep.subr.bf16.mxu0 0
      %674 = vmatpush1.bf16.msra.mxu0 0
      %675 = vmatprep.subr.bf16.mxu0 0
      %676 = vmatpush1.bf16.msra.mxu0 0
      %677 = vmatprep.mubr.bf16.mxu0 0
      %678 = vmatmul.mubr.bf16.gmra.mrb[0].mxu0 %v640
      %v679 = vpop.f32.mrb[0].mxu0
      %v680 = vadd.f32 0.0, %v679
      %v681 = vpop.f32.mrb[0].mxu0
      %v682 = vpop.f32.mrb[0].mxu0
      %v683 = vpop.f32.mrb[0].mxu0
      %684 = vdwg.mxu0
      %v685 = vadd.f32 %v522, %v680
      %686 = vrot.lane.b32.xlu0 %v525, 112
      %v687 = vpop.permute.xlu0 %686
      %688 = vrot.lane.b32.xlu0 %v425, 112
      %v689 = vpop.permute.xlu0 %688
      %v691 = vsel %vm356, %v687, 0
      %v694 = vsel %vm356, %v689, 0
      %696 = vmatprep.subr.bf16.mxu0 0
      %697 = vmatpush1.bf16.xpose.msra.mxu0 %v694
      %698 = vmatprep.subr.bf16.mxu0 0
      %699 = vmatpush1.bf16.xpose.msra.mxu0 0
      %700 = vmatprep.subr.bf16.mxu0 0
      %701 = vmatpush1.bf16.xpose.msra.mxu0 0
      %702 = vmatprep.subr.bf16.mxu0 0
      %703 = vmatpush1.bf16.xpose.msra.mxu0 0
      %704 = vmatprep.subr.bf16.mxu0 0
      %705 = vmatpush1.bf16.xpose.msra.mxu0 0
      %706 = vmatprep.subr.bf16.mxu0 0
      %707 = vmatpush1.bf16.xpose.msra.mxu0 0
      %708 = vmatprep.subr.bf16.mxu0 0
      %709 = vmatpush1.bf16.xpose.msra.mxu0 0
      %710 = vmatprep.subr.bf16.mxu0 0
      %711 = vmatpush1.bf16.xpose.msra.mxu0 0
      %712 = vmatprep.subr.bf16.mxu0 0
      %713 = vmatpush1.bf16.xpose.msra.mxu0 0
      %714 = vmatprep.subr.bf16.mxu0 0
      %715 = vmatpush1.bf16.xpose.msra.mxu0 0
      %716 = vmatprep.subr.bf16.mxu0 0
      %717 = vmatpush1.bf16.xpose.msra.mxu0 0
      %718 = vmatprep.subr.bf16.mxu0 0
      %719 = vmatpush1.bf16.xpose.msra.mxu0 0
      %720 = vmatprep.subr.bf16.mxu0 0
      %721 = vmatpush1.bf16.xpose.msra.mxu0 0
      %722 = vmatprep.subr.bf16.mxu0 0
      %723 = vmatpush1.bf16.xpose.msra.mxu0 0
      %724 = vmatprep.subr.bf16.mxu0 0
      %725 = vmatpush1.bf16.xpose.msra.mxu0 0
      %726 = vmatprep.subr.bf16.mxu0 0
      %727 = vmatpush1.bf16.xpose.msra.mxu0 0
      %728 = vmatprep.mubr.bf16.mxu0 0
      %729 = vmatmul.mubr.bf16.gmra.mrb[0].mxu0 %v691
      %v730 = vpop.f32.mrb[0].mxu0
      %v731 = vadd.f32 0.0, %v730
      %v732 = vpop.f32.mrb[0].mxu0
      %v733 = vpop.f32.mrb[0].mxu0
      %v734 = vpop.f32.mrb[0].mxu0
      %735 = vdwg.mxu0
      %v736 = vmul.f32 %v731, 0.35355338
      %v737 = vsel %vm409, %v736, -1e+09
      %v738 = vsel %vm356, %v737, -inf
      %739 = vmax.xlane.f32.xlu0 %v738
      %v740 = vpop.xlane.xlu0 %739
      %v741 = vsub.f32 %v737, %v740
      %v742 = vmul.f32 %v741, 1.442695
      %v743 = vpow.pop %v742
      %v744 = vsel %vm356, %v743, 0.0
      %745 = vadd.xlane.f32.xlu0 %v744
      %v746 = vpop.xlane.xlu0 %745
      %v747 = vrcp.pop %v746
      %v748 = vmul.f32 %v743, %v747
      %v749 = vpack.c.bf16 %v748, %v748
      %750 = vrot.lane.b32.xlu0 %v425, 80
      %v751 = vpop.permute.xlu0 %750
      %v753 = vsel %vm356, %v749, 0
      %v756 = vsel %vm431, %v751, 0
      %758 = vmatprep.subr.bf16.mxu0 0
      %759 = vmatpush1.bf16.msra.mxu0 %v756
      %760 = vmatprep.subr.bf16.mxu0 0
      %761 = vmatpush1.bf16.msra.mxu0 0
      %762 = vmatprep.subr.bf16.mxu0 0
      %763 = vmatpush1.bf16.msra.mxu0 0
      %764 = vmatprep.subr.bf16.mxu0 0
      %765 = vmatpush1.bf16.msra.mxu0 0
      %766 = vmatprep.subr.bf16.mxu0 0
      %767 = vmatpush1.bf16.msra.mxu0 0
      %768 = vmatprep.subr.bf16.mxu0 0
      %769 = vmatpush1.bf16.msra.mxu0 0
      %770 = vmatprep.subr.bf16.mxu0 0
      %771 = vmatpush1.bf16.msra.mxu0 0
      %772 = vmatprep.subr.bf16.mxu0 0
      %773 = vmatpush1.bf16.msra.mxu0 0
      %774 = vmatprep.subr.bf16.mxu0 0
      %775 = vmatpush1.bf16.msra.mxu0 0
      %776 = vmatprep.subr.bf16.mxu0 0
      %777 = vmatpush1.bf16.msra.mxu0 0
      %778 = vmatprep.subr.bf16.mxu0 0
      %779 = vmatpush1.bf16.msra.mxu0 0
      %780 = vmatprep.subr.bf16.mxu0 0
      %781 = vmatpush1.bf16.msra.mxu0 0
      %782 = vmatprep.subr.bf16.mxu0 0
      %783 = vmatpush1.bf16.msra.mxu0 0
      %784 = vmatprep.subr.bf16.mxu0 0
      %785 = vmatpush1.bf16.msra.mxu0 0
      %786 = vmatprep.subr.bf16.mxu0 0
      %787 = vmatpush1.bf16.msra.mxu0 0
      %788 = vmatprep.subr.bf16.mxu0 0
      %789 = vmatpush1.bf16.msra.mxu0 0
      %790 = vmatprep.mubr.bf16.mxu0 0
      %791 = vmatmul.mubr.bf16.gmra.mrb[0].mxu0 %v753
      %v792 = vpop.f32.mrb[0].mxu0
      %v793 = vadd.f32 0.0, %v792
      %v794 = vpop.f32.mrb[0].mxu0
      %v795 = vpop.f32.mrb[0].mxu0
      %v796 = vpop.f32.mrb[0].mxu0
      %797 = vdwg.mxu0
      %v798 = vpack.c.bf16 %v793, %v793
      %v800 = vsel %vm356, %v798, 0
      %v803 = vsel %vm431, %v343, 0
      %805 = vmatprep.subr.bf16.mxu0 0
      %806 = vmatpush1.bf16.msra.mxu0 %v803
      %807 = vmatprep.subr.bf16.mxu0 0
      %808 = vmatpush1.bf16.msra.mxu0 0
      %809 = vmatprep.subr.bf16.mxu0 0
      %810 = vmatpush1.bf16.msra.mxu0 0
      %811 = vmatprep.subr.bf16.mxu0 0
      %812 = vmatpush1.bf16.msra.mxu0 0
      %813 = vmatprep.subr.bf16.mxu0 0
      %814 = vmatpush1.bf16.msra.mxu0 0
      %815 = vmatprep.subr.bf16.mxu0 0
      %816 = vmatpush1.bf16.msra.mxu0 0
      %817 = vmatprep.subr.bf16.mxu0 0
      %818 = vmatpush1.bf16.msra.mxu0 0
      %819 = vmatprep.subr.bf16.mxu0 0
      %820 = vmatpush1.bf16.msra.mxu0 0
      %821 = vmatprep.subr.bf16.mxu0 0
      %822 = vmatpush1.bf16.msra.mxu0 0
      %823 = vmatprep.subr.bf16.mxu0 0
      %824 = vmatpush1.bf16.msra.mxu0 0
      %825 = vmatprep.subr.bf16.mxu0 0
      %826 = vmatpush1.bf16.msra.mxu0 0
      %827 = vmatprep.subr.bf16.mxu0 0
      %828 = vmatpush1.bf16.msra.mxu0 0
      %829 = vmatprep.subr.bf16.mxu0 0
      %830 = vmatpush1.bf16.msra.mxu0 0
      %831 = vmatprep.subr.bf16.mxu0 0
      %832 = vmatpush1.bf16.msra.mxu0 0
      %833 = vmatprep.subr.bf16.mxu0 0
      %834 = vmatpush1.bf16.msra.mxu0 0
      %835 = vmatprep.subr.bf16.mxu0 0
      %836 = vmatpush1.bf16.msra.mxu0 0
      %837 = vmatprep.mubr.bf16.mxu0 0
      %838 = vmatmul.mubr.bf16.gmra.mrb[0].mxu0 %v800
      %v839 = vpop.f32.mrb[0].mxu0
      %v840 = vadd.f32 0.0, %v839
      %v841 = vpop.f32.mrb[0].mxu0
      %v842 = vpop.f32.mrb[0].mxu0
      %v843 = vpop.f32.mrb[0].mxu0
      %844 = vdwg.mxu0
      %v845 = vadd.f32 %v685, %v840
      %846 = vrot.lane.b32.xlu0 %v525, 104
      %v847 = vpop.permute.xlu0 %846
      %848 = vrot.lane.b32.xlu0 %v425, 104
      %v849 = vpop.permute.xlu0 %848
      %v851 = vsel %vm356, %v847, 0
      %v854 = vsel %vm356, %v849, 0
      %856 = vmatprep.subr.bf16.mxu0 0
      %857 = vmatpush1.bf16.xpose.msra.mxu0 %v854
      %858 = vmatprep.subr.bf16.mxu0 0
      %859 = vmatpush1.bf16.xpose.msra.mxu0 0
      %860 = vmatprep.subr.bf16.mxu0 0
      %861 = vmatpush1.bf16.xpose.msra.mxu0 0
      %862 = vmatprep.subr.bf16.mxu0 0
      %863 = vmatpush1.bf16.xpose.msra.mxu0 0
      %864 = vmatprep.subr.bf16.mxu0 0
      %865 = vmatpush1.bf16.xpose.msra.mxu0 0
      %866 = vmatprep.subr.bf16.mxu0 0
      %867 = vmatpush1.bf16.xpose.msra.mxu0 0
      %868 = vmatprep.subr.bf16.mxu0 0
      %869 = vmatpush1.bf16.xpose.msra.mxu0 0
      %870 = vmatprep.subr.bf16.mxu0 0
      %871 = vmatpush1.bf16.xpose.msra.mxu0 0
      %872 = vmatprep.subr.bf16.mxu0 0
      %873 = vmatpush1.bf16.xpose.msra.mxu0 0
      %874 = vmatprep.subr.bf16.mxu0 0
      %875 = vmatpush1.bf16.xpose.msra.mxu0 0
      %876 = vmatprep.subr.bf16.mxu0 0
      %877 = vmatpush1.bf16.xpose.msra.mxu0 0
      %878 = vmatprep.subr.bf16.mxu0 0
      %879 = vmatpush1.bf16.xpose.msra.mxu0 0
      %880 = vmatprep.subr.bf16.mxu0 0
      %881 = vmatpush1.bf16.xpose.msra.mxu0 0
      %882 = vmatprep.subr.bf16.mxu0 0
      %883 = vmatpush1.bf16.xpose.msra.mxu0 0
      %884 = vmatprep.subr.bf16.mxu0 0
      %885 = vmatpush1.bf16.xpose.msra.mxu0 0
      %886 = vmatprep.subr.bf16.mxu0 0
      %887 = vmatpush1.bf16.xpose.msra.mxu0 0
      %888 = vmatprep.mubr.bf16.mxu0 0
      %889 = vmatmul.mubr.bf16.gmra.mrb[0].mxu0 %v851
      %v890 = vpop.f32.mrb[0].mxu0
      %v891 = vadd.f32 0.0, %v890
      %v892 = vpop.f32.mrb[0].mxu0
      %v893 = vpop.f32.mrb[0].mxu0
      %v894 = vpop.f32.mrb[0].mxu0
      %895 = vdwg.mxu0
      %v896 = vmul.f32 %v891, 0.35355338
      %v897 = vsel %vm409, %v896, -1e+09
      %v898 = vsel %vm356, %v897, -inf
      %899 = vmax.xlane.f32.xlu0 %v898
      %v900 = vpop.xlane.xlu0 %899
      %v901 = vsub.f32 %v897, %v900
      %v902 = vmul.f32 %v901, 1.442695
      %v903 = vpow.pop %v902
      %v904 = vsel %vm356, %v903, 0.0
      %905 = vadd.xlane.f32.xlu0 %v904
      %v906 = vpop.xlane.xlu0 %905
      %v907 = vrcp.pop %v906
      %v908 = vmul.f32 %v903, %v907
      %v909 = vpack.c.bf16 %v908, %v908
      %910 = vrot.lane.b32.xlu0 %v425, 72
      %v911 = vpop.permute.xlu0 %910
      %v913 = vsel %vm356, %v909, 0
      %v916 = vsel %vm431, %v911, 0
      %918 = vmatprep.subr.bf16.mxu0 0
      %919 = vmatpush1.bf16.msra.mxu0 %v916
      %920 = vmatprep.subr.bf16.mxu0 0
      %921 = vmatpush1.bf16.msra.mxu0 0
      %922 = vmatprep.subr.bf16.mxu0 0
      %923 = vmatpush1.bf16.msra.mxu0 0
      %924 = vmatprep.subr.bf16.mxu0 0
      %925 = vmatpush1.bf16.msra.mxu0 0
      %926 = vmatprep.subr.bf16.mxu0 0
      %927 = vmatpush1.bf16.msra.mxu0 0
      %928 = vmatprep.subr.bf16.mxu0 0
      %929 = vmatpush1.bf16.msra.mxu0 0
      %930 = vmatprep.subr.bf16.mxu0 0
      %931 = vmatpush1.bf16.msra.mxu0 0
      %932 = vmatprep.subr.bf16.mxu0 0
      %933 = vmatpush1.bf16.msra.mxu0 0
      %934 = vmatprep.subr.bf16.mxu0 0
      %935 = vmatpush1.bf16.msra.mxu0 0
      %936 = vmatprep.subr.bf16.mxu0 0
      %937 = vmatpush1.bf16.msra.mxu0 0
      %938 = vmatprep.subr.bf16.mxu0 0
      %939 = vmatpush1.bf16.msra.mxu0 0
      %940 = vmatprep.subr.bf16.mxu0 0
      %941 = vmatpush1.bf16.msra.mxu0 0
      %942 = vmatprep.subr.bf16.mxu0 0
      %943 = vmatpush1.bf16.msra.mxu0 0
      %944 = vmatprep.subr.bf16.mxu0 0
      %945 = vmatpush1.bf16.msra.mxu0 0
      %946 = vmatprep.subr.bf16.mxu0 0
      %947 = vmatpush1.bf16.msra.mxu0 0
      %948 = vmatprep.subr.bf16.mxu0 0
      %949 = vmatpush1.bf16.msra.mxu0 0
      %950 = vmatprep.mubr.bf16.mxu0 0
      %951 = vmatmul.mubr.bf16.gmra.mrb[0].mxu0 %v913
      %v952 = vpop.f32.mrb[0].mxu0
      %v953 = vadd.f32 0.0, %v952
      %v954 = vpop.f32.mrb[0].mxu0
      %v955 = vpop.f32.mrb[0].mxu0
      %v956 = vpop.f32.mrb[0].mxu0
      %957 = vdwg.mxu0
      %v958 = vpack.c.bf16 %v953, %v953
      %v960 = vsel %vm356, %v958, 0
      %v963 = vsel %vm431, %v344, 0
      %965 = vmatprep.subr.bf16.mxu0 0
      %966 = vmatpush1.bf16.msra.mxu0 %v963
      %967 = vmatprep.subr.bf16.mxu0 0
      %968 = vmatpush1.bf16.msra.mxu0 0
      %969 = vmatprep.subr.bf16.mxu0 0
      %970 = vmatpush1.bf16.msra.mxu0 0
      %971 = vmatprep.subr.bf16.mxu0 0
      %972 = vmatpush1.bf16.msra.mxu0 0
      %973 = vmatprep.subr.bf16.mxu0 0
      %974 = vmatpush1.bf16.msra.mxu0 0
      %975 = vmatprep.subr.bf16.mxu0 0
      %976 = vmatpush1.bf16.msra.mxu0 0
      %977 = vmatprep.subr.bf16.mxu0 0
      %978 = vmatpush1.bf16.msra.mxu0 0
      %979 = vmatprep.subr.bf16.mxu0 0
      %980 = vmatpush1.bf16.msra.mxu0 0
      %981 = vmatprep.subr.bf16.mxu0 0
      %982 = vmatpush1.bf16.msra.mxu0 0
      %983 = vmatprep.subr.bf16.mxu0 0
      %984 = vmatpush1.bf16.msra.mxu0 0
      %985 = vmatprep.subr.bf16.mxu0 0
      %986 = vmatpush1.bf16.msra.mxu0 0
      %987 = vmatprep.subr.bf16.mxu0 0
      %988 = vmatpush1.bf16.msra.mxu0 0
      %989 = vmatprep.subr.bf16.mxu0 0
      %990 = vmatpush1.bf16.msra.mxu0 0
      %991 = vmatprep.subr.bf16.mxu0 0
      %992 = vmatpush1.bf16.msra.mxu0 0
      %993 = vmatprep.subr.bf16.mxu0 0
      %994 = vmatpush1.bf16.msra.mxu0 0
      %995 = vmatprep.subr.bf16.mxu0 0
      %996 = vmatpush1.bf16.msra.mxu0 0
      %997 = vmatprep.mubr.bf16.mxu0 0
      %998 = vmatmul.mubr.bf16.gmra.mrb[0].mxu0 %v960
      %v999 = vpop.f32.mrb[0].mxu0
      %v1000 = vadd.f32 0.0, %v999
      %v1001 = vpop.f32.mrb[0].mxu0
      %v1002 = vpop.f32.mrb[0].mxu0
      %v1003 = vpop.f32.mrb[0].mxu0
      %1004 = vdwg.mxu0
      %v1005 = vadd.f32 %v845, %v1000
      %v1006 = vpack.c.bf16 %v1005, %v1005
      %vm1007 = vcmask 257024
      %1008 = vst.msk [vmem:[%s336] sm:$0xf] %vm1007, %v1006
      %p1009 = scmp.lt.s32.totalorder %s21, 1
      %s1010 = scalar_select %p1009, %s21, 1
      %p1011 = scmp.lt.s32.totalorder %s22, 0
      %s1012 = scalar_select %p1011, %s22, 0
      %s1013 = sadd.s32 %s1012, %s1010
      %s1014 = smul.addr %s1013, 4
      %s1015 = scalar_lea.vmem %s6, %s1014
      // Predicated region
      $region45: #{transformer_forward.29} parent=43 // pred_check
        %p1016 = pneg %p199
      $region46: #{transformer_forward.29} parent=43 // pred_check_branch
        %1018 = sbr.rel (%p1016) target = $region48
      $region47: #{transformer_forward.29} parent=43 // pred_region
        _
      $region48: #{transformer_forward.29} parent=43 // pred_fallthru
        _
    $region44: #{transformer_forward.29} parent=5 // pred_fallthru
      _
    %p1019 = scmp.le.s32.totalorder 2, %s12
    // Predicated region
    $region49: #{transformer_forward.29} parent=5 // pred_check
      %p1020 = pneg %p1019
    $region50: #{transformer_forward.29} parent=5 // pred_check_branch
      %1022 = sbr.rel (%p1020) target = $region52
    $region51: #{transformer_forward.29} parent=5 // pred_region
      %s1023 = ssub.s32 %s12, 2
      // Predicated region
      $region53: #{transformer_forward.29} parent=51 // pred_check
        %p1024 = pneg %p205
      $region54: #{transformer_forward.29} parent=51 // pred_check_branch
        %1026 = sbr.rel (%p1024) target = $region56
      $region55: #{transformer_forward.29} parent=51 // pred_region
        %p1027 = scmp.lt.s32.totalorder %s23, 1
        %s1028 = scalar_select %p1027, %s23, 1
        %p1029 = scmp.lt.s32.totalorder %s24, 0
        %s1030 = scalar_select %p1029, %s24, 0
        %s1031 = sadd.s32 %s1030, %s1028
        %s1032 = smul.addr %s1031, 4
        %s1033 = scalar_lea.vmem %s6, %s1032
      $region56: #{transformer_forward.29} parent=51 // pred_fallthru
        _
    $region52: #{transformer_forward.29} parent=5 // pred_fallthru
      _
  $region6: #{transformer_forward.29} parent=0 // loop_footer
    %s16 = sadd.s32 1, %s12
  $region7: #{transformer_forward.29} parent=0 // loop_footer_branch
    %11 = sbr.rel target = $region3
  $region8: #{transformer_forward.29} parent=0 // loop_exit
    _

</llo_original>
